<compile_context>
chip_gen: v6e
topology: v6e:2x2x1
jax: 0.10.0
libtpu: 0.0.40
codegen_flags: <defaults>
</compile_context>

<pallas_src>
import functools

import jax
import jax.numpy as jnp
from jax.experimental import pallas as pl
from jax.experimental.pallas import tpu as pltpu


# ----------------------------------------------------------------------------
# Pallas kernel: 4 x (1x1 conv as matmul) with BN folded, ReLU between, Tanh end.
# x block is point-major (tq, C_in); output block is channels-first (3, tq) so
# the last dim is lane-dense (multiple of 128).
# ----------------------------------------------------------------------------
def _corr_kernel(x_ref, w1_ref, b1_ref, w2_ref, b2_ref, w3_ref, b3_ref,
                 w4_ref, b4_ref, out_ref, *, apply_tanh):
    x = x_ref[...].astype(jnp.bfloat16)                              # (tq, C_in)
    h = jnp.dot(x, w1_ref[...], preferred_element_type=jnp.float32) + b1_ref[...]
    h = jnp.maximum(h, 0.0).astype(jnp.bfloat16)                     # (tq, 32)
    h = jnp.dot(h, w2_ref[...], preferred_element_type=jnp.float32) + b2_ref[...]
    h = jnp.maximum(h, 0.0).astype(jnp.bfloat16)                     # (tq, 16)
    h = jnp.dot(h, w3_ref[...], preferred_element_type=jnp.float32) + b3_ref[...]
    h = jnp.maximum(h, 0.0).astype(jnp.bfloat16)                     # (tq, 8)
    # Last layer contracts both trailing dims ('trans_b' pattern) so the result
    # lands channels-first (3, tq) -> lane-dense output block.
    o = jnp.einsum('ck,nk->cn', w4_ref[...], h,
                   preferred_element_type=jnp.float32) + b4_ref[...]  # (3, tq)
    if apply_tanh:
        o = jnp.tanh(o)                                              # EUP
    out_ref[...] = o


# ----------------------------------------------------------------------------
# Wrapper: fold eval-mode BN into conv weights, flatten (B,T) -> N points,
# tile the point axis, transpose the tiny 3-channel output outside the kernel.
# ----------------------------------------------------------------------------
def recon_coord_pallas(code, params, *, tq=1024, activation=True, eps=1e-5):
    """code: (B, T, hidden_size+3) f32 -> (B, T, 3) f32 (matches torch forward)."""
    B, T, C_in = code.shape
    N = B * T

    # Fold eval-mode BatchNorm1d into the preceding 1x1 conv.
    # TODO(synk): training-mode BatchNorm (batch statistics over B*T) needs a
    # global reduction pass before normalization and is not fused here.
    def fold(w, b, g, beta, m, v):
        s = g / jnp.sqrt(v + eps)
        w_f = (w * s[:, None]).astype(jnp.bfloat16)           # (out, in) bf16
        b_f = ((b - m) * s + beta).astype(jnp.float32)        # (out,)    f32
        return w_f, b_f

    w1, b1 = fold(params['w1'], params['b1'], params['g1'], params['beta1'],
                  params['m1'], params['v1'])
    w2, b2 = fold(params['w2'], params['b2'], params['g2'], params['beta2'],
                  params['m2'], params['v2'])
    w3, b3 = fold(params['w3'], params['b3'], params['g3'], params['beta3'],
                  params['m3'], params['v3'])
    w4 = params['w4'].astype(jnp.bfloat16)                    # (3, 8)
    b4 = params['b4'].astype(jnp.float32)                     # (3,)

    # Channels-last weights for layers 1-3 (x @ W^T), row/column bias shapes.
    w1t, w2t, w3t = w1.T, w2.T, w3.T                          # (in, out) bf16
    b1r, b2r, b3r = b1[None, :], b2[None, :], b3[None, :]     # (1, out)  f32
    b4c = b4[:, None]                                         # (3, 1)    f32

    # Flatten batch into the point axis (free, contiguous reshape).
    x_flat = code.reshape(N, C_in)

    # Pick a lane-friendly point tile; pad only if N has no 128-multiple divisor.
    if N <= tq:
        tq_eff, n_pad = N, N                 # single full-extent tile (always legal)
    else:
        tq_eff = next((t for t in (tq, tq // 2, tq // 4, tq // 8)
                       if t % 128 == 0 and N % t == 0), 128)
        n_pad = pl.cdiv(N, tq_eff) * tq_eff
    if n_pad != N:
        x_flat = jnp.pad(x_flat, ((0, n_pad - N), (0, 0)))

    def wspec(a):   # tiny weights: whole array resident in VMEM, fetched once
        return pl.BlockSpec(a.shape, lambda i, _nd=a.ndim: (0,) * _nd)

    out_cf = pl.pallas_call(
        functools.partial(_corr_kernel, apply_tanh=activation),
        out_shape=jax.ShapeDtypeStruct((3, n_pad), jnp.float32),
        grid_spec=pltpu.PrefetchScalarGridSpec(
            num_scalar_prefetch=0,
            grid=(n_pad // tq_eff,),
            in_specs=[
                # natural point-major input block: (tq, C_in), C_in = full extent
                pl.BlockSpec((tq_eff, C_in), lambda i: (i, 0)),
                wspec(w1t), wspec(b1r), wspec(w2t), wspec(b2r),
                wspec(w3t), wspec(b3r), wspec(w4), wspec(b4c),
            ],
            # lane-dense output block: last dim = tq_eff (multiple of 128 or full)
            out_specs=pl.BlockSpec((3, tq_eff), lambda i: (0, i)),
        ),
        compiler_params=pltpu.CompilerParams(
            dimension_semantics=("parallel",)),
    )(x_flat, w1t, b1r, w2t, b2r, w3t, b3r, w4, b4c)

    # (3, N) -> (B, T, 3): small XLA transpose outside the kernel (12 B/pt each
    # way) beats a lane-3 masked output block / fine-grained output DMA inside.
    return out_cf[:, :N].T.reshape(B, T, 3)


# ----------------------------------------------------------------------------
# Pure-JAX reference (same BN folding + same bf16 quantization of MXU operands).
# ----------------------------------------------------------------------------
def recon_coord_ref(code, params, *, activation=True, eps=1e-5):
    def fold(w, b, g, beta, m, v):
        s = g / jnp.sqrt(v + eps)
        return (w * s[:, None]).astype(jnp.bfloat16), (b - m) * s + beta

    w1, b1 = fold(params['w1'], params['b1'], params['g1'], params['beta1'],
                  params['m1'], params['v1'])
    w2, b2 = fold(params['w2'], params['b2'], params['g2'], params['beta2'],
                  params['m2'], params['v2'])
    w3, b3 = fold(params['w3'], params['b3'], params['g3'], params['beta3'],
                  params['m3'], params['v3'])
    w4 = params['w4'].astype(jnp.bfloat16)
    b4 = params['b4']

    h = code.astype(jnp.bfloat16)
    h = jnp.dot(h, w1.T, preferred_element_type=jnp.float32) + b1
    h = jax.nn.relu(h).astype(jnp.bfloat16)
    h = jnp.dot(h, w2.T, preferred_element_type=jnp.float32) + b2
    h = jax.nn.relu(h).astype(jnp.bfloat16)
    h = jnp.dot(h, w3.T, preferred_element_type=jnp.float32) + b3
    h = jax.nn.relu(h).astype(jnp.bfloat16)
    h = jnp.dot(h, w4.T, preferred_element_type=jnp.float32) + b4
    if activation:
        h = jnp.tanh(h)
    return h


# ----------------------------------------------------------------------------
# Parameter init: raw Conv1d(k=1) weights + BatchNorm1d params (eval mode).
# ----------------------------------------------------------------------------
def init_params(key, hidden_size, scale=0.2):
    c_in = hidden_size + 3
    dims = [(32, c_in), (16, 32), (8, 16), (3, 8)]
    ks = iter(jax.random.split(key, 32))
    n = lambda s: jax.random.normal(next(ks), s, jnp.float32) * scale
    u = lambda s: jax.random.uniform(next(ks), s, jnp.float32, 0.5, 1.5)
    p = {}
    for i, (o, c) in enumerate(dims, start=1):
        p[f'w{i}'] = n((o, c))
        p[f'b{i}'] = n((o,))
        if i < 4:  # BN after the first three convs only
            p[f'g{i}'] = u((o,))
            p[f'beta{i}'] = n((o,))
            p[f'm{i}'] = n((o,))
            p[f'v{i}'] = u((o,))
    return p


if __name__ == "__main__":
    B, T, hidden_size = 2, 1024, 32          # code: (B, T, hidden_size + 3)
    key = jax.random.PRNGKey(0)
    k_x, k_w = jax.random.split(key)

    code = jax.random.normal(k_x, (B, T, hidden_size + 3), jnp.float32)
    params = init_params(k_w, hidden_size)

    out = recon_coord_pallas(code, params, tq=1024, activation=True)
    out = jax.block_until_ready(out)
    assert out.shape == (B, T, 3), out.shape

    ref = recon_coord_ref(code, params, activation=True)
    err = float(jnp.max(jnp.abs(out - ref)))
    if not jnp.allclose(out, ref, atol=1e-2, rtol=1e-2):
        raise AssertionError(f"mismatch vs reference, max abs err = {err}")

    print("KERNEL_OK")
</pallas_src>

<mosaic_0001>
module attributes {stable_mosaic.version = 11 : i64} {
  func.func @_corr_kernel(%arg0: i32, %arg1: memref<1024x35xf32, #tpu.memory_space<vmem>>, %arg2: memref<35x32xbf16, #tpu.memory_space<vmem>>, %arg3: memref<1x32xf32, #tpu.memory_space<vmem>>, %arg4: memref<32x16xbf16, #tpu.memory_space<vmem>>, %arg5: memref<1x16xf32, #tpu.memory_space<vmem>>, %arg6: memref<16x8xbf16, #tpu.memory_space<vmem>>, %arg7: memref<1x8xf32, #tpu.memory_space<vmem>>, %arg8: memref<3x8xbf16, #tpu.memory_space<vmem>>, %arg9: memref<3x1xf32, #tpu.memory_space<vmem>>, %arg10: memref<3x1024xf32, #tpu.memory_space<vmem>>) attributes {dimension_semantics = [#tpu.dimension_semantics<parallel>], iteration_bounds = array<i64: 2>, scalar_prefetch = 0 : i64, scratch_operands = 0 : i64, tpu.core_type = #tpu.core_type<tc>, window_params = [{transform_indices = @transform_0, window_bounds = array<i64: 1024, 35>}, {pipeline_mode = #tpu.pipeline_mode<synchronous>, transform_indices = @transform_1, window_bounds = array<i64: 35, 32>}, {pipeline_mode = #tpu.pipeline_mode<synchronous>, transform_indices = @transform_2, window_bounds = array<i64: 1, 32>}, {pipeline_mode = #tpu.pipeline_mode<synchronous>, transform_indices = @transform_3, window_bounds = array<i64: 32, 16>}, {pipeline_mode = #tpu.pipeline_mode<synchronous>, transform_indices = @transform_4, window_bounds = array<i64: 1, 16>}, {pipeline_mode = #tpu.pipeline_mode<synchronous>, transform_indices = @transform_5, window_bounds = array<i64: 16, 8>}, {pipeline_mode = #tpu.pipeline_mode<synchronous>, transform_indices = @transform_6, window_bounds = array<i64: 1, 8>}, {pipeline_mode = #tpu.pipeline_mode<synchronous>, transform_indices = @transform_7, window_bounds = array<i64: 3, 8>}, {pipeline_mode = #tpu.pipeline_mode<synchronous>, transform_indices = @transform_8, window_bounds = array<i64: 3, 1>}, {transform_indices = @transform_9, window_bounds = array<i64: 3, 1024>}]} {
    %c0 = arith.constant 0 : index
    %c0_0 = arith.constant 0 : index
    %0 = vector.load %arg1[%c0, %c0_0] : memref<1024x35xf32, #tpu.memory_space<vmem>>, vector<1024x35xf32>
    %1 = arith.truncf %0 : vector<1024x35xf32> to vector<1024x35xbf16>
    %c0_1 = arith.constant 0 : index
    %c0_2 = arith.constant 0 : index
    %2 = vector.load %arg2[%c0_1, %c0_2] : memref<35x32xbf16, #tpu.memory_space<vmem>>, vector<35x32xbf16>
    %cst = arith.constant dense<0.000000e+00> : vector<1024x32xf32>
    %3 = tpu.matmul %1, %2, %cst {dimension_numbers = #tpu.dot_dimension_numbers<[1], [0], [0], [1], [0, 0, 1, 1], [], []>} : vector<1024x35xbf16>, vector<35x32xbf16>, vector<1024x32xf32> -> vector<1024x32xf32>
    %c0_3 = arith.constant 0 : index
    %c0_4 = arith.constant 0 : index
    %4 = vector.load %arg3[%c0_3, %c0_4] : memref<1x32xf32, #tpu.memory_space<vmem>>, vector<1x32xf32>
    %5 = vector.broadcast %4 : vector<1x32xf32> to vector<1024x32xf32>
    %6 = arith.addf %3, %5 : vector<1024x32xf32>
    %cst_5 = arith.constant 0.000000e+00 : f32
    %7 = vector.broadcast %cst_5 : f32 to vector<1024x32xf32>
    %8 = arith.maximumf %6, %7 : vector<1024x32xf32>
    %9 = arith.truncf %8 : vector<1024x32xf32> to vector<1024x32xbf16>
    %c0_6 = arith.constant 0 : index
    %c0_7 = arith.constant 0 : index
    %10 = vector.load %arg4[%c0_6, %c0_7] : memref<32x16xbf16, #tpu.memory_space<vmem>>, vector<32x16xbf16>
    %cst_8 = arith.constant dense<0.000000e+00> : vector<1024x16xf32>
    %11 = tpu.matmul %9, %10, %cst_8 {dimension_numbers = #tpu.dot_dimension_numbers<[1], [0], [0], [1], [0, 0, 1, 1], [], []>} : vector<1024x32xbf16>, vector<32x16xbf16>, vector<1024x16xf32> -> vector<1024x16xf32>
    %c0_9 = arith.constant 0 : index
    %c0_10 = arith.constant 0 : index
    %12 = vector.load %arg5[%c0_9, %c0_10] : memref<1x16xf32, #tpu.memory_space<vmem>>, vector<1x16xf32>
    %13 = vector.broadcast %12 : vector<1x16xf32> to vector<1024x16xf32>
    %14 = arith.addf %11, %13 : vector<1024x16xf32>
    %cst_11 = arith.constant 0.000000e+00 : f32
    %15 = vector.broadcast %cst_11 : f32 to vector<1024x16xf32>
    %16 = arith.maximumf %14, %15 : vector<1024x16xf32>
    %17 = arith.truncf %16 : vector<1024x16xf32> to vector<1024x16xbf16>
    %c0_12 = arith.constant 0 : index
    %c0_13 = arith.constant 0 : index
    %18 = vector.load %arg6[%c0_12, %c0_13] : memref<16x8xbf16, #tpu.memory_space<vmem>>, vector<16x8xbf16>
    %cst_14 = arith.constant dense<0.000000e+00> : vector<1024x8xf32>
    %19 = tpu.matmul %17, %18, %cst_14 {dimension_numbers = #tpu.dot_dimension_numbers<[1], [0], [0], [1], [0, 0, 1, 1], [], []>} : vector<1024x16xbf16>, vector<16x8xbf16>, vector<1024x8xf32> -> vector<1024x8xf32>
    %c0_15 = arith.constant 0 : index
    %c0_16 = arith.constant 0 : index
    %20 = vector.load %arg7[%c0_15, %c0_16] : memref<1x8xf32, #tpu.memory_space<vmem>>, vector<1x8xf32>
    %21 = vector.broadcast %20 : vector<1x8xf32> to vector<1024x8xf32>
    %22 = arith.addf %19, %21 : vector<1024x8xf32>
    %cst_17 = arith.constant 0.000000e+00 : f32
    %23 = vector.broadcast %cst_17 : f32 to vector<1024x8xf32>
    %24 = arith.maximumf %22, %23 : vector<1024x8xf32>
    %25 = arith.truncf %24 : vector<1024x8xf32> to vector<1024x8xbf16>
    %c0_18 = arith.constant 0 : index
    %c0_19 = arith.constant 0 : index
    %26 = vector.load %arg8[%c0_18, %c0_19] : memref<3x8xbf16, #tpu.memory_space<vmem>>, vector<3x8xbf16>
    "tpu.trace_start"() <{level = 10 : i32, message = "ck,nk->cn"}> : () -> ()
    %cst_20 = arith.constant dense<0.000000e+00> : vector<3x1024xf32>
    %27 = tpu.matmul %26, %25, %cst_20 {dimension_numbers = #tpu.dot_dimension_numbers<[1], [1], [0], [0], [0, 0, 1, 0], [], []>} : vector<3x8xbf16>, vector<1024x8xbf16>, vector<3x1024xf32> -> vector<3x1024xf32>
    "tpu.trace_stop"() : () -> ()
    %c0_21 = arith.constant 0 : index
    %c0_22 = arith.constant 0 : index
    %28 = vector.load %arg9[%c0_21, %c0_22] : memref<3x1xf32, #tpu.memory_space<vmem>>, vector<3x1xf32>
    %29 = vector.broadcast %28 : vector<3x1xf32> to vector<3x1024xf32>
    %30 = arith.addf %27, %29 : vector<3x1024xf32>
    %31 = math.tanh %30 : vector<3x1024xf32>
    %c0_23 = arith.constant 0 : index
    %c0_24 = arith.constant 0 : index
    %32 = vector.load %arg10[%c0_23, %c0_24] : memref<3x1024xf32, #tpu.memory_space<vmem>>, vector<3x1024xf32>
    tpu.vector_store %arg10[%c0_23, %c0_24], %31 {strides = array<i32>} : memref<3x1024xf32, #tpu.memory_space<vmem>>, vector<3x1024xf32>,
    return
  }
  func.func @transform_0(%arg0: i32) -> (i32, i32) {
    %c0_i32 = arith.constant 0 : i32
    %c0_i32_0 = arith.constant 0 : i32
    return %arg0, %c0_i32 : i32, i32
  }
  func.func @transform_1(%arg0: i32) -> (i32, i32) {
    %c0_i32 = arith.constant 0 : i32
    %c0_i32_0 = arith.constant 0 : i32
    %c0_i32_1 = arith.constant 0 : i32
    return %c0_i32, %c0_i32_0 : i32, i32
  }
  func.func @transform_2(%arg0: i32) -> (i32, i32) {
    %c0_i32 = arith.constant 0 : i32
    %c0_i32_0 = arith.constant 0 : i32
    %c0_i32_1 = arith.constant 0 : i32
    return %c0_i32, %c0_i32_0 : i32, i32
  }
  func.func @transform_3(%arg0: i32) -> (i32, i32) {
    %c0_i32 = arith.constant 0 : i32
    %c0_i32_0 = arith.constant 0 : i32
    %c0_i32_1 = arith.constant 0 : i32
    return %c0_i32, %c0_i32_0 : i32, i32
  }
  func.func @transform_4(%arg0: i32) -> (i32, i32) {
    %c0_i32 = arith.constant 0 : i32
    %c0_i32_0 = arith.constant 0 : i32
    %c0_i32_1 = arith.constant 0 : i32
    return %c0_i32, %c0_i32_0 : i32, i32
  }
  func.func @transform_5(%arg0: i32) -> (i32, i32) {
    %c0_i32 = arith.constant 0 : i32
    %c0_i32_0 = arith.constant 0 : i32
    %c0_i32_1 = arith.constant 0 : i32
    return %c0_i32, %c0_i32_0 : i32, i32
  }
  func.func @transform_6(%arg0: i32) -> (i32, i32) {
    %c0_i32 = arith.constant 0 : i32
    %c0_i32_0 = arith.constant 0 : i32
    %c0_i32_1 = arith.constant 0 : i32
    return %c0_i32, %c0_i32_0 : i32, i32
  }
  func.func @transform_7(%arg0: i32) -> (i32, i32) {
    %c0_i32 = arith.constant 0 : i32
    %c0_i32_0 = arith.constant 0 : i32
    %c0_i32_1 = arith.constant 0 : i32
    return %c0_i32, %c0_i32_0 : i32, i32
  }
  func.func @transform_8(%arg0: i32) -> (i32, i32) {
    %c0_i32 = arith.constant 0 : i32
    %c0_i32_0 = arith.constant 0 : i32
    %c0_i32_1 = arith.constant 0 : i32
    return %c0_i32, %c0_i32_0 : i32, i32
  }
  func.func @transform_9(%arg0: i32) -> (i32, i32) {
    %c0_i32 = arith.constant 0 : i32
    %c0_i32_0 = arith.constant 0 : i32
    return %c0_i32, %arg0 : i32, i32
  }
}

</mosaic_0001>

<llo_original>
// kernel: tpu_custom_call.1
$region0: #{tpu_custom_call.1}
  #allocation0 [shape = 'u32[]', space=smem, size = 0x4, offset = 0x4, fixed_abs, tag = 'smem constant byte address 0x4 - core index']
  #allocation1 [shape = 'u32[144,128]{1,0:T(1,128)}', space=vmem, size = 0x12000, scoped, tag = 'internal scratch']
  %s0 = inlined_call_operand.vmem [shape: f32[2048,35], index: 0, kind: input, shape index: {}]
  %s1 = inlined_call_operand.vmem [shape: bf16[35,32], index: 1, kind: input, shape index: {}]
  %s2 = inlined_call_operand.vmem [shape: f32[1,32], index: 2, kind: input, shape index: {}]
  %s3 = inlined_call_operand.vmem [shape: bf16[32,16], index: 3, kind: input, shape index: {}]
  %s4 = inlined_call_operand.vmem [shape: f32[1,16], index: 4, kind: input, shape index: {}]
  %s5 = inlined_call_operand.vmem [shape: bf16[16,8], index: 5, kind: input, shape index: {}]
  %s6 = inlined_call_operand.vmem [shape: f32[1,8], index: 6, kind: input, shape index: {}]
  %s7 = inlined_call_operand.vmem [shape: bf16[3,8], index: 7, kind: input, shape index: {}]
  %s8 = inlined_call_operand.vmem [shape: f32[3,1], index: 8, kind: input, shape index: {}]
  %s9 = inlined_call_operand.hbm [shape: f32[3,2048], index: 9, kind: output, shape index: {}]
  %s10 = sld [smem:[#allocation0]]
  $region69: #{tpu_custom_call.1} parent=0
    _
  %s12 = ssub.s32 1, %s10
  %s13 = scalar_select 0, %s12, %s10
  $region1: #{tpu_custom_call.1} parent=0
    #allocation2 [shape = 'u8[32768]{0}', space=vmem, size = 0x8000, scoped, tag = 'output window, operand 0']
    #allocation3 [shape = 's32[2]{0}', space=sflag, size = 0x8, scoped, tag = 'scoped memory for tpu_custom_call.1']
    %14 = vsyncpa [#allocation3], 0
    %s15 = scalar_lea.sflag [#allocation3], 1
    %16 = vsyncpa %s15, 0
    loop: start=0, step=1, limit=4
    $region2: #{tpu_custom_call.1} parent=1 // loop_pre_header
      _
    $region3: #{tpu_custom_call.1} parent=1 // loop_header
      %s18 = sphi 0, %s22
      %p19 = scmp.ge.s32.totalorder %s18, 4
      %s28 = sphi 0, %s30
      %s31 = sphi 0, %s28
      %s32 = sphi 0, %s31
      %s48 = sphi 0, %s32
      %s52 = sphi 0, %s52
      %s54 = sphi 0, %s52
      %s55 = sphi 0, %s54
      %s69 = sphi 0, %s55
      %s73 = sphi 0, %s73
      %s75 = sphi 0, %s73
      %s76 = sphi 0, %s75
      %s90 = sphi 0, %s76
      %s94 = sphi 0, %s94
      %s96 = sphi 0, %s94
      %s97 = sphi 0, %s96
      %s111 = sphi 0, %s97
      %s115 = sphi 0, %s115
      %s117 = sphi 0, %s115
      %s118 = sphi 0, %s117
      %s132 = sphi 0, %s118
      %s136 = sphi 0, %s136
      %s138 = sphi 0, %s136
      %s139 = sphi 0, %s138
      %s153 = sphi 0, %s139
      %s157 = sphi 0, %s157
      %s159 = sphi 0, %s157
      %s160 = sphi 0, %s159
      %s174 = sphi 0, %s160
      %s178 = sphi 0, %s178
      %s180 = sphi 0, %s178
      %s181 = sphi 0, %s180
      %s195 = sphi 0, %s181
      %s199 = sphi 0, %s199
      %s201 = sphi 0, %s199
      %s202 = sphi 0, %s201
      %s216 = sphi 0, %s202
      %s222 = sphi 0, %s224
      %s225 = sphi 0, %s222
      %s226 = sphi 0, %s225
      %s242 = sphi 0, %s226
    $region4: #{tpu_custom_call.1} parent=1 // loop_header_branch
      %21 = sbr.rel (%p19) target = $region8
    $region5: #{tpu_custom_call.1} parent=1 // loop_body
      %s23 = ssub.s32 %s18, 1
      %s24 = ssub.s32 %s18, 2
      %s25 = sadd.s32 %s18, 1
      %s26 = ssub.s32 %s18, %s25
      %p27 = scmp.eq.s32.totalorder %s26, 0
      %s29 = sadd.s32 %s28, 1
      %s30 = scalar_select %p27, %s28, %s29
      %p33 = pneg %p27
      %p34 = scmp.eq.s32.totalorder %s18, 1
      %p35 = por %p33, %p34
      %p36 = scmp.ne.s32.totalorder %s28, %s31
      %p37 = scmp.eq.s32.totalorder %s18, 0
      %p38 = por %p36, %p37
      %p39 = scmp.ne.s32.totalorder %s28, %s31
      %p40 = scmp.eq.s32.totalorder %s23, 1
      %p41 = por %p39, %p40
      %p42 = scmp.ne.s32.totalorder %s31, %s32
      %p43 = scmp.eq.s32.totalorder %s23, 0
      %p44 = por %p42, %p43
      %p45 = scmp.ne.s32.totalorder %s31, %s32
      %p46 = scmp.eq.s32.totalorder %s24, 1
      %p47 = por %p45, %p46
      %p49 = scmp.ne.s32.totalorder %s32, %s48
      %p50 = scmp.eq.s32.totalorder %s24, 0
      %p51 = por %p49, %p50
      %s53 = sadd.s32 %s52, 1
      %p56 = scmp.eq.s32.totalorder %s18, 1
      %p57 = scmp.ne.s32.totalorder %s52, %s54
      %p58 = scmp.eq.s32.totalorder %s18, 0
      %p59 = por %p57, %p58
      %p60 = scmp.ne.s32.totalorder %s52, %s54
      %p61 = scmp.eq.s32.totalorder %s23, 1
      %p62 = por %p60, %p61
      %p63 = scmp.ne.s32.totalorder %s54, %s55
      %p64 = scmp.eq.s32.totalorder %s23, 0
      %p65 = por %p63, %p64
      %p66 = scmp.ne.s32.totalorder %s54, %s55
      %p67 = scmp.eq.s32.totalorder %s24, 1
      %p68 = por %p66, %p67
      %p70 = scmp.ne.s32.totalorder %s55, %s69
      %p71 = scmp.eq.s32.totalorder %s24, 0
      %p72 = por %p70, %p71
      %s74 = sadd.s32 %s73, 1
      %p77 = scmp.eq.s32.totalorder %s18, 1
      %p78 = scmp.ne.s32.totalorder %s73, %s75
      %p79 = scmp.eq.s32.totalorder %s18, 0
      %p80 = por %p78, %p79
      %p81 = scmp.ne.s32.totalorder %s73, %s75
      %p82 = scmp.eq.s32.totalorder %s23, 1
      %p83 = por %p81, %p82
      %p84 = scmp.ne.s32.totalorder %s75, %s76
      %p85 = scmp.eq.s32.totalorder %s23, 0
      %p86 = por %p84, %p85
      %p87 = scmp.ne.s32.totalorder %s75, %s76
      %p88 = scmp.eq.s32.totalorder %s24, 1
      %p89 = por %p87, %p88
      %p91 = scmp.ne.s32.totalorder %s76, %s90
      %p92 = scmp.eq.s32.totalorder %s24, 0
      %p93 = por %p91, %p92
      %s95 = sadd.s32 %s94, 1
      %p98 = scmp.eq.s32.totalorder %s18, 1
      %p99 = scmp.ne.s32.totalorder %s94, %s96
      %p100 = scmp.eq.s32.totalorder %s18, 0
      %p101 = por %p99, %p100
      %p102 = scmp.ne.s32.totalorder %s94, %s96
      %p103 = scmp.eq.s32.totalorder %s23, 1
      %p104 = por %p102, %p103
      %p105 = scmp.ne.s32.totalorder %s96, %s97
      %p106 = scmp.eq.s32.totalorder %s23, 0
      %p107 = por %p105, %p106
      %p108 = scmp.ne.s32.totalorder %s96, %s97
      %p109 = scmp.eq.s32.totalorder %s24, 1
      %p110 = por %p108, %p109
      %p112 = scmp.ne.s32.totalorder %s97, %s111
      %p113 = scmp.eq.s32.totalorder %s24, 0
      %p114 = por %p112, %p113
      %s116 = sadd.s32 %s115, 1
      %p119 = scmp.eq.s32.totalorder %s18, 1
      %p120 = scmp.ne.s32.totalorder %s115, %s117
      %p121 = scmp.eq.s32.totalorder %s18, 0
      %p122 = por %p120, %p121
      %p123 = scmp.ne.s32.totalorder %s115, %s117
      %p124 = scmp.eq.s32.totalorder %s23, 1
      %p125 = por %p123, %p124
      %p126 = scmp.ne.s32.totalorder %s117, %s118
      %p127 = scmp.eq.s32.totalorder %s23, 0
      %p128 = por %p126, %p127
      %p129 = scmp.ne.s32.totalorder %s117, %s118
      %p130 = scmp.eq.s32.totalorder %s24, 1
      %p131 = por %p129, %p130
      %p133 = scmp.ne.s32.totalorder %s118, %s132
      %p134 = scmp.eq.s32.totalorder %s24, 0
      %p135 = por %p133, %p134
      %s137 = sadd.s32 %s136, 1
      %p140 = scmp.eq.s32.totalorder %s18, 1
      %p141 = scmp.ne.s32.totalorder %s136, %s138
      %p142 = scmp.eq.s32.totalorder %s18, 0
      %p143 = por %p141, %p142
      %p144 = scmp.ne.s32.totalorder %s136, %s138
      %p145 = scmp.eq.s32.totalorder %s23, 1
      %p146 = por %p144, %p145
      %p147 = scmp.ne.s32.totalorder %s138, %s139
      %p148 = scmp.eq.s32.totalorder %s23, 0
      %p149 = por %p147, %p148
      %p150 = scmp.ne.s32.totalorder %s138, %s139
      %p151 = scmp.eq.s32.totalorder %s24, 1
      %p152 = por %p150, %p151
      %p154 = scmp.ne.s32.totalorder %s139, %s153
      %p155 = scmp.eq.s32.totalorder %s24, 0
      %p156 = por %p154, %p155
      %s158 = sadd.s32 %s157, 1
      %p161 = scmp.eq.s32.totalorder %s18, 1
      %p162 = scmp.ne.s32.totalorder %s157, %s159
      %p163 = scmp.eq.s32.totalorder %s18, 0
      %p164 = por %p162, %p163
      %p165 = scmp.ne.s32.totalorder %s157, %s159
      %p166 = scmp.eq.s32.totalorder %s23, 1
      %p167 = por %p165, %p166
      %p168 = scmp.ne.s32.totalorder %s159, %s160
      %p169 = scmp.eq.s32.totalorder %s23, 0
      %p170 = por %p168, %p169
      %p171 = scmp.ne.s32.totalorder %s159, %s160
      %p172 = scmp.eq.s32.totalorder %s24, 1
      %p173 = por %p171, %p172
      %p175 = scmp.ne.s32.totalorder %s160, %s174
      %p176 = scmp.eq.s32.totalorder %s24, 0
      %p177 = por %p175, %p176
      %s179 = sadd.s32 %s178, 1
      %p182 = scmp.eq.s32.totalorder %s18, 1
      %p183 = scmp.ne.s32.totalorder %s178, %s180
      %p184 = scmp.eq.s32.totalorder %s18, 0
      %p185 = por %p183, %p184
      %p186 = scmp.ne.s32.totalorder %s178, %s180
      %p187 = scmp.eq.s32.totalorder %s23, 1
      %p188 = por %p186, %p187
      %p189 = scmp.ne.s32.totalorder %s180, %s181
      %p190 = scmp.eq.s32.totalorder %s23, 0
      %p191 = por %p189, %p190
      %p192 = scmp.ne.s32.totalorder %s180, %s181
      %p193 = scmp.eq.s32.totalorder %s24, 1
      %p194 = por %p192, %p193
      %p196 = scmp.ne.s32.totalorder %s181, %s195
      %p197 = scmp.eq.s32.totalorder %s24, 0
      %p198 = por %p196, %p197
      %s200 = sadd.s32 %s199, 1
      %p203 = scmp.eq.s32.totalorder %s18, 1
      %p204 = scmp.ne.s32.totalorder %s199, %s201
      %p205 = scmp.eq.s32.totalorder %s18, 0
      %p206 = por %p204, %p205
      %p207 = scmp.ne.s32.totalorder %s199, %s201
      %p208 = scmp.eq.s32.totalorder %s23, 1
      %p209 = por %p207, %p208
      %p210 = scmp.ne.s32.totalorder %s201, %s202
      %p211 = scmp.eq.s32.totalorder %s23, 0
      %p212 = por %p210, %p211
      %p213 = scmp.ne.s32.totalorder %s201, %s202
      %p214 = scmp.eq.s32.totalorder %s24, 1
      %p215 = por %p213, %p214
      %p217 = scmp.ne.s32.totalorder %s202, %s216
      %p218 = scmp.eq.s32.totalorder %s24, 0
      %p219 = por %p217, %p218
      %s220 = ssub.s32 %s18, %s25
      %p221 = scmp.eq.s32.totalorder %s220, 0
      %s223 = sadd.s32 %s222, 1
      %s224 = scalar_select %p221, %s222, %s223
      %p227 = pneg %p221
      %p228 = scmp.eq.s32.totalorder %s18, 1
      %p229 = por %p227, %p228
      %p230 = scmp.ne.s32.totalorder %s222, %s225
      %p231 = scmp.eq.s32.totalorder %s18, 0
      %p232 = por %p230, %p231
      %p233 = scmp.ne.s32.totalorder %s222, %s225
      %p234 = scmp.eq.s32.totalorder %s23, 1
      %p235 = por %p233, %p234
      %p236 = scmp.ne.s32.totalorder %s225, %s226
      %p237 = scmp.eq.s32.totalorder %s23, 0
      %p238 = por %p236, %p237
      %p239 = scmp.ne.s32.totalorder %s225, %s226
      %p240 = scmp.eq.s32.totalorder %s24, 1
      %p241 = por %p239, %p240
      %p243 = scmp.ne.s32.totalorder %s226, %s242
      %p244 = scmp.eq.s32.totalorder %s24, 0
      %p245 = por %p243, %p244
      %p246 = scmp.le.s32.totalorder 1, %s18
      %p247 = scmp.lt.s32.totalorder %s18, 3
      %p248 = pnand %p246, %p247
      %p249 = pneg %p248
      // Predicated region
      $region9: #{tpu_custom_call.1} parent=5 // pred_check
        _
      $region10: #{tpu_custom_call.1} parent=5 // pred_check_branch
        %251 = sbr.rel (%p248) target = $region12
      $region11: #{tpu_custom_call.1} parent=5 // pred_region
        %s252 = ssub.s32 %s18, 1
        // Predicated region
        $region13: #{tpu_custom_call.1} parent=11 // pred_check
          %p253 = pneg %p65
        $region14: #{tpu_custom_call.1} parent=11 // pred_check_branch
          %255 = sbr.rel (%p253) target = $region16
        $region15: #{tpu_custom_call.1} parent=11 // pred_region
          _
        $region16: #{tpu_custom_call.1} parent=11 // pred_fallthru
          _
        // Predicated region
        $region17: #{tpu_custom_call.1} parent=11 // pred_check
          %p256 = pneg %p86
        $region18: #{tpu_custom_call.1} parent=11 // pred_check_branch
          %258 = sbr.rel (%p256) target = $region20
        $region19: #{tpu_custom_call.1} parent=11 // pred_region
          _
        $region20: #{tpu_custom_call.1} parent=11 // pred_fallthru
          _
        // Predicated region
        $region21: #{tpu_custom_call.1} parent=11 // pred_check
          %p259 = pneg %p107
        $region22: #{tpu_custom_call.1} parent=11 // pred_check_branch
          %261 = sbr.rel (%p259) target = $region24
        $region23: #{tpu_custom_call.1} parent=11 // pred_region
          _
        $region24: #{tpu_custom_call.1} parent=11 // pred_fallthru
          _
        // Predicated region
        $region25: #{tpu_custom_call.1} parent=11 // pred_check
          %p262 = pneg %p128
        $region26: #{tpu_custom_call.1} parent=11 // pred_check_branch
          %264 = sbr.rel (%p262) target = $region28
        $region27: #{tpu_custom_call.1} parent=11 // pred_region
          _
        $region28: #{tpu_custom_call.1} parent=11 // pred_fallthru
          _
        // Predicated region
        $region29: #{tpu_custom_call.1} parent=11 // pred_check
          %p265 = pneg %p149
        $region30: #{tpu_custom_call.1} parent=11 // pred_check_branch
          %267 = sbr.rel (%p265) target = $region32
        $region31: #{tpu_custom_call.1} parent=11 // pred_region
          _
        $region32: #{tpu_custom_call.1} parent=11 // pred_fallthru
          _
        // Predicated region
        $region33: #{tpu_custom_call.1} parent=11 // pred_check
          %p268 = pneg %p170
        $region34: #{tpu_custom_call.1} parent=11 // pred_check_branch
          %270 = sbr.rel (%p268) target = $region36
        $region35: #{tpu_custom_call.1} parent=11 // pred_region
          _
        $region36: #{tpu_custom_call.1} parent=11 // pred_fallthru
          _
        // Predicated region
        $region37: #{tpu_custom_call.1} parent=11 // pred_check
          %p271 = pneg %p191
        $region38: #{tpu_custom_call.1} parent=11 // pred_check_branch
          %273 = sbr.rel (%p271) target = $region40
        $region39: #{tpu_custom_call.1} parent=11 // pred_region
          _
        $region40: #{tpu_custom_call.1} parent=11 // pred_fallthru
          _
        // Predicated region
        $region41: #{tpu_custom_call.1} parent=11 // pred_check
          %p274 = pneg %p212
        $region42: #{tpu_custom_call.1} parent=11 // pred_check_branch
          %276 = sbr.rel (%p274) target = $region44
        $region43: #{tpu_custom_call.1} parent=11 // pred_region
          _
        $region44: #{tpu_custom_call.1} parent=11 // pred_fallthru
          _
      $region12: #{tpu_custom_call.1} parent=5 // pred_fallthru
        _
      %p277 = scmp.lt.s32.totalorder %s18, 2
      // Predicated region
      $region45: #{tpu_custom_call.1} parent=5 // pred_check
        %p278 = pneg %p277
      $region46: #{tpu_custom_call.1} parent=5 // pred_check_branch
        %280 = sbr.rel (%p278) target = $region48
      $region47: #{tpu_custom_call.1} parent=5 // pred_region
        // Predicated region
        $region49: #{tpu_custom_call.1} parent=47 // pred_check
          %p281 = pneg %p38
        $region50: #{tpu_custom_call.1} parent=47 // pred_check_branch
          %283 = sbr.rel (%p281) target = $region52
        $region51: #{tpu_custom_call.1} parent=47 // pred_region
          %s284 = smul.u32 128, %s18
          %p285 = scmp.lt.s32.totalorder %s284, 255
          %s286 = scalar_select %p285, %s284, 255
          %s287 = smul.addr %s286, 8
          %s288 = scalar_lea.vmem %s0, %s287
          %s289 = smul.u32 128, %s18
        $region52: #{tpu_custom_call.1} parent=47 // pred_fallthru
          _
      $region48: #{tpu_custom_call.1} parent=5 // pred_fallthru
        _
      %p290 = scmp.le.s32.totalorder 1, %s18
      %p291 = scmp.lt.s32.totalorder %s18, 3
      %p292 = pnand %p290, %p291
      %p293 = pneg %p292
      // Predicated region
      $region53: #{tpu_custom_call.1} parent=5 // pred_check
        _
      $region54: #{tpu_custom_call.1} parent=5 // pred_check_branch
        %295 = sbr.rel (%p292) target = $region56
      $region55: #{tpu_custom_call.1} parent=5 // pred_region
        %s296 = ssub.s32 %s18, 1
        %s297 = smul.u32 128, %s23
        %p298 = scmp.lt.s32.totalorder %s297, 255
        %s299 = scalar_select %p298, %s297, 255
        %s300 = smul.addr %s299, 8
        %s301 = scalar_lea.vmem %s0, %s300
        %p302 = pneg %p44
        %p303 = pneg %p41
        %p304 = pneg %p65
        %p305 = pneg %p62
        %p306 = pneg %p86
        %p307 = pneg %p83
        %p308 = pneg %p107
        %p309 = pneg %p104
        %p310 = pneg %p128
        %p311 = pneg %p125
        %p312 = pneg %p149
        %p313 = pneg %p146
        %p314 = pneg %p170
        %p315 = pneg %p167
        %p316 = pneg %p191
        %p317 = pneg %p188
        %p318 = pneg %p212
        %p319 = pneg %p209
        %p320 = pneg %p238
        %p321 = pneg %p235
        %s322 = sand.u32 %s225, 1
        %s323 = scalar_lea.sflag [#allocation3], %s322
        %s324 = sand.u32 %s225, 1
        %s325 = smul.addr %s324, 32
        %s326 = scalar_lea.vmem [#allocation2], %s325
        %s327 = smul.u32 128, %s23
        %p328 = scmp.lt.s32.totalorder %s327, 255
        %s329 = scalar_select %p328, %s327, 255
        %s330 = smul.addr %s329, 8
        %s331 = scalar_lea.vmem %s0, %s330
        %s332 = smul.u32 128, %s23
        %s333 = smul.u32 8, %s23
        %v335 = vld [vmem:[%s331] sm:$0xff]
        %v336 = vld [vmem:[%s331 + $0x8] sm:$0xff]
        %v337 = vld [vmem:[%s331 + $0x10] sm:$0xff]
        %v338 = vld [vmem:[%s331 + $0x18] sm:$0xff]
        %v339 = vld [vmem:[%s331 + $0x20] sm:$0xff]
        %v340 = vld [vmem:[%s331 + $0x28] sm:$0xff]
        %v341 = vld [vmem:[%s331 + $0x30] sm:$0xff]
        %v342 = vld [vmem:[%s331 + $0x38] sm:$0xff]
        %v343 = vld [vmem:[%s331 + $0x40] sm:$0xff]
        %v344 = vld [vmem:[%s331 + $0x48] sm:$0xff]
        %v345 = vld [vmem:[%s331 + $0x50] sm:$0xff]
        %v346 = vld [vmem:[%s331 + $0x58] sm:$0xff]
        %v347 = vld [vmem:[%s331 + $0x60] sm:$0xff]
        %v348 = vld [vmem:[%s331 + $0x68] sm:$0xff]
        %v349 = vld [vmem:[%s331 + $0x70] sm:$0xff]
        %v350 = vld [vmem:[%s331 + $0x78] sm:$0xff]
        %v351 = vld [vmem:[%s331 + $0x80] sm:$0xff]
        %v352 = vld [vmem:[%s331 + $0x88] sm:$0xff]
        %v353 = vld [vmem:[%s331 + $0x90] sm:$0xff]
        %v354 = vld [vmem:[%s331 + $0x98] sm:$0xff]
        %v355 = vld [vmem:[%s331 + $0xa0] sm:$0xff]
        %v356 = vld [vmem:[%s331 + $0xa8] sm:$0xff]
        %v357 = vld [vmem:[%s331 + $0xb0] sm:$0xff]
        %v358 = vld [vmem:[%s331 + $0xb8] sm:$0xff]
        %v359 = vld [vmem:[%s331 + $0xc0] sm:$0xff]
        %v360 = vld [vmem:[%s331 + $0xc8] sm:$0xff]
        %v361 = vld [vmem:[%s331 + $0xd0] sm:$0xff]
        %v362 = vld [vmem:[%s331 + $0xd8] sm:$0xff]
        %v363 = vld [vmem:[%s331 + $0xe0] sm:$0xff]
        %v364 = vld [vmem:[%s331 + $0xe8] sm:$0xff]
        %v365 = vld [vmem:[%s331 + $0xf0] sm:$0xff]
        %v366 = vld [vmem:[%s331 + $0xf8] sm:$0xff]
        %v367 = vld [vmem:[%s331 + $0x100] sm:$0xff]
        %v368 = vld [vmem:[%s331 + $0x108] sm:$0xff]
        %v369 = vld [vmem:[%s331 + $0x110] sm:$0xff]
        %v370 = vld [vmem:[%s331 + $0x118] sm:$0xff]
        %v371 = vld [vmem:[%s331 + $0x120] sm:$0xff]
        %v372 = vld [vmem:[%s331 + $0x128] sm:$0xff]
        %v373 = vld [vmem:[%s331 + $0x130] sm:$0xff]
        %v374 = vld [vmem:[%s331 + $0x138] sm:$0xff]
        %v375 = vld [vmem:[%s331 + $0x140] sm:$0xff]
        %v376 = vld [vmem:[%s331 + $0x148] sm:$0xff]
        %v377 = vld [vmem:[%s331 + $0x150] sm:$0xff]
        %v378 = vld [vmem:[%s331 + $0x158] sm:$0xff]
        %v379 = vld [vmem:[%s331 + $0x160] sm:$0xff]
        %v380 = vld [vmem:[%s331 + $0x168] sm:$0xff]
        %v381 = vld [vmem:[%s331 + $0x170] sm:$0xff]
        %v382 = vld [vmem:[%s331 + $0x178] sm:$0xff]
        %v383 = vld [vmem:[%s331 + $0x180] sm:$0xff]
        %v384 = vld [vmem:[%s331 + $0x188] sm:$0xff]
        %v385 = vld [vmem:[%s331 + $0x190] sm:$0xff]
        %v386 = vld [vmem:[%s331 + $0x198] sm:$0xff]
        %v387 = vld [vmem:[%s331 + $0x1a0] sm:$0xff]
        %v388 = vld [vmem:[%s331 + $0x1a8] sm:$0xff]
        %v389 = vld [vmem:[%s331 + $0x1b0] sm:$0xff]
        %v390 = vld [vmem:[%s331 + $0x1b8] sm:$0xff]
        %v391 = vld [vmem:[%s331 + $0x1c0] sm:$0xff]
        %v392 = vld [vmem:[%s331 + $0x1c8] sm:$0xff]
        %v393 = vld [vmem:[%s331 + $0x1d0] sm:$0xff]
        %v394 = vld [vmem:[%s331 + $0x1d8] sm:$0xff]
        %v395 = vld [vmem:[%s331 + $0x1e0] sm:$0xff]
        %v396 = vld [vmem:[%s331 + $0x1e8] sm:$0xff]
        %v397 = vld [vmem:[%s331 + $0x1f0] sm:$0xff]
        %v398 = vld [vmem:[%s331 + $0x1f8] sm:$0xff]
        %v399 = vld [vmem:[%s331 + $0x200] sm:$0xff]
        %v400 = vld [vmem:[%s331 + $0x208] sm:$0xff]
        %v401 = vld [vmem:[%s331 + $0x210] sm:$0xff]
        %v402 = vld [vmem:[%s331 + $0x218] sm:$0xff]
        %v403 = vld [vmem:[%s331 + $0x220] sm:$0xff]
        %v404 = vld [vmem:[%s331 + $0x228] sm:$0xff]
        %v405 = vld [vmem:[%s331 + $0x230] sm:$0xff]
        %v406 = vld [vmem:[%s331 + $0x238] sm:$0xff]
        %v407 = vld [vmem:[%s331 + $0x240] sm:$0xff]
        %v408 = vld [vmem:[%s331 + $0x248] sm:$0xff]
        %v409 = vld [vmem:[%s331 + $0x250] sm:$0xff]
        %v410 = vld [vmem:[%s331 + $0x258] sm:$0xff]
        %v411 = vld [vmem:[%s331 + $0x260] sm:$0xff]
        %v412 = vld [vmem:[%s331 + $0x268] sm:$0xff]
        %v413 = vld [vmem:[%s331 + $0x270] sm:$0xff]
        %v414 = vld [vmem:[%s331 + $0x278] sm:$0xff]
        %v415 = vld [vmem:[%s331 + $0x280] sm:$0xff]
        %v416 = vld [vmem:[%s331 + $0x288] sm:$0xff]
        %v417 = vld [vmem:[%s331 + $0x290] sm:$0xff]
        %v418 = vld [vmem:[%s331 + $0x298] sm:$0xff]
        %v419 = vld [vmem:[%s331 + $0x2a0] sm:$0xff]
        %v420 = vld [vmem:[%s331 + $0x2a8] sm:$0xff]
        %v421 = vld [vmem:[%s331 + $0x2b0] sm:$0xff]
        %v422 = vld [vmem:[%s331 + $0x2b8] sm:$0xff]
        %v423 = vld [vmem:[%s331 + $0x2c0] sm:$0xff]
        %v424 = vld [vmem:[%s331 + $0x2c8] sm:$0xff]
        %v425 = vld [vmem:[%s331 + $0x2d0] sm:$0xff]
        %v426 = vld [vmem:[%s331 + $0x2d8] sm:$0xff]
        %v427 = vld [vmem:[%s331 + $0x2e0] sm:$0xff]
        %v428 = vld [vmem:[%s331 + $0x2e8] sm:$0xff]
        %v429 = vld [vmem:[%s331 + $0x2f0] sm:$0xff]
        %v430 = vld [vmem:[%s331 + $0x2f8] sm:$0xff]
        %v431 = vld [vmem:[%s331 + $0x300] sm:$0xff]
        %v432 = vld [vmem:[%s331 + $0x308] sm:$0xff]
        %v433 = vld [vmem:[%s331 + $0x310] sm:$0xff]
        %v434 = vld [vmem:[%s331 + $0x318] sm:$0xff]
        %v435 = vld [vmem:[%s331 + $0x320] sm:$0xff]
        %v436 = vld [vmem:[%s331 + $0x328] sm:$0xff]
        %v437 = vld [vmem:[%s331 + $0x330] sm:$0xff]
        %v438 = vld [vmem:[%s331 + $0x338] sm:$0xff]
        %v439 = vld [vmem:[%s331 + $0x340] sm:$0xff]
        %v440 = vld [vmem:[%s331 + $0x348] sm:$0xff]
        %v441 = vld [vmem:[%s331 + $0x350] sm:$0xff]
        %v442 = vld [vmem:[%s331 + $0x358] sm:$0xff]
        %v443 = vld [vmem:[%s331 + $0x360] sm:$0xff]
        %v444 = vld [vmem:[%s331 + $0x368] sm:$0xff]
        %v445 = vld [vmem:[%s331 + $0x370] sm:$0xff]
        %v446 = vld [vmem:[%s331 + $0x378] sm:$0xff]
        %v447 = vld [vmem:[%s331 + $0x380] sm:$0xff]
        %v448 = vld [vmem:[%s331 + $0x388] sm:$0xff]
        %v449 = vld [vmem:[%s331 + $0x390] sm:$0xff]
        %v450 = vld [vmem:[%s331 + $0x398] sm:$0xff]
        %v451 = vld [vmem:[%s331 + $0x3a0] sm:$0xff]
        %v452 = vld [vmem:[%s331 + $0x3a8] sm:$0xff]
        %v453 = vld [vmem:[%s331 + $0x3b0] sm:$0xff]
        %v454 = vld [vmem:[%s331 + $0x3b8] sm:$0xff]
        %v455 = vld [vmem:[%s331 + $0x3c0] sm:$0xff]
        %v456 = vld [vmem:[%s331 + $0x3c8] sm:$0xff]
        %v457 = vld [vmem:[%s331 + $0x3d0] sm:$0xff]
        %v458 = vld [vmem:[%s331 + $0x3d8] sm:$0xff]
        %v459 = vld [vmem:[%s331 + $0x3e0] sm:$0xff]
        %v460 = vld [vmem:[%s331 + $0x3e8] sm:$0xff]
        %v461 = vld [vmem:[%s331 + $0x3f0] sm:$0xff]
        %v462 = vld [vmem:[%s331 + $0x3f8] sm:$0xff]
        %v463 = vpack.c.bf16 %v336, %v335
        %v464 = vpack.c.bf16 %v338, %v337
        %v465 = vpack.c.bf16 %v340, %v339
        %v466 = vpack.c.bf16 %v342, %v341
        %v467 = vpack.c.bf16 %v344, %v343
        %v468 = vpack.c.bf16 %v346, %v345
        %v469 = vpack.c.bf16 %v348, %v347
        %v470 = vpack.c.bf16 %v350, %v349
        %v471 = vpack.c.bf16 %v352, %v351
        %v472 = vpack.c.bf16 %v354, %v353
        %v473 = vpack.c.bf16 %v356, %v355
        %v474 = vpack.c.bf16 %v358, %v357
        %v475 = vpack.c.bf16 %v360, %v359
        %v476 = vpack.c.bf16 %v362, %v361
        %v477 = vpack.c.bf16 %v364, %v363
        %v478 = vpack.c.bf16 %v366, %v365
        %v479 = vpack.c.bf16 %v368, %v367
        %v480 = vpack.c.bf16 %v370, %v369
        %v481 = vpack.c.bf16 %v372, %v371
        %v482 = vpack.c.bf16 %v374, %v373
        %v483 = vpack.c.bf16 %v376, %v375
        %v484 = vpack.c.bf16 %v378, %v377
        %v485 = vpack.c.bf16 %v380, %v379
        %v486 = vpack.c.bf16 %v382, %v381
        %v487 = vpack.c.bf16 %v384, %v383
        %v488 = vpack.c.bf16 %v386, %v385
        %v489 = vpack.c.bf16 %v388, %v387
        %v490 = vpack.c.bf16 %v390, %v389
        %v491 = vpack.c.bf16 %v392, %v391
        %v492 = vpack.c.bf16 %v394, %v393
        %v493 = vpack.c.bf16 %v396, %v395
        %v494 = vpack.c.bf16 %v398, %v397
        %v495 = vpack.c.bf16 %v400, %v399
        %v496 = vpack.c.bf16 %v402, %v401
        %v497 = vpack.c.bf16 %v404, %v403
        %v498 = vpack.c.bf16 %v406, %v405
        %v499 = vpack.c.bf16 %v408, %v407
        %v500 = vpack.c.bf16 %v410, %v409
        %v501 = vpack.c.bf16 %v412, %v411
        %v502 = vpack.c.bf16 %v414, %v413
        %v503 = vpack.c.bf16 %v416, %v415
        %v504 = vpack.c.bf16 %v418, %v417
        %v505 = vpack.c.bf16 %v420, %v419
        %v506 = vpack.c.bf16 %v422, %v421
        %v507 = vpack.c.bf16 %v424, %v423
        %v508 = vpack.c.bf16 %v426, %v425
        %v509 = vpack.c.bf16 %v428, %v427
        %v510 = vpack.c.bf16 %v430, %v429
        %v511 = vpack.c.bf16 %v432, %v431
        %v512 = vpack.c.bf16 %v434, %v433
        %v513 = vpack.c.bf16 %v436, %v435
        %v514 = vpack.c.bf16 %v438, %v437
        %v515 = vpack.c.bf16 %v440, %v439
        %v516 = vpack.c.bf16 %v442, %v441
        %v517 = vpack.c.bf16 %v444, %v443
        %v518 = vpack.c.bf16 %v446, %v445
        %v519 = vpack.c.bf16 %v448, %v447
        %v520 = vpack.c.bf16 %v450, %v449
        %v521 = vpack.c.bf16 %v452, %v451
        %v522 = vpack.c.bf16 %v454, %v453
        %v523 = vpack.c.bf16 %v456, %v455
        %v524 = vpack.c.bf16 %v458, %v457
        %v525 = vpack.c.bf16 %v460, %v459
        %v526 = vpack.c.bf16 %v462, %v461
        %v527 = vld [vmem:[%s1] sm:$0xf]
        %v528 = vld [vmem:[%s1 + $0x4] sm:$0xf]
        %v529 = vld [vmem:[%s1 + $0x8] sm:$0xf]
        %v530 = vld [vmem:[%s1 + $0xc] sm:$0xf]
        %v531 = vld [vmem:[%s1 + $0x10] sm:$0x3]
        %v532 = vld [vmem:[%s2] sm:$0x1]
        %v534 = vlaneseq
        %v535 = vshrl.u32 %v534, 7
        %v536 = vsub.s32 0, %v535
        %v537 = vrot.slane %v532, %v536
        %v544 = vunpack.c.l.b16 %v527
        %v545 = vunpack.c.l.b16 %v528
        %v546 = vunpack.c.l.b16 %v529
        %v547 = vunpack.c.l.b16 %v530
        %v548 = vunpack.c.l.b16 %v531
        %v549 = vpack.c.b16 %v545, %v544
        %v550 = vpack.c.b16 %v547, %v546
        %v551 = vpack.c.b16 %v548, %v548
        %vm554 = vcmask 285696
        %v556 = vsel %vm554, %v463, 0
        %v559 = vsel %vm554, %v464, 0
        %v562 = vsel %vm554, %v465, 0
        %v565 = vsel %vm554, %v466, 0
        %v568 = vsel %vm554, %v467, 0
        %v571 = vsel %vm554, %v468, 0
        %v574 = vsel %vm554, %v469, 0
        %v577 = vsel %vm554, %v470, 0
        %v580 = vsel %vm554, %v471, 0
        %v583 = vsel %vm554, %v472, 0
        %v586 = vsel %vm554, %v473, 0
        %v589 = vsel %vm554, %v474, 0
        %v592 = vsel %vm554, %v475, 0
        %v595 = vsel %vm554, %v476, 0
        %v598 = vsel %vm554, %v477, 0
        %v601 = vsel %vm554, %v478, 0
        %v604 = vsel %vm554, %v479, 0
        %v607 = vsel %vm554, %v480, 0
        %v610 = vsel %vm554, %v481, 0
        %v613 = vsel %vm554, %v482, 0
        %v616 = vsel %vm554, %v483, 0
        %v619 = vsel %vm554, %v484, 0
        %v622 = vsel %vm554, %v485, 0
        %v625 = vsel %vm554, %v486, 0
        %v628 = vsel %vm554, %v487, 0
        %v631 = vsel %vm554, %v488, 0
        %v634 = vsel %vm554, %v489, 0
        %v637 = vsel %vm554, %v490, 0
        %v640 = vsel %vm554, %v491, 0
        %v643 = vsel %vm554, %v492, 0
        %v646 = vsel %vm554, %v493, 0
        %v649 = vsel %vm554, %v494, 0
        %v652 = vsel %vm554, %v495, 0
        %v655 = vsel %vm554, %v496, 0
        %v658 = vsel %vm554, %v497, 0
        %v661 = vsel %vm554, %v498, 0
        %v664 = vsel %vm554, %v499, 0
        %v667 = vsel %vm554, %v500, 0
        %v670 = vsel %vm554, %v501, 0
        %v673 = vsel %vm554, %v502, 0
        %v676 = vsel %vm554, %v503, 0
        %v679 = vsel %vm554, %v504, 0
        %v682 = vsel %vm554, %v505, 0
        %v685 = vsel %vm554, %v506, 0
        %v688 = vsel %vm554, %v507, 0
        %v691 = vsel %vm554, %v508, 0
        %v694 = vsel %vm554, %v509, 0
        %v697 = vsel %vm554, %v510, 0
        %v700 = vsel %vm554, %v511, 0
        %v703 = vsel %vm554, %v512, 0
        %v706 = vsel %vm554, %v513, 0
        %v709 = vsel %vm554, %v514, 0
        %v712 = vsel %vm554, %v515, 0
        %v715 = vsel %vm554, %v516, 0
        %v718 = vsel %vm554, %v517, 0
        %v721 = vsel %vm554, %v518, 0
        %v724 = vsel %vm554, %v519, 0
        %v727 = vsel %vm554, %v520, 0
        %v730 = vsel %vm554, %v521, 0
        %v733 = vsel %vm554, %v522, 0
        %v736 = vsel %vm554, %v523, 0
        %v739 = vsel %vm554, %v524, 0
        %v742 = vsel %vm554, %v525, 0
        %v745 = vsel %vm554, %v526, 0
        %vm747 = vcmask 1040384
        %vm748 = vcmask 1041408
        %v749 = vsel %vm747, 4294967295, 65535
        %v750 = vsel %vm748, %v749, 0
        %v752 = vand.u32 %v551, %v750
        %754 = vmatprep.subr.bf16.mxu0 0
        %755 = vmatpush1.bf16.msra.mxu0 0
        %756 = vmatprep.subr.bf16.mxu0 0
        %757 = vmatpush1.bf16.msra.mxu0 0
        %758 = vmatprep.subr.bf16.mxu0 0
        %759 = vmatpush1.bf16.msra.mxu0 0
        %760 = vmatprep.subr.bf16.mxu0 0
        %761 = vmatpush1.bf16.msra.mxu0 0
        %762 = vmatprep.subr.bf16.mxu0 0
        %763 = vmatpush1.bf16.msra.mxu0 0
        %764 = vmatprep.subr.bf16.mxu0 0
        %765 = vmatpush1.bf16.msra.mxu0 %v752
        %766 = vmatprep.subr.bf16.mxu0 0
        %767 = vmatpush1.bf16.msra.mxu0 %v550
        %768 = vmatprep.subr.bf16.mxu0 0
        %769 = vmatpush1.bf16.msra.mxu0 %v549
        %770 = vmatprep.subr.bf16.mxu0 0
        %771 = vmatpush2.bf16.msra.mxu0 0
        %772 = vmatprep.subr.bf16.mxu0 0
        %773 = vmatpush2.bf16.msra.mxu0 0
        %774 = vmatprep.subr.bf16.mxu0 0
        %775 = vmatpush2.bf16.msra.mxu0 0
        %776 = vmatprep.subr.bf16.mxu0 0
        %777 = vmatpush2.bf16.msra.mxu0 0
        %778 = vmatprep.subr.bf16.mxu0 0
        %779 = vmatpush2.bf16.msra.mxu0 0
        %780 = vmatprep.subr.bf16.mxu0 0
        %781 = vmatpush2.bf16.msra.mxu0 0
        %782 = vmatprep.subr.bf16.mxu0 0
        %783 = vmatpush2.bf16.msra.mxu0 0
        %784 = vmatprep.subr.bf16.mxu0 0
        %785 = vmatpush2.bf16.msra.mxu0 0
        %786 = vmatprep.mubr.bf16.mxu0 0
        %787 = vmatmul.mubr.bf16.gmra.mxu0 %v556
        %v788 = vpop.f32.mrf.mxu0
        %v789 = vadd.f32 %v537, %v788
        %v790 = vpop.f32.mrf.mxu0
        %v791 = vpop.f32.mrf.mxu0
        %v792 = vadd.f32 %v537, %v791
        %v793 = vpop.f32.mrf.mxu0
        %794 = vmatprep.mubr.bf16.mxu0 0
        %795 = vmatmul.mubr.bf16.gmra.mxu0 %v559
        %v796 = vpop.f32.mrf.mxu0
        %v797 = vadd.f32 %v537, %v796
        %v798 = vpop.f32.mrf.mxu0
        %v799 = vpop.f32.mrf.mxu0
        %v800 = vadd.f32 %v537, %v799
        %v801 = vpop.f32.mrf.mxu0
        %802 = vmatprep.mubr.bf16.mxu0 0
        %803 = vmatmul.mubr.bf16.gmra.mxu0 %v562
        %v804 = vpop.f32.mrf.mxu0
        %v805 = vadd.f32 %v537, %v804
        %v806 = vpop.f32.mrf.mxu0
        %v807 = vpop.f32.mrf.mxu0
        %v808 = vadd.f32 %v537, %v807
        %v809 = vpop.f32.mrf.mxu0
        %810 = vmatprep.mubr.bf16.mxu0 0
        %811 = vmatmul.mubr.bf16.gmra.mxu0 %v565
        %v812 = vpop.f32.mrf.mxu0
        %v813 = vadd.f32 %v537, %v812
        %v814 = vpop.f32.mrf.mxu0
        %v815 = vpop.f32.mrf.mxu0
        %v816 = vadd.f32 %v537, %v815
        %v817 = vpop.f32.mrf.mxu0
        %818 = vmatprep.mubr.bf16.mxu0 0
        %819 = vmatmul.mubr.bf16.gmra.mxu0 %v568
        %v820 = vpop.f32.mrf.mxu0
        %v821 = vadd.f32 %v537, %v820
        %v822 = vpop.f32.mrf.mxu0
        %v823 = vpop.f32.mrf.mxu0
        %v824 = vadd.f32 %v537, %v823
        %v825 = vpop.f32.mrf.mxu0
        %826 = vmatprep.mubr.bf16.mxu0 0
        %827 = vmatmul.mubr.bf16.gmra.mxu0 %v571
        %v828 = vpop.f32.mrf.mxu0
        %v829 = vadd.f32 %v537, %v828
        %v830 = vpop.f32.mrf.mxu0
        %v831 = vpop.f32.mrf.mxu0
        %v832 = vadd.f32 %v537, %v831
        %v833 = vpop.f32.mrf.mxu0
        %834 = vmatprep.mubr.bf16.mxu0 0
        %835 = vmatmul.mubr.bf16.gmra.mxu0 %v574
        %v836 = vpop.f32.mrf.mxu0
        %v837 = vadd.f32 %v537, %v836
        %v838 = vpop.f32.mrf.mxu0
        %v839 = vpop.f32.mrf.mxu0
        %v840 = vadd.f32 %v537, %v839
        %v841 = vpop.f32.mrf.mxu0
        %842 = vmatprep.mubr.bf16.mxu0 0
        %843 = vmatmul.mubr.bf16.gmra.mxu0 %v577
        %v844 = vpop.f32.mrf.mxu0
        %v845 = vadd.f32 %v537, %v844
        %v846 = vpop.f32.mrf.mxu0
        %v847 = vpop.f32.mrf.mxu0
        %v848 = vadd.f32 %v537, %v847
        %v849 = vpop.f32.mrf.mxu0
        %850 = vmatprep.mubr.bf16.mxu0 0
        %851 = vmatmul.mubr.bf16.gmra.mxu0 %v580
        %v852 = vpop.f32.mrf.mxu0
        %v853 = vadd.f32 %v537, %v852
        %v854 = vpop.f32.mrf.mxu0
        %v855 = vpop.f32.mrf.mxu0
        %v856 = vadd.f32 %v537, %v855
        %v857 = vpop.f32.mrf.mxu0
        %858 = vmatprep.mubr.bf16.mxu0 0
        %859 = vmatmul.mubr.bf16.gmra.mxu0 %v583
        %v860 = vpop.f32.mrf.mxu0
        %v861 = vadd.f32 %v537, %v860
        %v862 = vpop.f32.mrf.mxu0
        %v863 = vpop.f32.mrf.mxu0
        %v864 = vadd.f32 %v537, %v863
        %v865 = vpop.f32.mrf.mxu0
        %866 = vmatprep.mubr.bf16.mxu0 0
        %867 = vmatmul.mubr.bf16.gmra.mxu0 %v586
        %v868 = vpop.f32.mrf.mxu0
        %v869 = vadd.f32 %v537, %v868
        %v870 = vpop.f32.mrf.mxu0
        %v871 = vpop.f32.mrf.mxu0
        %v872 = vadd.f32 %v537, %v871
        %v873 = vpop.f32.mrf.mxu0
        %874 = vmatprep.mubr.bf16.mxu0 0
        %875 = vmatmul.mubr.bf16.gmra.mxu0 %v589
        %v876 = vpop.f32.mrf.mxu0
        %v877 = vadd.f32 %v537, %v876
        %v878 = vpop.f32.mrf.mxu0
        %v879 = vpop.f32.mrf.mxu0
        %v880 = vadd.f32 %v537, %v879
        %v881 = vpop.f32.mrf.mxu0
        %882 = vmatprep.mubr.bf16.mxu0 0
        %883 = vmatmul.mubr.bf16.gmra.mxu0 %v592
        %v884 = vpop.f32.mrf.mxu0
        %v885 = vadd.f32 %v537, %v884
        %v886 = vpop.f32.mrf.mxu0
        %v887 = vpop.f32.mrf.mxu0
        %v888 = vadd.f32 %v537, %v887
        %v889 = vpop.f32.mrf.mxu0
        %890 = vmatprep.mubr.bf16.mxu0 0
        %891 = vmatmul.mubr.bf16.gmra.mxu0 %v595
        %v892 = vpop.f32.mrf.mxu0
        %v893 = vadd.f32 %v537, %v892
        %v894 = vpop.f32.mrf.mxu0
        %v895 = vpop.f32.mrf.mxu0
        %v896 = vadd.f32 %v537, %v895
        %v897 = vpop.f32.mrf.mxu0
        %898 = vmatprep.mubr.bf16.mxu0 0
        %899 = vmatmul.mubr.bf16.gmra.mxu0 %v598
        %v900 = vpop.f32.mrf.mxu0
        %v901 = vadd.f32 %v537, %v900
        %v902 = vpop.f32.mrf.mxu0
        %v903 = vpop.f32.mrf.mxu0
        %v904 = vadd.f32 %v537, %v903
        %v905 = vpop.f32.mrf.mxu0
        %906 = vmatprep.mubr.bf16.mxu0 0
        %907 = vmatmul.mubr.bf16.gmra.mxu0 %v601
        %v908 = vpop.f32.mrf.mxu0
        %v909 = vadd.f32 %v537, %v908
        %v910 = vpop.f32.mrf.mxu0
        %v911 = vpop.f32.mrf.mxu0
        %v912 = vadd.f32 %v537, %v911
        %v913 = vpop.f32.mrf.mxu0
        %914 = vmatprep.mubr.bf16.mxu0 0
        %915 = vmatmul.mubr.bf16.gmra.mxu0 %v604
        %v916 = vpop.f32.mrf.mxu0
        %v917 = vadd.f32 %v537, %v916
        %v918 = vpop.f32.mrf.mxu0
        %v919 = vpop.f32.mrf.mxu0
        %v920 = vadd.f32 %v537, %v919
        %v921 = vpop.f32.mrf.mxu0
        %922 = vmatprep.mubr.bf16.mxu0 0
        %923 = vmatmul.mubr.bf16.gmra.mxu0 %v607
        %v924 = vpop.f32.mrf.mxu0
        %v925 = vadd.f32 %v537, %v924
        %v926 = vpop.f32.mrf.mxu0
        %v927 = vpop.f32.mrf.mxu0
        %v928 = vadd.f32 %v537, %v927
        %v929 = vpop.f32.mrf.mxu0
        %930 = vmatprep.mubr.bf16.mxu0 0
        %931 = vmatmul.mubr.bf16.gmra.mxu0 %v610
        %v932 = vpop.f32.mrf.mxu0
        %v933 = vadd.f32 %v537, %v932
        %v934 = vpop.f32.mrf.mxu0
        %v935 = vpop.f32.mrf.mxu0
        %v936 = vadd.f32 %v537, %v935
        %v937 = vpop.f32.mrf.mxu0
        %938 = vmatprep.mubr.bf16.mxu0 0
        %939 = vmatmul.mubr.bf16.gmra.mxu0 %v613
        %v940 = vpop.f32.mrf.mxu0
        %v941 = vadd.f32 %v537, %v940
        %v942 = vpop.f32.mrf.mxu0
        %v943 = vpop.f32.mrf.mxu0
        %v944 = vadd.f32 %v537, %v943
        %v945 = vpop.f32.mrf.mxu0
        %946 = vmatprep.mubr.bf16.mxu0 0
        %947 = vmatmul.mubr.bf16.gmra.mxu0 %v616
        %v948 = vpop.f32.mrf.mxu0
        %v949 = vadd.f32 %v537, %v948
        %v950 = vpop.f32.mrf.mxu0
        %v951 = vpop.f32.mrf.mxu0
        %v952 = vadd.f32 %v537, %v951
        %v953 = vpop.f32.mrf.mxu0
        %954 = vmatprep.mubr.bf16.mxu0 0
        %955 = vmatmul.mubr.bf16.gmra.mxu0 %v619
        %v956 = vpop.f32.mrf.mxu0
        %v957 = vadd.f32 %v537, %v956
        %v958 = vpop.f32.mrf.mxu0
        %v959 = vpop.f32.mrf.mxu0
        %v960 = vadd.f32 %v537, %v959
        %v961 = vpop.f32.mrf.mxu0
        %962 = vmatprep.mubr.bf16.mxu0 0
        %963 = vmatmul.mubr.bf16.gmra.mxu0 %v622
        %v964 = vpop.f32.mrf.mxu0
        %v965 = vadd.f32 %v537, %v964
        %v966 = vpop.f32.mrf.mxu0
        %v967 = vpop.f32.mrf.mxu0
        %v968 = vadd.f32 %v537, %v967
        %v969 = vpop.f32.mrf.mxu0
        %970 = vmatprep.mubr.bf16.mxu0 0
        %971 = vmatmul.mubr.bf16.gmra.mxu0 %v625
        %v972 = vpop.f32.mrf.mxu0
        %v973 = vadd.f32 %v537, %v972
        %v974 = vpop.f32.mrf.mxu0
        %v975 = vpop.f32.mrf.mxu0
        %v976 = vadd.f32 %v537, %v975
        %v977 = vpop.f32.mrf.mxu0
        %978 = vmatprep.mubr.bf16.mxu0 0
        %979 = vmatmul.mubr.bf16.gmra.mxu0 %v628
        %v980 = vpop.f32.mrf.mxu0
        %v981 = vadd.f32 %v537, %v980
        %v982 = vpop.f32.mrf.mxu0
        %v983 = vpop.f32.mrf.mxu0
        %v984 = vadd.f32 %v537, %v983
        %v985 = vpop.f32.mrf.mxu0
        %986 = vmatprep.mubr.bf16.mxu0 0
        %987 = vmatmul.mubr.bf16.gmra.mxu0 %v631
        %v988 = vpop.f32.mrf.mxu0
        %v989 = vadd.f32 %v537, %v988
        %v990 = vpop.f32.mrf.mxu0
        %v991 = vpop.f32.mrf.mxu0
        %v992 = vadd.f32 %v537, %v991
        %v993 = vpop.f32.mrf.mxu0
        %994 = vmatprep.mubr.bf16.mxu0 0
        %995 = vmatmul.mubr.bf16.gmra.mxu0 %v634
        %v996 = vpop.f32.mrf.mxu0
        %v997 = vadd.f32 %v537, %v996
        %v998 = vpop.f32.mrf.mxu0
        %v999 = vpop.f32.mrf.mxu0
        %v1000 = vadd.f32 %v537, %v999
        %v1001 = vpop.f32.mrf.mxu0
        %1002 = vmatprep.mubr.bf16.mxu0 0
        %1003 = vmatmul.mubr.bf16.gmra.mxu0 %v637
        %v1004 = vpop.f32.mrf.mxu0
        %v1005 = vadd.f32 %v537, %v1004
        %v1006 = vpop.f32.mrf.mxu0
        %v1007 = vpop.f32.mrf.mxu0
        %v1008 = vadd.f32 %v537, %v1007
        %v1009 = vpop.f32.mrf.mxu0
        %1010 = vmatprep.mubr.bf16.mxu0 0
        %1011 = vmatmul.mubr.bf16.gmra.mxu0 %v640
        %v1012 = vpop.f32.mrf.mxu0
        %v1013 = vadd.f32 %v537, %v1012
        %v1014 = vpop.f32.mrf.mxu0
        %v1015 = vpop.f32.mrf.mxu0
        %v1016 = vadd.f32 %v537, %v1015
        %v1017 = vpop.f32.mrf.mxu0
        %1018 = vmatprep.mubr.bf16.mxu0 0
        %1019 = vmatmul.mubr.bf16.gmra.mxu0 %v643
        %v1020 = vpop.f32.mrf.mxu0
        %v1021 = vadd.f32 %v537, %v1020
        %v1022 = vpop.f32.mrf.mxu0
        %v1023 = vpop.f32.mrf.mxu0
        %v1024 = vadd.f32 %v537, %v1023
        %v1025 = vpop.f32.mrf.mxu0
        %1026 = vmatprep.mubr.bf16.mxu0 0
        %1027 = vmatmul.mubr.bf16.gmra.mxu0 %v646
        %v1028 = vpop.f32.mrf.mxu0
        %v1029 = vadd.f32 %v537, %v1028
        %v1030 = vpop.f32.mrf.mxu0
        %v1031 = vpop.f32.mrf.mxu0
        %v1032 = vadd.f32 %v537, %v1031
        %v1033 = vpop.f32.mrf.mxu0
        %1034 = vmatprep.mubr.bf16.mxu0 0
        %1035 = vmatmul.mubr.bf16.gmra.mxu0 %v649
        %v1036 = vpop.f32.mrf.mxu0
        %v1037 = vadd.f32 %v537, %v1036
        %v1038 = vpop.f32.mrf.mxu0
        %v1039 = vpop.f32.mrf.mxu0
        %v1040 = vadd.f32 %v537, %v1039
        %v1041 = vpop.f32.mrf.mxu0
        %1042 = vmatprep.mubr.bf16.mxu0 0
        %1043 = vmatmul.mubr.bf16.gmra.mxu0 %v652
        %v1044 = vpop.f32.mrf.mxu0
        %v1045 = vadd.f32 %v537, %v1044
        %v1046 = vpop.f32.mrf.mxu0
        %v1047 = vpop.f32.mrf.mxu0
        %v1048 = vadd.f32 %v537, %v1047
        %v1049 = vpop.f32.mrf.mxu0
        %1050 = vmatprep.mubr.bf16.mxu0 0
        %1051 = vmatmul.mubr.bf16.gmra.mxu0 %v655
        %v1052 = vpop.f32.mrf.mxu0
        %v1053 = vadd.f32 %v537, %v1052
        %v1054 = vpop.f32.mrf.mxu0
        %v1055 = vpop.f32.mrf.mxu0
        %v1056 = vadd.f32 %v537, %v1055
        %v1057 = vpop.f32.mrf.mxu0
        %1058 = vmatprep.mubr.bf16.mxu0 0
        %1059 = vmatmul.mubr.bf16.gmra.mxu0 %v658
        %v1060 = vpop.f32.mrf.mxu0
        %v1061 = vadd.f32 %v537, %v1060
        %v1062 = vpop.f32.mrf.mxu0
        %v1063 = vpop.f32.mrf.mxu0
        %v1064 = vadd.f32 %v537, %v1063
        %v1065 = vpop.f32.mrf.mxu0
        %1066 = vmatprep.mubr.bf16.mxu0 0
        %1067 = vmatmul.mubr.bf16.gmra.mxu0 %v661
        %v1068 = vpop.f32.mrf.mxu0
        %v1069 = vadd.f32 %v537, %v1068
        %v1070 = vpop.f32.mrf.mxu0
        %v1071 = vpop.f32.mrf.mxu0
        %v1072 = vadd.f32 %v537, %v1071
        %v1073 = vpop.f32.mrf.mxu0
        %1074 = vmatprep.mubr.bf16.mxu0 0
        %1075 = vmatmul.mubr.bf16.gmra.mxu0 %v664
        %v1076 = vpop.f32.mrf.mxu0
        %v1077 = vadd.f32 %v537, %v1076
        %v1078 = vpop.f32.mrf.mxu0
        %v1079 = vpop.f32.mrf.mxu0
        %v1080 = vadd.f32 %v537, %v1079
        %v1081 = vpop.f32.mrf.mxu0
        %1082 = vmatprep.mubr.bf16.mxu0 0
        %1083 = vmatmul.mubr.bf16.gmra.mxu0 %v667
        %v1084 = vpop.f32.mrf.mxu0
        %v1085 = vadd.f32 %v537, %v1084
        %v1086 = vpop.f32.mrf.mxu0
        %v1087 = vpop.f32.mrf.mxu0
        %v1088 = vadd.f32 %v537, %v1087
        %v1089 = vpop.f32.mrf.mxu0
        %1090 = vmatprep.mubr.bf16.mxu0 0
        %1091 = vmatmul.mubr.bf16.gmra.mxu0 %v670
        %v1092 = vpop.f32.mrf.mxu0
        %v1093 = vadd.f32 %v537, %v1092
        %v1094 = vpop.f32.mrf.mxu0
        %v1095 = vpop.f32.mrf.mxu0
        %v1096 = vadd.f32 %v537, %v1095
        %v1097 = vpop.f32.mrf.mxu0
        %1098 = vmatprep.mubr.bf16.mxu0 0
        %1099 = vmatmul.mubr.bf16.gmra.mxu0 %v673
        %v1100 = vpop.f32.mrf.mxu0
        %v1101 = vadd.f32 %v537, %v1100
        %v1102 = vpop.f32.mrf.mxu0
        %v1103 = vpop.f32.mrf.mxu0
        %v1104 = vadd.f32 %v537, %v1103
        %v1105 = vpop.f32.mrf.mxu0
        %1106 = vmatprep.mubr.bf16.mxu0 0
        %1107 = vmatmul.mubr.bf16.gmra.mxu0 %v676
        %v1108 = vpop.f32.mrf.mxu0
        %v1109 = vadd.f32 %v537, %v1108
        %v1110 = vpop.f32.mrf.mxu0
        %v1111 = vpop.f32.mrf.mxu0
        %v1112 = vadd.f32 %v537, %v1111
        %v1113 = vpop.f32.mrf.mxu0
        %1114 = vmatprep.mubr.bf16.mxu0 0
        %1115 = vmatmul.mubr.bf16.gmra.mxu0 %v679
        %v1116 = vpop.f32.mrf.mxu0
        %v1117 = vadd.f32 %v537, %v1116
        %v1118 = vpop.f32.mrf.mxu0
        %v1119 = vpop.f32.mrf.mxu0
        %v1120 = vadd.f32 %v537, %v1119
        %v1121 = vpop.f32.mrf.mxu0
        %1122 = vmatprep.mubr.bf16.mxu0 0
        %1123 = vmatmul.mubr.bf16.gmra.mxu0 %v682
        %v1124 = vpop.f32.mrf.mxu0
        %v1125 = vadd.f32 %v537, %v1124
        %v1126 = vpop.f32.mrf.mxu0
        %v1127 = vpop.f32.mrf.mxu0
        %v1128 = vadd.f32 %v537, %v1127
        %v1129 = vpop.f32.mrf.mxu0
        %1130 = vmatprep.mubr.bf16.mxu0 0
        %1131 = vmatmul.mubr.bf16.gmra.mxu0 %v685
        %v1132 = vpop.f32.mrf.mxu0
        %v1133 = vadd.f32 %v537, %v1132
        %v1134 = vpop.f32.mrf.mxu0
        %v1135 = vpop.f32.mrf.mxu0
        %v1136 = vadd.f32 %v537, %v1135
        %v1137 = vpop.f32.mrf.mxu0
        %1138 = vmatprep.mubr.bf16.mxu0 0
        %1139 = vmatmul.mubr.bf16.gmra.mxu0 %v688
        %v1140 = vpop.f32.mrf.mxu0
        %v1141 = vadd.f32 %v537, %v1140
        %v1142 = vpop.f32.mrf.mxu0
        %v1143 = vpop.f32.mrf.mxu0
        %v1144 = vadd.f32 %v537, %v1143
        %v1145 = vpop.f32.mrf.mxu0
        %1146 = vmatprep.mubr.bf16.mxu0 0
        %1147 = vmatmul.mubr.bf16.gmra.mxu0 %v691
        %v1148 = vpop.f32.mrf.mxu0
        %v1149 = vadd.f32 %v537, %v1148
        %v1150 = vpop.f32.mrf.mxu0
        %v1151 = vpop.f32.mrf.mxu0
        %v1152 = vadd.f32 %v537, %v1151
        %v1153 = vpop.f32.mrf.mxu0
        %1154 = vmatprep.mubr.bf16.mxu0 0
        %1155 = vmatmul.mubr.bf16.gmra.mxu0 %v694
        %v1156 = vpop.f32.mrf.mxu0
        %v1157 = vadd.f32 %v537, %v1156
        %v1158 = vpop.f32.mrf.mxu0
        %v1159 = vpop.f32.mrf.mxu0
        %v1160 = vadd.f32 %v537, %v1159
        %v1161 = vpop.f32.mrf.mxu0
        %1162 = vmatprep.mubr.bf16.mxu0 0
        %1163 = vmatmul.mubr.bf16.gmra.mxu0 %v697
        %v1164 = vpop.f32.mrf.mxu0
        %v1165 = vadd.f32 %v537, %v1164
        %v1166 = vpop.f32.mrf.mxu0
        %v1167 = vpop.f32.mrf.mxu0
        %v1168 = vadd.f32 %v537, %v1167
        %v1169 = vpop.f32.mrf.mxu0
        %1170 = vmatprep.mubr.bf16.mxu0 0
        %1171 = vmatmul.mubr.bf16.gmra.mxu0 %v700
        %v1172 = vpop.f32.mrf.mxu0
        %v1173 = vadd.f32 %v537, %v1172
        %v1174 = vpop.f32.mrf.mxu0
        %v1175 = vpop.f32.mrf.mxu0
        %v1176 = vadd.f32 %v537, %v1175
        %v1177 = vpop.f32.mrf.mxu0
        %1178 = vmatprep.mubr.bf16.mxu0 0
        %1179 = vmatmul.mubr.bf16.gmra.mxu0 %v703
        %v1180 = vpop.f32.mrf.mxu0
        %v1181 = vadd.f32 %v537, %v1180
        %v1182 = vpop.f32.mrf.mxu0
        %v1183 = vpop.f32.mrf.mxu0
        %v1184 = vadd.f32 %v537, %v1183
        %v1185 = vpop.f32.mrf.mxu0
        %1186 = vmatprep.mubr.bf16.mxu0 0
        %1187 = vmatmul.mubr.bf16.gmra.mxu0 %v706
        %v1188 = vpop.f32.mrf.mxu0
        %v1189 = vadd.f32 %v537, %v1188
        %v1190 = vpop.f32.mrf.mxu0
        %v1191 = vpop.f32.mrf.mxu0
        %v1192 = vadd.f32 %v537, %v1191
        %v1193 = vpop.f32.mrf.mxu0
        %1194 = vmatprep.mubr.bf16.mxu0 0
        %1195 = vmatmul.mubr.bf16.gmra.mxu0 %v709
        %v1196 = vpop.f32.mrf.mxu0
        %v1197 = vadd.f32 %v537, %v1196
        %v1198 = vpop.f32.mrf.mxu0
        %v1199 = vpop.f32.mrf.mxu0
        %v1200 = vadd.f32 %v537, %v1199
        %v1201 = vpop.f32.mrf.mxu0
        %1202 = vmatprep.mubr.bf16.mxu0 0
        %1203 = vmatmul.mubr.bf16.gmra.mxu0 %v712
        %v1204 = vpop.f32.mrf.mxu0
        %v1205 = vadd.f32 %v537, %v1204
        %v1206 = vpop.f32.mrf.mxu0
        %v1207 = vpop.f32.mrf.mxu0
        %v1208 = vadd.f32 %v537, %v1207
        %v1209 = vpop.f32.mrf.mxu0
        %1210 = vmatprep.mubr.bf16.mxu0 0
        %1211 = vmatmul.mubr.bf16.gmra.mxu0 %v715
        %v1212 = vpop.f32.mrf.mxu0
        %v1213 = vadd.f32 %v537, %v1212
        %v1214 = vpop.f32.mrf.mxu0
        %v1215 = vpop.f32.mrf.mxu0
        %v1216 = vadd.f32 %v537, %v1215
        %v1217 = vpop.f32.mrf.mxu0
        %1218 = vmatprep.mubr.bf16.mxu0 0
        %1219 = vmatmul.mubr.bf16.gmra.mxu0 %v718
        %v1220 = vpop.f32.mrf.mxu0
        %v1221 = vadd.f32 %v537, %v1220
        %v1222 = vpop.f32.mrf.mxu0
        %v1223 = vpop.f32.mrf.mxu0
        %v1224 = vadd.f32 %v537, %v1223
        %v1225 = vpop.f32.mrf.mxu0
        %1226 = vmatprep.mubr.bf16.mxu0 0
        %1227 = vmatmul.mubr.bf16.gmra.mxu0 %v721
        %v1228 = vpop.f32.mrf.mxu0
        %v1229 = vadd.f32 %v537, %v1228
        %v1230 = vpop.f32.mrf.mxu0
        %v1231 = vpop.f32.mrf.mxu0
        %v1232 = vadd.f32 %v537, %v1231
        %v1233 = vpop.f32.mrf.mxu0
        %1234 = vmatprep.mubr.bf16.mxu0 0
        %1235 = vmatmul.mubr.bf16.gmra.mxu0 %v724
        %v1236 = vpop.f32.mrf.mxu0
        %v1237 = vadd.f32 %v537, %v1236
        %v1238 = vpop.f32.mrf.mxu0
        %v1239 = vpop.f32.mrf.mxu0
        %v1240 = vadd.f32 %v537, %v1239
        %v1241 = vpop.f32.mrf.mxu0
        %1242 = vmatprep.mubr.bf16.mxu0 0
        %1243 = vmatmul.mubr.bf16.gmra.mxu0 %v727
        %v1244 = vpop.f32.mrf.mxu0
        %v1245 = vadd.f32 %v537, %v1244
        %v1246 = vpop.f32.mrf.mxu0
        %v1247 = vpop.f32.mrf.mxu0
        %v1248 = vadd.f32 %v537, %v1247
        %v1249 = vpop.f32.mrf.mxu0
        %1250 = vmatprep.mubr.bf16.mxu0 0
        %1251 = vmatmul.mubr.bf16.gmra.mxu0 %v730
        %v1252 = vpop.f32.mrf.mxu0
        %v1253 = vadd.f32 %v537, %v1252
        %v1254 = vpop.f32.mrf.mxu0
        %v1255 = vpop.f32.mrf.mxu0
        %v1256 = vadd.f32 %v537, %v1255
        %v1257 = vpop.f32.mrf.mxu0
        %1258 = vmatprep.mubr.bf16.mxu0 0
        %1259 = vmatmul.mubr.bf16.gmra.mxu0 %v733
        %v1260 = vpop.f32.mrf.mxu0
        %v1261 = vadd.f32 %v537, %v1260
        %v1262 = vpop.f32.mrf.mxu0
        %v1263 = vpop.f32.mrf.mxu0
        %v1264 = vadd.f32 %v537, %v1263
        %v1265 = vpop.f32.mrf.mxu0
        %1266 = vmatprep.mubr.bf16.mxu0 0
        %1267 = vmatmul.mubr.bf16.gmra.mxu0 %v736
        %v1268 = vpop.f32.mrf.mxu0
        %v1269 = vadd.f32 %v537, %v1268
        %v1270 = vpop.f32.mrf.mxu0
        %v1271 = vpop.f32.mrf.mxu0
        %v1272 = vadd.f32 %v537, %v1271
        %v1273 = vpop.f32.mrf.mxu0
        %1274 = vmatprep.mubr.bf16.mxu0 0
        %1275 = vmatmul.mubr.bf16.gmra.mxu0 %v739
        %v1276 = vpop.f32.mrf.mxu0
        %v1277 = vadd.f32 %v537, %v1276
        %v1278 = vpop.f32.mrf.mxu0
        %v1279 = vpop.f32.mrf.mxu0
        %v1280 = vadd.f32 %v537, %v1279
        %v1281 = vpop.f32.mrf.mxu0
        %1282 = vmatprep.mubr.bf16.mxu0 0
        %1283 = vmatmul.mubr.bf16.gmra.mxu0 %v742
        %v1284 = vpop.f32.mrf.mxu0
        %v1285 = vadd.f32 %v537, %v1284
        %v1286 = vpop.f32.mrf.mxu0
        %v1287 = vpop.f32.mrf.mxu0
        %v1288 = vadd.f32 %v537, %v1287
        %v1289 = vpop.f32.mrf.mxu0
        %1290 = vmatprep.mubr.bf16.mxu0 0
        %1291 = vmatmul.mubr.bf16.gmra.mxu0 %v745
        %v1292 = vpop.f32.mrf.mxu0
        %v1293 = vadd.f32 %v537, %v1292
        %v1294 = vpop.f32.mrf.mxu0
        %v1295 = vpop.f32.mrf.mxu0
        %v1296 = vadd.f32 %v537, %v1295
        %v1297 = vpop.f32.mrf.mxu0
        %1298 = vdwg.mxu0
        %v1299 = vmax.f32 %v789, 0.0
        %v1300 = vmax.f32 %v792, 0.0
        %v1301 = vmax.f32 %v797, 0.0
        %v1302 = vmax.f32 %v800, 0.0
        %v1303 = vmax.f32 %v805, 0.0
        %v1304 = vmax.f32 %v808, 0.0
        %v1305 = vmax.f32 %v813, 0.0
        %v1306 = vmax.f32 %v816, 0.0
        %v1307 = vmax.f32 %v821, 0.0
        %v1308 = vmax.f32 %v824, 0.0
        %v1309 = vmax.f32 %v829, 0.0
        %v1310 = vmax.f32 %v832, 0.0
        %v1311 = vmax.f32 %v837, 0.0
        %v1312 = vmax.f32 %v840, 0.0
        %v1313 = vmax.f32 %v845, 0.0
        %v1314 = vmax.f32 %v848, 0.0
        %v1315 = vmax.f32 %v853, 0.0
        %v1316 = vmax.f32 %v856, 0.0
        %v1317 = vmax.f32 %v861, 0.0
        %v1318 = vmax.f32 %v864, 0.0
        %v1319 = vmax.f32 %v869, 0.0
        %v1320 = vmax.f32 %v872, 0.0
        %v1321 = vmax.f32 %v877, 0.0
        %v1322 = vmax.f32 %v880, 0.0
        %v1323 = vmax.f32 %v885, 0.0
        %v1324 = vmax.f32 %v888, 0.0
        %v1325 = vmax.f32 %v893, 0.0
        %v1326 = vmax.f32 %v896, 0.0
        %v1327 = vmax.f32 %v901, 0.0
        %v1328 = vmax.f32 %v904, 0.0
        %v1329 = vmax.f32 %v909, 0.0
        %v1330 = vmax.f32 %v912, 0.0
        %v1331 = vmax.f32 %v917, 0.0
        %v1332 = vmax.f32 %v920, 0.0
        %v1333 = vmax.f32 %v925, 0.0
        %v1334 = vmax.f32 %v928, 0.0
        %v1335 = vmax.f32 %v933, 0.0
        %v1336 = vmax.f32 %v936, 0.0
        %v1337 = vmax.f32 %v941, 0.0
        %v1338 = vmax.f32 %v944, 0.0
        %v1339 = vmax.f32 %v949, 0.0
        %v1340 = vmax.f32 %v952, 0.0
        %v1341 = vmax.f32 %v957, 0.0
        %v1342 = vmax.f32 %v960, 0.0
        %v1343 = vmax.f32 %v965, 0.0
        %v1344 = vmax.f32 %v968, 0.0
        %v1345 = vmax.f32 %v973, 0.0
        %v1346 = vmax.f32 %v976, 0.0
        %v1347 = vmax.f32 %v981, 0.0
        %v1348 = vmax.f32 %v984, 0.0
        %v1349 = vmax.f32 %v989, 0.0
        %v1350 = vmax.f32 %v992, 0.0
        %v1351 = vmax.f32 %v997, 0.0
        %v1352 = vmax.f32 %v1000, 0.0
        %v1353 = vmax.f32 %v1005, 0.0
        %v1354 = vmax.f32 %v1008, 0.0
        %v1355 = vmax.f32 %v1013, 0.0
        %v1356 = vmax.f32 %v1016, 0.0
        %v1357 = vmax.f32 %v1021, 0.0
        %v1358 = vmax.f32 %v1024, 0.0
        %v1359 = vmax.f32 %v1029, 0.0
        %v1360 = vmax.f32 %v1032, 0.0
        %v1361 = vmax.f32 %v1037, 0.0
        %v1362 = vmax.f32 %v1040, 0.0
        %v1363 = vmax.f32 %v1045, 0.0
        %v1364 = vmax.f32 %v1048, 0.0
        %v1365 = vmax.f32 %v1053, 0.0
        %v1366 = vmax.f32 %v1056, 0.0
        %v1367 = vmax.f32 %v1061, 0.0
        %v1368 = vmax.f32 %v1064, 0.0
        %v1369 = vmax.f32 %v1069, 0.0
        %v1370 = vmax.f32 %v1072, 0.0
        %v1371 = vmax.f32 %v1077, 0.0
        %v1372 = vmax.f32 %v1080, 0.0
        %v1373 = vmax.f32 %v1085, 0.0
        %v1374 = vmax.f32 %v1088, 0.0
        %v1375 = vmax.f32 %v1093, 0.0
        %v1376 = vmax.f32 %v1096, 0.0
        %v1377 = vmax.f32 %v1101, 0.0
        %v1378 = vmax.f32 %v1104, 0.0
        %v1379 = vmax.f32 %v1109, 0.0
        %v1380 = vmax.f32 %v1112, 0.0
        %v1381 = vmax.f32 %v1117, 0.0
        %v1382 = vmax.f32 %v1120, 0.0
        %v1383 = vmax.f32 %v1125, 0.0
        %v1384 = vmax.f32 %v1128, 0.0
        %v1385 = vmax.f32 %v1133, 0.0
        %v1386 = vmax.f32 %v1136, 0.0
        %v1387 = vmax.f32 %v1141, 0.0
        %v1388 = vmax.f32 %v1144, 0.0
        %v1389 = vmax.f32 %v1149, 0.0
        %v1390 = vmax.f32 %v1152, 0.0
        %v1391 = vmax.f32 %v1157, 0.0
        %v1392 = vmax.f32 %v1160, 0.0
        %v1393 = vmax.f32 %v1165, 0.0
        %v1394 = vmax.f32 %v1168, 0.0
        %v1395 = vmax.f32 %v1173, 0.0
        %v1396 = vmax.f32 %v1176, 0.0
        %v1397 = vmax.f32 %v1181, 0.0
        %v1398 = vmax.f32 %v1184, 0.0
        %v1399 = vmax.f32 %v1189, 0.0
        %v1400 = vmax.f32 %v1192, 0.0
        %v1401 = vmax.f32 %v1197, 0.0
        %v1402 = vmax.f32 %v1200, 0.0
        %v1403 = vmax.f32 %v1205, 0.0
        %v1404 = vmax.f32 %v1208, 0.0
        %v1405 = vmax.f32 %v1213, 0.0
        %v1406 = vmax.f32 %v1216, 0.0
        %v1407 = vmax.f32 %v1221, 0.0
        %v1408 = vmax.f32 %v1224, 0.0
        %v1409 = vmax.f32 %v1229, 0.0
        %v1410 = vmax.f32 %v1232, 0.0
        %v1411 = vmax.f32 %v1237, 0.0
        %v1412 = vmax.f32 %v1240, 0.0
        %v1413 = vmax.f32 %v1245, 0.0
        %v1414 = vmax.f32 %v1248, 0.0
        %v1415 = vmax.f32 %v1253, 0.0
        %v1416 = vmax.f32 %v1256, 0.0
        %v1417 = vmax.f32 %v1261, 0.0
        %v1418 = vmax.f32 %v1264, 0.0
        %v1419 = vmax.f32 %v1269, 0.0
        %v1420 = vmax.f32 %v1272, 0.0
        %v1421 = vmax.f32 %v1277, 0.0
        %v1422 = vmax.f32 %v1280, 0.0
        %v1423 = vmax.f32 %v1285, 0.0
        %v1424 = vmax.f32 %v1288, 0.0
        %v1425 = vmax.f32 %v1293, 0.0
        %v1426 = vmax.f32 %v1296, 0.0
        %v1427 = vpack.c.bf16 %v1300, %v1299
        %v1428 = vpack.c.bf16 %v1302, %v1301
        %v1429 = vpack.c.bf16 %v1304, %v1303
        %v1430 = vpack.c.bf16 %v1306, %v1305
        %v1431 = vpack.c.bf16 %v1308, %v1307
        %v1432 = vpack.c.bf16 %v1310, %v1309
        %v1433 = vpack.c.bf16 %v1312, %v1311
        %v1434 = vpack.c.bf16 %v1314, %v1313
        %v1435 = vpack.c.bf16 %v1316, %v1315
        %v1436 = vpack.c.bf16 %v1318, %v1317
        %v1437 = vpack.c.bf16 %v1320, %v1319
        %v1438 = vpack.c.bf16 %v1322, %v1321
        %v1439 = vpack.c.bf16 %v1324, %v1323
        %v1440 = vpack.c.bf16 %v1326, %v1325
        %v1441 = vpack.c.bf16 %v1328, %v1327
        %v1442 = vpack.c.bf16 %v1330, %v1329
        %v1443 = vpack.c.bf16 %v1332, %v1331
        %v1444 = vpack.c.bf16 %v1334, %v1333
        %v1445 = vpack.c.bf16 %v1336, %v1335
        %v1446 = vpack.c.bf16 %v1338, %v1337
        %v1447 = vpack.c.bf16 %v1340, %v1339
        %v1448 = vpack.c.bf16 %v1342, %v1341
        %v1449 = vpack.c.bf16 %v1344, %v1343
        %v1450 = vpack.c.bf16 %v1346, %v1345
        %v1451 = vpack.c.bf16 %v1348, %v1347
        %v1452 = vpack.c.bf16 %v1350, %v1349
        %v1453 = vpack.c.bf16 %v1352, %v1351
        %v1454 = vpack.c.bf16 %v1354, %v1353
        %v1455 = vpack.c.bf16 %v1356, %v1355
        %v1456 = vpack.c.bf16 %v1358, %v1357
        %v1457 = vpack.c.bf16 %v1360, %v1359
        %v1458 = vpack.c.bf16 %v1362, %v1361
        %v1459 = vpack.c.bf16 %v1364, %v1363
        %v1460 = vpack.c.bf16 %v1366, %v1365
        %v1461 = vpack.c.bf16 %v1368, %v1367
        %v1462 = vpack.c.bf16 %v1370, %v1369
        %v1463 = vpack.c.bf16 %v1372, %v1371
        %v1464 = vpack.c.bf16 %v1374, %v1373
        %v1465 = vpack.c.bf16 %v1376, %v1375
        %v1466 = vpack.c.bf16 %v1378, %v1377
        %v1467 = vpack.c.bf16 %v1380, %v1379
        %v1468 = vpack.c.bf16 %v1382, %v1381
        %v1469 = vpack.c.bf16 %v1384, %v1383
        %v1470 = vpack.c.bf16 %v1386, %v1385
        %v1471 = vpack.c.bf16 %v1388, %v1387
        %v1472 = vpack.c.bf16 %v1390, %v1389
        %v1473 = vpack.c.bf16 %v1392, %v1391
        %v1474 = vpack.c.bf16 %v1394, %v1393
        %v1475 = vpack.c.bf16 %v1396, %v1395
        %v1476 = vpack.c.bf16 %v1398, %v1397
        %v1477 = vpack.c.bf16 %v1400, %v1399
        %v1478 = vpack.c.bf16 %v1402, %v1401
        %v1479 = vpack.c.bf16 %v1404, %v1403
        %v1480 = vpack.c.bf16 %v1406, %v1405
        %v1481 = vpack.c.bf16 %v1408, %v1407
        %v1482 = vpack.c.bf16 %v1410, %v1409
        %v1483 = vpack.c.bf16 %v1412, %v1411
        %v1484 = vpack.c.bf16 %v1414, %v1413
        %v1485 = vpack.c.bf16 %v1416, %v1415
        %v1486 = vpack.c.bf16 %v1418, %v1417
        %v1487 = vpack.c.bf16 %v1420, %v1419
        %v1488 = vpack.c.bf16 %v1422, %v1421
        %v1489 = vpack.c.bf16 %v1424, %v1423
        %v1490 = vpack.c.bf16 %v1426, %v1425
        %v1491 = vld [vmem:[%s3] sm:$0xf]
        %v1492 = vld [vmem:[%s3 + $0x4] sm:$0xf]
        %v1493 = vld [vmem:[%s3 + $0x8] sm:$0xf]
        %v1494 = vld [vmem:[%s3 + $0xc] sm:$0xf]
        %v1495 = vld [vmem:[%s4] sm:$0x1]
        %v1497 = vlaneseq
        %v1498 = vshrl.u32 %v1497, 7
        %v1499 = vsub.s32 0, %v1498
        %v1500 = vrot.slane %v1495, %v1499
        %v1506 = vunpack.c.l.b16 %v1491
        %v1507 = vunpack.c.l.b16 %v1492
        %v1508 = vunpack.c.l.b16 %v1493
        %v1509 = vunpack.c.l.b16 %v1494
        %v1510 = vpack.c.b16 %v1507, %v1506
        %v1511 = vpack.c.b16 %v1509, %v1508
        %vm1514 = vcmask 261120
        %v1516 = vsel %vm1514, %v1427, 0
        %v1519 = vsel %vm1514, %v1428, 0
        %v1522 = vsel %vm1514, %v1429, 0
        %v1525 = vsel %vm1514, %v1430, 0
        %v1528 = vsel %vm1514, %v1431, 0
        %v1531 = vsel %vm1514, %v1432, 0
        %v1534 = vsel %vm1514, %v1433, 0
        %v1537 = vsel %vm1514, %v1434, 0
        %v1540 = vsel %vm1514, %v1435, 0
        %v1543 = vsel %vm1514, %v1436, 0
        %v1546 = vsel %vm1514, %v1437, 0
        %v1549 = vsel %vm1514, %v1438, 0
        %v1552 = vsel %vm1514, %v1439, 0
        %v1555 = vsel %vm1514, %v1440, 0
        %v1558 = vsel %vm1514, %v1441, 0
        %v1561 = vsel %vm1514, %v1442, 0
        %v1564 = vsel %vm1514, %v1443, 0
        %v1567 = vsel %vm1514, %v1444, 0
        %v1570 = vsel %vm1514, %v1445, 0
        %v1573 = vsel %vm1514, %v1446, 0
        %v1576 = vsel %vm1514, %v1447, 0
        %v1579 = vsel %vm1514, %v1448, 0
        %v1582 = vsel %vm1514, %v1449, 0
        %v1585 = vsel %vm1514, %v1450, 0
        %v1588 = vsel %vm1514, %v1451, 0
        %v1591 = vsel %vm1514, %v1452, 0
        %v1594 = vsel %vm1514, %v1453, 0
        %v1597 = vsel %vm1514, %v1454, 0
        %v1600 = vsel %vm1514, %v1455, 0
        %v1603 = vsel %vm1514, %v1456, 0
        %v1606 = vsel %vm1514, %v1457, 0
        %v1609 = vsel %vm1514, %v1458, 0
        %v1612 = vsel %vm1514, %v1459, 0
        %v1615 = vsel %vm1514, %v1460, 0
        %v1618 = vsel %vm1514, %v1461, 0
        %v1621 = vsel %vm1514, %v1462, 0
        %v1624 = vsel %vm1514, %v1463, 0
        %v1627 = vsel %vm1514, %v1464, 0
        %v1630 = vsel %vm1514, %v1465, 0
        %v1633 = vsel %vm1514, %v1466, 0
        %v1636 = vsel %vm1514, %v1467, 0
        %v1639 = vsel %vm1514, %v1468, 0
        %v1642 = vsel %vm1514, %v1469, 0
        %v1645 = vsel %vm1514, %v1470, 0
        %v1648 = vsel %vm1514, %v1471, 0
        %v1651 = vsel %vm1514, %v1472, 0
        %v1654 = vsel %vm1514, %v1473, 0
        %v1657 = vsel %vm1514, %v1474, 0
        %v1660 = vsel %vm1514, %v1475, 0
        %v1663 = vsel %vm1514, %v1476, 0
        %v1666 = vsel %vm1514, %v1477, 0
        %v1669 = vsel %vm1514, %v1478, 0
        %v1672 = vsel %vm1514, %v1479, 0
        %v1675 = vsel %vm1514, %v1480, 0
        %v1678 = vsel %vm1514, %v1481, 0
        %v1681 = vsel %vm1514, %v1482, 0
        %v1684 = vsel %vm1514, %v1483, 0
        %v1687 = vsel %vm1514, %v1484, 0
        %v1690 = vsel %vm1514, %v1485, 0
        %v1693 = vsel %vm1514, %v1486, 0
        %v1696 = vsel %vm1514, %v1487, 0
        %v1699 = vsel %vm1514, %v1488, 0
        %v1702 = vsel %vm1514, %v1489, 0
        %v1705 = vsel %vm1514, %v1490, 0
        %1707 = vmatprep.subr.bf16.mxu0 0
        %1708 = vmatpush1.bf16.msra.mxu0 0
        %1709 = vmatprep.subr.bf16.mxu0 0
        %1710 = vmatpush1.bf16.msra.mxu0 0
        %1711 = vmatprep.subr.bf16.mxu0 0
        %1712 = vmatpush1.bf16.msra.mxu0 0
        %1713 = vmatprep.subr.bf16.mxu0 0
        %1714 = vmatpush1.bf16.msra.mxu0 0
        %1715 = vmatprep.subr.bf16.mxu0 0
        %1716 = vmatpush1.bf16.msra.mxu0 0
        %1717 = vmatprep.subr.bf16.mxu0 0
        %1718 = vmatpush1.bf16.msra.mxu0 0
        %1719 = vmatprep.subr.bf16.mxu0 0
        %1720 = vmatpush1.bf16.msra.mxu0 %v1511
        %1721 = vmatprep.subr.bf16.mxu0 0
        %1722 = vmatpush1.bf16.msra.mxu0 %v1510
        %1723 = vmatprep.subr.bf16.mxu0 0
        %1724 = vmatpush2.bf16.msra.mxu0 0
        %1725 = vmatprep.subr.bf16.mxu0 0
        %1726 = vmatpush2.bf16.msra.mxu0 0
        %1727 = vmatprep.subr.bf16.mxu0 0
        %1728 = vmatpush2.bf16.msra.mxu0 0
        %1729 = vmatprep.subr.bf16.mxu0 0
        %1730 = vmatpush2.bf16.msra.mxu0 0
        %1731 = vmatprep.subr.bf16.mxu0 0
        %1732 = vmatpush2.bf16.msra.mxu0 0
        %1733 = vmatprep.subr.bf16.mxu0 0
        %1734 = vmatpush2.bf16.msra.mxu0 0
        %1735 = vmatprep.subr.bf16.mxu0 0
        %1736 = vmatpush2.bf16.msra.mxu0 0
        %1737 = vmatprep.subr.bf16.mxu0 0
        %1738 = vmatpush2.bf16.msra.mxu0 0
        %1739 = vmatprep.mubr.bf16.mxu0 0
        %1740 = vmatmul.mubr.bf16.gmra.mxu0 %v1516
        %v1741 = vpop.f32.mrf.mxu0
        %v1742 = vadd.f32 %v1500, %v1741
        %v1743 = vpop.f32.mrf.mxu0
        %v1744 = vpop.f32.mrf.mxu0
        %v1745 = vadd.f32 %v1500, %v1744
        %v1746 = vpop.f32.mrf.mxu0
        %1747 = vmatprep.mubr.bf16.mxu0 0
        %1748 = vmatmul.mubr.bf16.gmra.mxu0 %v1519
        %v1749 = vpop.f32.mrf.mxu0
        %v1750 = vadd.f32 %v1500, %v1749
        %v1751 = vpop.f32.mrf.mxu0
        %v1752 = vpop.f32.mrf.mxu0
        %v1753 = vadd.f32 %v1500, %v1752
        %v1754 = vpop.f32.mrf.mxu0
        %1755 = vmatprep.mubr.bf16.mxu0 0
        %1756 = vmatmul.mubr.bf16.gmra.mxu0 %v1522
        %v1757 = vpop.f32.mrf.mxu0
        %v1758 = vadd.f32 %v1500, %v1757
        %v1759 = vpop.f32.mrf.mxu0
        %v1760 = vpop.f32.mrf.mxu0
        %v1761 = vadd.f32 %v1500, %v1760
        %v1762 = vpop.f32.mrf.mxu0
        %1763 = vmatprep.mubr.bf16.mxu0 0
        %1764 = vmatmul.mubr.bf16.gmra.mxu0 %v1525
        %v1765 = vpop.f32.mrf.mxu0
        %v1766 = vadd.f32 %v1500, %v1765
        %v1767 = vpop.f32.mrf.mxu0
        %v1768 = vpop.f32.mrf.mxu0
        %v1769 = vadd.f32 %v1500, %v1768
        %v1770 = vpop.f32.mrf.mxu0
        %1771 = vmatprep.mubr.bf16.mxu0 0
        %1772 = vmatmul.mubr.bf16.gmra.mxu0 %v1528
        %v1773 = vpop.f32.mrf.mxu0
        %v1774 = vadd.f32 %v1500, %v1773
        %v1775 = vpop.f32.mrf.mxu0
        %v1776 = vpop.f32.mrf.mxu0
        %v1777 = vadd.f32 %v1500, %v1776
        %v1778 = vpop.f32.mrf.mxu0
        %1779 = vmatprep.mubr.bf16.mxu0 0
        %1780 = vmatmul.mubr.bf16.gmra.mxu0 %v1531
        %v1781 = vpop.f32.mrf.mxu0
        %v1782 = vadd.f32 %v1500, %v1781
        %v1783 = vpop.f32.mrf.mxu0
        %v1784 = vpop.f32.mrf.mxu0
        %v1785 = vadd.f32 %v1500, %v1784
        %v1786 = vpop.f32.mrf.mxu0
        %1787 = vmatprep.mubr.bf16.mxu0 0
        %1788 = vmatmul.mubr.bf16.gmra.mxu0 %v1534
        %v1789 = vpop.f32.mrf.mxu0
        %v1790 = vadd.f32 %v1500, %v1789
        %v1791 = vpop.f32.mrf.mxu0
        %v1792 = vpop.f32.mrf.mxu0
        %v1793 = vadd.f32 %v1500, %v1792
        %v1794 = vpop.f32.mrf.mxu0
        %1795 = vmatprep.mubr.bf16.mxu0 0
        %1796 = vmatmul.mubr.bf16.gmra.mxu0 %v1537
        %v1797 = vpop.f32.mrf.mxu0
        %v1798 = vadd.f32 %v1500, %v1797
        %v1799 = vpop.f32.mrf.mxu0
        %v1800 = vpop.f32.mrf.mxu0
        %v1801 = vadd.f32 %v1500, %v1800
        %v1802 = vpop.f32.mrf.mxu0
        %1803 = vmatprep.mubr.bf16.mxu0 0
        %1804 = vmatmul.mubr.bf16.gmra.mxu0 %v1540
        %v1805 = vpop.f32.mrf.mxu0
        %v1806 = vadd.f32 %v1500, %v1805
        %v1807 = vpop.f32.mrf.mxu0
        %v1808 = vpop.f32.mrf.mxu0
        %v1809 = vadd.f32 %v1500, %v1808
        %v1810 = vpop.f32.mrf.mxu0
        %1811 = vmatprep.mubr.bf16.mxu0 0
        %1812 = vmatmul.mubr.bf16.gmra.mxu0 %v1543
        %v1813 = vpop.f32.mrf.mxu0
        %v1814 = vadd.f32 %v1500, %v1813
        %v1815 = vpop.f32.mrf.mxu0
        %v1816 = vpop.f32.mrf.mxu0
        %v1817 = vadd.f32 %v1500, %v1816
        %v1818 = vpop.f32.mrf.mxu0
        %1819 = vmatprep.mubr.bf16.mxu0 0
        %1820 = vmatmul.mubr.bf16.gmra.mxu0 %v1546
        %v1821 = vpop.f32.mrf.mxu0
        %v1822 = vadd.f32 %v1500, %v1821
        %v1823 = vpop.f32.mrf.mxu0
        %v1824 = vpop.f32.mrf.mxu0
        %v1825 = vadd.f32 %v1500, %v1824
        %v1826 = vpop.f32.mrf.mxu0
        %1827 = vmatprep.mubr.bf16.mxu0 0
        %1828 = vmatmul.mubr.bf16.gmra.mxu0 %v1549
        %v1829 = vpop.f32.mrf.mxu0
        %v1830 = vadd.f32 %v1500, %v1829
        %v1831 = vpop.f32.mrf.mxu0
        %v1832 = vpop.f32.mrf.mxu0
        %v1833 = vadd.f32 %v1500, %v1832
        %v1834 = vpop.f32.mrf.mxu0
        %1835 = vmatprep.mubr.bf16.mxu0 0
        %1836 = vmatmul.mubr.bf16.gmra.mxu0 %v1552
        %v1837 = vpop.f32.mrf.mxu0
        %v1838 = vadd.f32 %v1500, %v1837
        %v1839 = vpop.f32.mrf.mxu0
        %v1840 = vpop.f32.mrf.mxu0
        %v1841 = vadd.f32 %v1500, %v1840
        %v1842 = vpop.f32.mrf.mxu0
        %1843 = vmatprep.mubr.bf16.mxu0 0
        %1844 = vmatmul.mubr.bf16.gmra.mxu0 %v1555
        %v1845 = vpop.f32.mrf.mxu0
        %v1846 = vadd.f32 %v1500, %v1845
        %v1847 = vpop.f32.mrf.mxu0
        %v1848 = vpop.f32.mrf.mxu0
        %v1849 = vadd.f32 %v1500, %v1848
        %v1850 = vpop.f32.mrf.mxu0
        %1851 = vmatprep.mubr.bf16.mxu0 0
        %1852 = vmatmul.mubr.bf16.gmra.mxu0 %v1558
        %v1853 = vpop.f32.mrf.mxu0
        %v1854 = vadd.f32 %v1500, %v1853
        %v1855 = vpop.f32.mrf.mxu0
        %v1856 = vpop.f32.mrf.mxu0
        %v1857 = vadd.f32 %v1500, %v1856
        %v1858 = vpop.f32.mrf.mxu0
        %1859 = vmatprep.mubr.bf16.mxu0 0
        %1860 = vmatmul.mubr.bf16.gmra.mxu0 %v1561
        %v1861 = vpop.f32.mrf.mxu0
        %v1862 = vadd.f32 %v1500, %v1861
        %v1863 = vpop.f32.mrf.mxu0
        %v1864 = vpop.f32.mrf.mxu0
        %v1865 = vadd.f32 %v1500, %v1864
        %v1866 = vpop.f32.mrf.mxu0
        %1867 = vmatprep.mubr.bf16.mxu0 0
        %1868 = vmatmul.mubr.bf16.gmra.mxu0 %v1564
        %v1869 = vpop.f32.mrf.mxu0
        %v1870 = vadd.f32 %v1500, %v1869
        %v1871 = vpop.f32.mrf.mxu0
        %v1872 = vpop.f32.mrf.mxu0
        %v1873 = vadd.f32 %v1500, %v1872
        %v1874 = vpop.f32.mrf.mxu0
        %1875 = vmatprep.mubr.bf16.mxu0 0
        %1876 = vmatmul.mubr.bf16.gmra.mxu0 %v1567
        %v1877 = vpop.f32.mrf.mxu0
        %v1878 = vadd.f32 %v1500, %v1877
        %v1879 = vpop.f32.mrf.mxu0
        %v1880 = vpop.f32.mrf.mxu0
        %v1881 = vadd.f32 %v1500, %v1880
        %v1882 = vpop.f32.mrf.mxu0
        %1883 = vmatprep.mubr.bf16.mxu0 0
        %1884 = vmatmul.mubr.bf16.gmra.mxu0 %v1570
        %v1885 = vpop.f32.mrf.mxu0
        %v1886 = vadd.f32 %v1500, %v1885
        %v1887 = vpop.f32.mrf.mxu0
        %v1888 = vpop.f32.mrf.mxu0
        %v1889 = vadd.f32 %v1500, %v1888
        %v1890 = vpop.f32.mrf.mxu0
        %1891 = vmatprep.mubr.bf16.mxu0 0
        %1892 = vmatmul.mubr.bf16.gmra.mxu0 %v1573
        %v1893 = vpop.f32.mrf.mxu0
        %v1894 = vadd.f32 %v1500, %v1893
        %v1895 = vpop.f32.mrf.mxu0
        %v1896 = vpop.f32.mrf.mxu0
        %v1897 = vadd.f32 %v1500, %v1896
        %v1898 = vpop.f32.mrf.mxu0
        %1899 = vmatprep.mubr.bf16.mxu0 0
        %1900 = vmatmul.mubr.bf16.gmra.mxu0 %v1576
        %v1901 = vpop.f32.mrf.mxu0
        %v1902 = vadd.f32 %v1500, %v1901
        %v1903 = vpop.f32.mrf.mxu0
        %v1904 = vpop.f32.mrf.mxu0
        %v1905 = vadd.f32 %v1500, %v1904
        %v1906 = vpop.f32.mrf.mxu0
        %1907 = vmatprep.mubr.bf16.mxu0 0
        %1908 = vmatmul.mubr.bf16.gmra.mxu0 %v1579
        %v1909 = vpop.f32.mrf.mxu0
        %v1910 = vadd.f32 %v1500, %v1909
        %v1911 = vpop.f32.mrf.mxu0
        %v1912 = vpop.f32.mrf.mxu0
        %v1913 = vadd.f32 %v1500, %v1912
        %v1914 = vpop.f32.mrf.mxu0
        %1915 = vmatprep.mubr.bf16.mxu0 0
        %1916 = vmatmul.mubr.bf16.gmra.mxu0 %v1582
        %v1917 = vpop.f32.mrf.mxu0
        %v1918 = vadd.f32 %v1500, %v1917
        %v1919 = vpop.f32.mrf.mxu0
        %v1920 = vpop.f32.mrf.mxu0
        %v1921 = vadd.f32 %v1500, %v1920
        %v1922 = vpop.f32.mrf.mxu0
        %1923 = vmatprep.mubr.bf16.mxu0 0
        %1924 = vmatmul.mubr.bf16.gmra.mxu0 %v1585
        %v1925 = vpop.f32.mrf.mxu0
        %v1926 = vadd.f32 %v1500, %v1925
        %v1927 = vpop.f32.mrf.mxu0
        %v1928 = vpop.f32.mrf.mxu0
        %v1929 = vadd.f32 %v1500, %v1928
        %v1930 = vpop.f32.mrf.mxu0
        %1931 = vmatprep.mubr.bf16.mxu0 0
        %1932 = vmatmul.mubr.bf16.gmra.mxu0 %v1588
        %v1933 = vpop.f32.mrf.mxu0
        %v1934 = vadd.f32 %v1500, %v1933
        %v1935 = vpop.f32.mrf.mxu0
        %v1936 = vpop.f32.mrf.mxu0
        %v1937 = vadd.f32 %v1500, %v1936
        %v1938 = vpop.f32.mrf.mxu0
        %1939 = vmatprep.mubr.bf16.mxu0 0
        %1940 = vmatmul.mubr.bf16.gmra.mxu0 %v1591
        %v1941 = vpop.f32.mrf.mxu0
        %v1942 = vadd.f32 %v1500, %v1941
        %v1943 = vpop.f32.mrf.mxu0
        %v1944 = vpop.f32.mrf.mxu0
        %v1945 = vadd.f32 %v1500, %v1944
        %v1946 = vpop.f32.mrf.mxu0
        %1947 = vmatprep.mubr.bf16.mxu0 0
        %1948 = vmatmul.mubr.bf16.gmra.mxu0 %v1594
        %v1949 = vpop.f32.mrf.mxu0
        %v1950 = vadd.f32 %v1500, %v1949
        %v1951 = vpop.f32.mrf.mxu0
        %v1952 = vpop.f32.mrf.mxu0
        %v1953 = vadd.f32 %v1500, %v1952
        %v1954 = vpop.f32.mrf.mxu0
        %1955 = vmatprep.mubr.bf16.mxu0 0
        %1956 = vmatmul.mubr.bf16.gmra.mxu0 %v1597
        %v1957 = vpop.f32.mrf.mxu0
        %v1958 = vadd.f32 %v1500, %v1957
        %v1959 = vpop.f32.mrf.mxu0
        %v1960 = vpop.f32.mrf.mxu0
        %v1961 = vadd.f32 %v1500, %v1960
        %v1962 = vpop.f32.mrf.mxu0
        %1963 = vmatprep.mubr.bf16.mxu0 0
        %1964 = vmatmul.mubr.bf16.gmra.mxu0 %v1600
        %v1965 = vpop.f32.mrf.mxu0
        %v1966 = vadd.f32 %v1500, %v1965
        %v1967 = vpop.f32.mrf.mxu0
        %v1968 = vpop.f32.mrf.mxu0
        %v1969 = vadd.f32 %v1500, %v1968
        %v1970 = vpop.f32.mrf.mxu0
        %1971 = vmatprep.mubr.bf16.mxu0 0
        %1972 = vmatmul.mubr.bf16.gmra.mxu0 %v1603
        %v1973 = vpop.f32.mrf.mxu0
        %v1974 = vadd.f32 %v1500, %v1973
        %v1975 = vpop.f32.mrf.mxu0
        %v1976 = vpop.f32.mrf.mxu0
        %v1977 = vadd.f32 %v1500, %v1976
        %v1978 = vpop.f32.mrf.mxu0
        %1979 = vmatprep.mubr.bf16.mxu0 0
        %1980 = vmatmul.mubr.bf16.gmra.mxu0 %v1606
        %v1981 = vpop.f32.mrf.mxu0
        %v1982 = vadd.f32 %v1500, %v1981
        %v1983 = vpop.f32.mrf.mxu0
        %v1984 = vpop.f32.mrf.mxu0
        %v1985 = vadd.f32 %v1500, %v1984
        %v1986 = vpop.f32.mrf.mxu0
        %1987 = vmatprep.mubr.bf16.mxu0 0
        %1988 = vmatmul.mubr.bf16.gmra.mxu0 %v1609
        %v1989 = vpop.f32.mrf.mxu0
        %v1990 = vadd.f32 %v1500, %v1989
        %v1991 = vpop.f32.mrf.mxu0
        %v1992 = vpop.f32.mrf.mxu0
        %v1993 = vadd.f32 %v1500, %v1992
        %v1994 = vpop.f32.mrf.mxu0
        %1995 = vmatprep.mubr.bf16.mxu0 0
        %1996 = vmatmul.mubr.bf16.gmra.mxu0 %v1612
        %v1997 = vpop.f32.mrf.mxu0
        %v1998 = vadd.f32 %v1500, %v1997
        %v1999 = vpop.f32.mrf.mxu0
        %v2000 = vpop.f32.mrf.mxu0
        %v2001 = vadd.f32 %v1500, %v2000
        %v2002 = vpop.f32.mrf.mxu0
        %2003 = vmatprep.mubr.bf16.mxu0 0
        %2004 = vmatmul.mubr.bf16.gmra.mxu0 %v1615
        %v2005 = vpop.f32.mrf.mxu0
        %v2006 = vadd.f32 %v1500, %v2005
        %v2007 = vpop.f32.mrf.mxu0
        %v2008 = vpop.f32.mrf.mxu0
        %v2009 = vadd.f32 %v1500, %v2008
        %v2010 = vpop.f32.mrf.mxu0
        %2011 = vmatprep.mubr.bf16.mxu0 0
        %2012 = vmatmul.mubr.bf16.gmra.mxu0 %v1618
        %v2013 = vpop.f32.mrf.mxu0
        %v2014 = vadd.f32 %v1500, %v2013
        %v2015 = vpop.f32.mrf.mxu0
        %v2016 = vpop.f32.mrf.mxu0
        %v2017 = vadd.f32 %v1500, %v2016
        %v2018 = vpop.f32.mrf.mxu0
        %2019 = vmatprep.mubr.bf16.mxu0 0
        %2020 = vmatmul.mubr.bf16.gmra.mxu0 %v1621
        %v2021 = vpop.f32.mrf.mxu0
        %v2022 = vadd.f32 %v1500, %v2021
        %v2023 = vpop.f32.mrf.mxu0
        %v2024 = vpop.f32.mrf.mxu0
        %v2025 = vadd.f32 %v1500, %v2024
        %v2026 = vpop.f32.mrf.mxu0
        %2027 = vmatprep.mubr.bf16.mxu0 0
        %2028 = vmatmul.mubr.bf16.gmra.mxu0 %v1624
        %v2029 = vpop.f32.mrf.mxu0
        %v2030 = vadd.f32 %v1500, %v2029
        %v2031 = vpop.f32.mrf.mxu0
        %v2032 = vpop.f32.mrf.mxu0
        %v2033 = vadd.f32 %v1500, %v2032
        %v2034 = vpop.f32.mrf.mxu0
        %2035 = vmatprep.mubr.bf16.mxu0 0
        %2036 = vmatmul.mubr.bf16.gmra.mxu0 %v1627
        %v2037 = vpop.f32.mrf.mxu0
        %v2038 = vadd.f32 %v1500, %v2037
        %v2039 = vpop.f32.mrf.mxu0
        %v2040 = vpop.f32.mrf.mxu0
        %v2041 = vadd.f32 %v1500, %v2040
        %v2042 = vpop.f32.mrf.mxu0
        %2043 = vmatprep.mubr.bf16.mxu0 0
        %2044 = vmatmul.mubr.bf16.gmra.mxu0 %v1630
        %v2045 = vpop.f32.mrf.mxu0
        %v2046 = vadd.f32 %v1500, %v2045
        %v2047 = vpop.f32.mrf.mxu0
        %v2048 = vpop.f32.mrf.mxu0
        %v2049 = vadd.f32 %v1500, %v2048
        %v2050 = vpop.f32.mrf.mxu0
        %2051 = vmatprep.mubr.bf16.mxu0 0
        %2052 = vmatmul.mubr.bf16.gmra.mxu0 %v1633
        %v2053 = vpop.f32.mrf.mxu0
        %v2054 = vadd.f32 %v1500, %v2053
        %v2055 = vpop.f32.mrf.mxu0
        %v2056 = vpop.f32.mrf.mxu0
        %v2057 = vadd.f32 %v1500, %v2056
        %v2058 = vpop.f32.mrf.mxu0
        %2059 = vmatprep.mubr.bf16.mxu0 0
        %2060 = vmatmul.mubr.bf16.gmra.mxu0 %v1636
        %v2061 = vpop.f32.mrf.mxu0
        %v2062 = vadd.f32 %v1500, %v2061
        %v2063 = vpop.f32.mrf.mxu0
        %v2064 = vpop.f32.mrf.mxu0
        %v2065 = vadd.f32 %v1500, %v2064
        %v2066 = vpop.f32.mrf.mxu0
        %2067 = vmatprep.mubr.bf16.mxu0 0
        %2068 = vmatmul.mubr.bf16.gmra.mxu0 %v1639
        %v2069 = vpop.f32.mrf.mxu0
        %v2070 = vadd.f32 %v1500, %v2069
        %v2071 = vpop.f32.mrf.mxu0
        %v2072 = vpop.f32.mrf.mxu0
        %v2073 = vadd.f32 %v1500, %v2072
        %v2074 = vpop.f32.mrf.mxu0
        %2075 = vmatprep.mubr.bf16.mxu0 0
        %2076 = vmatmul.mubr.bf16.gmra.mxu0 %v1642
        %v2077 = vpop.f32.mrf.mxu0
        %v2078 = vadd.f32 %v1500, %v2077
        %v2079 = vpop.f32.mrf.mxu0
        %v2080 = vpop.f32.mrf.mxu0
        %v2081 = vadd.f32 %v1500, %v2080
        %v2082 = vpop.f32.mrf.mxu0
        %2083 = vmatprep.mubr.bf16.mxu0 0
        %2084 = vmatmul.mubr.bf16.gmra.mxu0 %v1645
        %v2085 = vpop.f32.mrf.mxu0
        %v2086 = vadd.f32 %v1500, %v2085
        %v2087 = vpop.f32.mrf.mxu0
        %v2088 = vpop.f32.mrf.mxu0
        %v2089 = vadd.f32 %v1500, %v2088
        %v2090 = vpop.f32.mrf.mxu0
        %2091 = vmatprep.mubr.bf16.mxu0 0
        %2092 = vmatmul.mubr.bf16.gmra.mxu0 %v1648
        %v2093 = vpop.f32.mrf.mxu0
        %v2094 = vadd.f32 %v1500, %v2093
        %v2095 = vpop.f32.mrf.mxu0
        %v2096 = vpop.f32.mrf.mxu0
        %v2097 = vadd.f32 %v1500, %v2096
        %v2098 = vpop.f32.mrf.mxu0
        %2099 = vmatprep.mubr.bf16.mxu0 0
        %2100 = vmatmul.mubr.bf16.gmra.mxu0 %v1651
        %v2101 = vpop.f32.mrf.mxu0
        %v2102 = vadd.f32 %v1500, %v2101
        %v2103 = vpop.f32.mrf.mxu0
        %v2104 = vpop.f32.mrf.mxu0
        %v2105 = vadd.f32 %v1500, %v2104
        %v2106 = vpop.f32.mrf.mxu0
        %2107 = vmatprep.mubr.bf16.mxu0 0
        %2108 = vmatmul.mubr.bf16.gmra.mxu0 %v1654
        %v2109 = vpop.f32.mrf.mxu0
        %v2110 = vadd.f32 %v1500, %v2109
        %v2111 = vpop.f32.mrf.mxu0
        %v2112 = vpop.f32.mrf.mxu0
        %v2113 = vadd.f32 %v1500, %v2112
        %v2114 = vpop.f32.mrf.mxu0
        %2115 = vmatprep.mubr.bf16.mxu0 0
        %2116 = vmatmul.mubr.bf16.gmra.mxu0 %v1657
        %v2117 = vpop.f32.mrf.mxu0
        %v2118 = vadd.f32 %v1500, %v2117
        %v2119 = vpop.f32.mrf.mxu0
        %v2120 = vpop.f32.mrf.mxu0
        %v2121 = vadd.f32 %v1500, %v2120
        %v2122 = vpop.f32.mrf.mxu0
        %2123 = vmatprep.mubr.bf16.mxu0 0
        %2124 = vmatmul.mubr.bf16.gmra.mxu0 %v1660
        %v2125 = vpop.f32.mrf.mxu0
        %v2126 = vadd.f32 %v1500, %v2125
        %v2127 = vpop.f32.mrf.mxu0
        %v2128 = vpop.f32.mrf.mxu0
        %v2129 = vadd.f32 %v1500, %v2128
        %v2130 = vpop.f32.mrf.mxu0
        %2131 = vmatprep.mubr.bf16.mxu0 0
        %2132 = vmatmul.mubr.bf16.gmra.mxu0 %v1663
        %v2133 = vpop.f32.mrf.mxu0
        %v2134 = vadd.f32 %v1500, %v2133
        %v2135 = vpop.f32.mrf.mxu0
        %v2136 = vpop.f32.mrf.mxu0
        %v2137 = vadd.f32 %v1500, %v2136
        %v2138 = vpop.f32.mrf.mxu0
        %2139 = vmatprep.mubr.bf16.mxu0 0
        %2140 = vmatmul.mubr.bf16.gmra.mxu0 %v1666
        %v2141 = vpop.f32.mrf.mxu0
        %v2142 = vadd.f32 %v1500, %v2141
        %v2143 = vpop.f32.mrf.mxu0
        %v2144 = vpop.f32.mrf.mxu0
        %v2145 = vadd.f32 %v1500, %v2144
        %v2146 = vpop.f32.mrf.mxu0
        %2147 = vmatprep.mubr.bf16.mxu0 0
        %2148 = vmatmul.mubr.bf16.gmra.mxu0 %v1669
        %v2149 = vpop.f32.mrf.mxu0
        %v2150 = vadd.f32 %v1500, %v2149
        %v2151 = vpop.f32.mrf.mxu0
        %v2152 = vpop.f32.mrf.mxu0
        %v2153 = vadd.f32 %v1500, %v2152
        %v2154 = vpop.f32.mrf.mxu0
        %2155 = vmatprep.mubr.bf16.mxu0 0
        %2156 = vmatmul.mubr.bf16.gmra.mxu0 %v1672
        %v2157 = vpop.f32.mrf.mxu0
        %v2158 = vadd.f32 %v1500, %v2157
        %v2159 = vpop.f32.mrf.mxu0
        %v2160 = vpop.f32.mrf.mxu0
        %v2161 = vadd.f32 %v1500, %v2160
        %v2162 = vpop.f32.mrf.mxu0
        %2163 = vmatprep.mubr.bf16.mxu0 0
        %2164 = vmatmul.mubr.bf16.gmra.mxu0 %v1675
        %v2165 = vpop.f32.mrf.mxu0
        %v2166 = vadd.f32 %v1500, %v2165
        %v2167 = vpop.f32.mrf.mxu0
        %v2168 = vpop.f32.mrf.mxu0
        %v2169 = vadd.f32 %v1500, %v2168
        %v2170 = vpop.f32.mrf.mxu0
        %2171 = vmatprep.mubr.bf16.mxu0 0
        %2172 = vmatmul.mubr.bf16.gmra.mxu0 %v1678
        %v2173 = vpop.f32.mrf.mxu0
        %v2174 = vadd.f32 %v1500, %v2173
        %v2175 = vpop.f32.mrf.mxu0
        %v2176 = vpop.f32.mrf.mxu0
        %v2177 = vadd.f32 %v1500, %v2176
        %v2178 = vpop.f32.mrf.mxu0
        %2179 = vmatprep.mubr.bf16.mxu0 0
        %2180 = vmatmul.mubr.bf16.gmra.mxu0 %v1681
        %v2181 = vpop.f32.mrf.mxu0
        %v2182 = vadd.f32 %v1500, %v2181
        %v2183 = vpop.f32.mrf.mxu0
        %v2184 = vpop.f32.mrf.mxu0
        %v2185 = vadd.f32 %v1500, %v2184
        %v2186 = vpop.f32.mrf.mxu0
        %2187 = vmatprep.mubr.bf16.mxu0 0
        %2188 = vmatmul.mubr.bf16.gmra.mxu0 %v1684
        %v2189 = vpop.f32.mrf.mxu0
        %v2190 = vadd.f32 %v1500, %v2189
        %v2191 = vpop.f32.mrf.mxu0
        %v2192 = vpop.f32.mrf.mxu0
        %v2193 = vadd.f32 %v1500, %v2192
        %v2194 = vpop.f32.mrf.mxu0
        %2195 = vmatprep.mubr.bf16.mxu0 0
        %2196 = vmatmul.mubr.bf16.gmra.mxu0 %v1687
        %v2197 = vpop.f32.mrf.mxu0
        %v2198 = vadd.f32 %v1500, %v2197
        %v2199 = vpop.f32.mrf.mxu0
        %v2200 = vpop.f32.mrf.mxu0
        %v2201 = vadd.f32 %v1500, %v2200
        %v2202 = vpop.f32.mrf.mxu0
        %2203 = vmatprep.mubr.bf16.mxu0 0
        %2204 = vmatmul.mubr.bf16.gmra.mxu0 %v1690
        %v2205 = vpop.f32.mrf.mxu0
        %v2206 = vadd.f32 %v1500, %v2205
        %v2207 = vpop.f32.mrf.mxu0
        %v2208 = vpop.f32.mrf.mxu0
        %v2209 = vadd.f32 %v1500, %v2208
        %v2210 = vpop.f32.mrf.mxu0
        %2211 = vmatprep.mubr.bf16.mxu0 0
        %2212 = vmatmul.mubr.bf16.gmra.mxu0 %v1693
        %v2213 = vpop.f32.mrf.mxu0
        %v2214 = vadd.f32 %v1500, %v2213
        %v2215 = vpop.f32.mrf.mxu0
        %v2216 = vpop.f32.mrf.mxu0
        %v2217 = vadd.f32 %v1500, %v2216
        %v2218 = vpop.f32.mrf.mxu0
        %2219 = vmatprep.mubr.bf16.mxu0 0
        %2220 = vmatmul.mubr.bf16.gmra.mxu0 %v1696
        %v2221 = vpop.f32.mrf.mxu0
        %v2222 = vadd.f32 %v1500, %v2221
        %v2223 = vpop.f32.mrf.mxu0
        %v2224 = vpop.f32.mrf.mxu0
        %v2225 = vadd.f32 %v1500, %v2224
        %v2226 = vpop.f32.mrf.mxu0
        %2227 = vmatprep.mubr.bf16.mxu0 0
        %2228 = vmatmul.mubr.bf16.gmra.mxu0 %v1699
        %v2229 = vpop.f32.mrf.mxu0
        %v2230 = vadd.f32 %v1500, %v2229
        %v2231 = vpop.f32.mrf.mxu0
        %v2232 = vpop.f32.mrf.mxu0
        %v2233 = vadd.f32 %v1500, %v2232
        %v2234 = vpop.f32.mrf.mxu0
        %2235 = vmatprep.mubr.bf16.mxu0 0
        %2236 = vmatmul.mubr.bf16.gmra.mxu0 %v1702
        %v2237 = vpop.f32.mrf.mxu0
        %v2238 = vadd.f32 %v1500, %v2237
        %v2239 = vpop.f32.mrf.mxu0
        %v2240 = vpop.f32.mrf.mxu0
        %v2241 = vadd.f32 %v1500, %v2240
        %v2242 = vpop.f32.mrf.mxu0
        %2243 = vmatprep.mubr.bf16.mxu0 0
        %2244 = vmatmul.mubr.bf16.gmra.mxu0 %v1705
        %v2245 = vpop.f32.mrf.mxu0
        %v2246 = vadd.f32 %v1500, %v2245
        %v2247 = vpop.f32.mrf.mxu0
        %v2248 = vpop.f32.mrf.mxu0
        %v2249 = vadd.f32 %v1500, %v2248
        %v2250 = vpop.f32.mrf.mxu0
        %2251 = vdwg.mxu0
        %v2252 = vmax.f32 %v1742, 0.0
        %v2253 = vmax.f32 %v1745, 0.0
        %v2254 = vmax.f32 %v1750, 0.0
        %v2255 = vmax.f32 %v1753, 0.0
        %v2256 = vmax.f32 %v1758, 0.0
        %v2257 = vmax.f32 %v1761, 0.0
        %v2258 = vmax.f32 %v1766, 0.0
        %v2259 = vmax.f32 %v1769, 0.0
        %v2260 = vmax.f32 %v1774, 0.0
        %v2261 = vmax.f32 %v1777, 0.0
        %v2262 = vmax.f32 %v1782, 0.0
        %v2263 = vmax.f32 %v1785, 0.0
        %v2264 = vmax.f32 %v1790, 0.0
        %v2265 = vmax.f32 %v1793, 0.0
        %v2266 = vmax.f32 %v1798, 0.0
        %v2267 = vmax.f32 %v1801, 0.0
        %v2268 = vmax.f32 %v1806, 0.0
        %v2269 = vmax.f32 %v1809, 0.0
        %v2270 = vmax.f32 %v1814, 0.0
        %v2271 = vmax.f32 %v1817, 0.0
        %v2272 = vmax.f32 %v1822, 0.0
        %v2273 = vmax.f32 %v1825, 0.0
        %v2274 = vmax.f32 %v1830, 0.0
        %v2275 = vmax.f32 %v1833, 0.0
        %v2276 = vmax.f32 %v1838, 0.0
        %v2277 = vmax.f32 %v1841, 0.0
        %v2278 = vmax.f32 %v1846, 0.0
        %v2279 = vmax.f32 %v1849, 0.0
        %v2280 = vmax.f32 %v1854, 0.0
        %v2281 = vmax.f32 %v1857, 0.0
        %v2282 = vmax.f32 %v1862, 0.0
        %v2283 = vmax.f32 %v1865, 0.0
        %v2284 = vmax.f32 %v1870, 0.0
        %v2285 = vmax.f32 %v1873, 0.0
        %v2286 = vmax.f32 %v1878, 0.0
        %v2287 = vmax.f32 %v1881, 0.0
        %v2288 = vmax.f32 %v1886, 0.0
        %v2289 = vmax.f32 %v1889, 0.0
        %v2290 = vmax.f32 %v1894, 0.0
        %v2291 = vmax.f32 %v1897, 0.0
        %v2292 = vmax.f32 %v1902, 0.0
        %v2293 = vmax.f32 %v1905, 0.0
        %v2294 = vmax.f32 %v1910, 0.0
        %v2295 = vmax.f32 %v1913, 0.0
        %v2296 = vmax.f32 %v1918, 0.0
        %v2297 = vmax.f32 %v1921, 0.0
        %v2298 = vmax.f32 %v1926, 0.0
        %v2299 = vmax.f32 %v1929, 0.0
        %v2300 = vmax.f32 %v1934, 0.0
        %v2301 = vmax.f32 %v1937, 0.0
        %v2302 = vmax.f32 %v1942, 0.0
        %v2303 = vmax.f32 %v1945, 0.0
        %v2304 = vmax.f32 %v1950, 0.0
        %v2305 = vmax.f32 %v1953, 0.0
        %v2306 = vmax.f32 %v1958, 0.0
        %v2307 = vmax.f32 %v1961, 0.0
        %v2308 = vmax.f32 %v1966, 0.0
        %v2309 = vmax.f32 %v1969, 0.0
        %v2310 = vmax.f32 %v1974, 0.0
        %v2311 = vmax.f32 %v1977, 0.0
        %v2312 = vmax.f32 %v1982, 0.0
        %v2313 = vmax.f32 %v1985, 0.0
        %v2314 = vmax.f32 %v1990, 0.0
        %v2315 = vmax.f32 %v1993, 0.0
        %v2316 = vmax.f32 %v1998, 0.0
        %v2317 = vmax.f32 %v2001, 0.0
        %v2318 = vmax.f32 %v2006, 0.0
        %v2319 = vmax.f32 %v2009, 0.0
        %v2320 = vmax.f32 %v2014, 0.0
        %v2321 = vmax.f32 %v2017, 0.0
        %v2322 = vmax.f32 %v2022, 0.0
        %v2323 = vmax.f32 %v2025, 0.0
        %v2324 = vmax.f32 %v2030, 0.0
        %v2325 = vmax.f32 %v2033, 0.0
        %v2326 = vmax.f32 %v2038, 0.0
        %v2327 = vmax.f32 %v2041, 0.0
        %v2328 = vmax.f32 %v2046, 0.0
        %v2329 = vmax.f32 %v2049, 0.0
        %v2330 = vmax.f32 %v2054, 0.0
        %v2331 = vmax.f32 %v2057, 0.0
        %v2332 = vmax.f32 %v2062, 0.0
        %v2333 = vmax.f32 %v2065, 0.0
        %v2334 = vmax.f32 %v2070, 0.0
        %v2335 = vmax.f32 %v2073, 0.0
        %v2336 = vmax.f32 %v2078, 0.0
        %v2337 = vmax.f32 %v2081, 0.0
        %v2338 = vmax.f32 %v2086, 0.0
        %v2339 = vmax.f32 %v2089, 0.0
        %v2340 = vmax.f32 %v2094, 0.0
        %v2341 = vmax.f32 %v2097, 0.0
        %v2342 = vmax.f32 %v2102, 0.0
        %v2343 = vmax.f32 %v2105, 0.0
        %v2344 = vmax.f32 %v2110, 0.0
        %v2345 = vmax.f32 %v2113, 0.0
        %v2346 = vmax.f32 %v2118, 0.0
        %v2347 = vmax.f32 %v2121, 0.0
        %v2348 = vmax.f32 %v2126, 0.0
        %v2349 = vmax.f32 %v2129, 0.0
        %v2350 = vmax.f32 %v2134, 0.0
        %v2351 = vmax.f32 %v2137, 0.0
        %v2352 = vmax.f32 %v2142, 0.0
        %v2353 = vmax.f32 %v2145, 0.0
        %v2354 = vmax.f32 %v2150, 0.0
        %v2355 = vmax.f32 %v2153, 0.0
        %v2356 = vmax.f32 %v2158, 0.0
        %v2357 = vmax.f32 %v2161, 0.0
        %v2358 = vmax.f32 %v2166, 0.0
        %v2359 = vmax.f32 %v2169, 0.0
        %v2360 = vmax.f32 %v2174, 0.0
        %v2361 = vmax.f32 %v2177, 0.0
        %v2362 = vmax.f32 %v2182, 0.0
        %v2363 = vmax.f32 %v2185, 0.0
        %v2364 = vmax.f32 %v2190, 0.0
        %v2365 = vmax.f32 %v2193, 0.0
        %v2366 = vmax.f32 %v2198, 0.0
        %v2367 = vmax.f32 %v2201, 0.0
        %v2368 = vmax.f32 %v2206, 0.0
        %v2369 = vmax.f32 %v2209, 0.0
        %v2370 = vmax.f32 %v2214, 0.0
        %v2371 = vmax.f32 %v2217, 0.0
        %v2372 = vmax.f32 %v2222, 0.0
        %v2373 = vmax.f32 %v2225, 0.0
        %v2374 = vmax.f32 %v2230, 0.0
        %v2375 = vmax.f32 %v2233, 0.0
        %v2376 = vmax.f32 %v2238, 0.0
        %v2377 = vmax.f32 %v2241, 0.0
        %v2378 = vmax.f32 %v2246, 0.0
        %v2379 = vmax.f32 %v2249, 0.0
        %v2380 = vpack.c.bf16 %v2253, %v2252
        %v2381 = vpack.c.bf16 %v2255, %v2254
        %v2382 = vpack.c.bf16 %v2257, %v2256
        %v2383 = vpack.c.bf16 %v2259, %v2258
        %v2384 = vpack.c.bf16 %v2261, %v2260
        %v2385 = vpack.c.bf16 %v2263, %v2262
        %v2386 = vpack.c.bf16 %v2265, %v2264
        %v2387 = vpack.c.bf16 %v2267, %v2266
        %v2388 = vpack.c.bf16 %v2269, %v2268
        %v2389 = vpack.c.bf16 %v2271, %v2270
        %v2390 = vpack.c.bf16 %v2273, %v2272
        %v2391 = vpack.c.bf16 %v2275, %v2274
        %v2392 = vpack.c.bf16 %v2277, %v2276
        %v2393 = vpack.c.bf16 %v2279, %v2278
        %v2394 = vpack.c.bf16 %v2281, %v2280
        %v2395 = vpack.c.bf16 %v2283, %v2282
        %v2396 = vpack.c.bf16 %v2285, %v2284
        %v2397 = vpack.c.bf16 %v2287, %v2286
        %v2398 = vpack.c.bf16 %v2289, %v2288
        %v2399 = vpack.c.bf16 %v2291, %v2290
        %v2400 = vpack.c.bf16 %v2293, %v2292
        %v2401 = vpack.c.bf16 %v2295, %v2294
        %v2402 = vpack.c.bf16 %v2297, %v2296
        %v2403 = vpack.c.bf16 %v2299, %v2298
        %v2404 = vpack.c.bf16 %v2301, %v2300
        %v2405 = vpack.c.bf16 %v2303, %v2302
        %v2406 = vpack.c.bf16 %v2305, %v2304
        %v2407 = vpack.c.bf16 %v2307, %v2306
        %v2408 = vpack.c.bf16 %v2309, %v2308
        %v2409 = vpack.c.bf16 %v2311, %v2310
        %v2410 = vpack.c.bf16 %v2313, %v2312
        %v2411 = vpack.c.bf16 %v2315, %v2314
        %v2412 = vpack.c.bf16 %v2317, %v2316
        %v2413 = vpack.c.bf16 %v2319, %v2318
        %v2414 = vpack.c.bf16 %v2321, %v2320
        %v2415 = vpack.c.bf16 %v2323, %v2322
        %v2416 = vpack.c.bf16 %v2325, %v2324
        %v2417 = vpack.c.bf16 %v2327, %v2326
        %v2418 = vpack.c.bf16 %v2329, %v2328
        %v2419 = vpack.c.bf16 %v2331, %v2330
        %v2420 = vpack.c.bf16 %v2333, %v2332
        %v2421 = vpack.c.bf16 %v2335, %v2334
        %v2422 = vpack.c.bf16 %v2337, %v2336
        %v2423 = vpack.c.bf16 %v2339, %v2338
        %v2424 = vpack.c.bf16 %v2341, %v2340
        %v2425 = vpack.c.bf16 %v2343, %v2342
        %v2426 = vpack.c.bf16 %v2345, %v2344
        %v2427 = vpack.c.bf16 %v2347, %v2346
        %v2428 = vpack.c.bf16 %v2349, %v2348
        %v2429 = vpack.c.bf16 %v2351, %v2350
        %v2430 = vpack.c.bf16 %v2353, %v2352
        %v2431 = vpack.c.bf16 %v2355, %v2354
        %v2432 = vpack.c.bf16 %v2357, %v2356
        %v2433 = vpack.c.bf16 %v2359, %v2358
        %v2434 = vpack.c.bf16 %v2361, %v2360
        %v2435 = vpack.c.bf16 %v2363, %v2362
        %v2436 = vpack.c.bf16 %v2365, %v2364
        %v2437 = vpack.c.bf16 %v2367, %v2366
        %v2438 = vpack.c.bf16 %v2369, %v2368
        %v2439 = vpack.c.bf16 %v2371, %v2370
        %v2440 = vpack.c.bf16 %v2373, %v2372
        %v2441 = vpack.c.bf16 %v2375, %v2374
        %v2442 = vpack.c.bf16 %v2377, %v2376
        %v2443 = vpack.c.bf16 %v2379, %v2378
        %v2444 = vld [vmem:[%s5] sm:$0xf]
        %v2445 = vld [vmem:[%s5 + $0x4] sm:$0xf]
        %v2446 = vld [vmem:[%s6] sm:$0x1]
        %v2448 = vlaneseq
        %v2449 = vshrl.u32 %v2448, 7
        %v2450 = vsub.s32 0, %v2449
        %v2451 = vrot.slane %v2446, %v2450
        %v2455 = vunpack.c.l.b16 %v2444
        %v2456 = vunpack.c.l.b16 %v2445
        %v2457 = vpack.c.b16 %v2456, %v2455
        %vm2459 = vcmask 130048
        %v2461 = vsel %vm2459, %v2380, 0
        %v2464 = vsel %vm2459, %v2381, 0
        %v2467 = vsel %vm2459, %v2382, 0
        %v2470 = vsel %vm2459, %v2383, 0
        %v2473 = vsel %vm2459, %v2384, 0
        %v2476 = vsel %vm2459, %v2385, 0
        %v2479 = vsel %vm2459, %v2386, 0
        %v2482 = vsel %vm2459, %v2387, 0
        %v2485 = vsel %vm2459, %v2388, 0
        %v2488 = vsel %vm2459, %v2389, 0
        %v2491 = vsel %vm2459, %v2390, 0
        %v2494 = vsel %vm2459, %v2391, 0
        %v2497 = vsel %vm2459, %v2392, 0
        %v2500 = vsel %vm2459, %v2393, 0
        %v2503 = vsel %vm2459, %v2394, 0
        %v2506 = vsel %vm2459, %v2395, 0
        %v2509 = vsel %vm2459, %v2396, 0
        %v2512 = vsel %vm2459, %v2397, 0
        %v2515 = vsel %vm2459, %v2398, 0
        %v2518 = vsel %vm2459, %v2399, 0
        %v2521 = vsel %vm2459, %v2400, 0
        %v2524 = vsel %vm2459, %v2401, 0
        %v2527 = vsel %vm2459, %v2402, 0
        %v2530 = vsel %vm2459, %v2403, 0
        %v2533 = vsel %vm2459, %v2404, 0
        %v2536 = vsel %vm2459, %v2405, 0
        %v2539 = vsel %vm2459, %v2406, 0
        %v2542 = vsel %vm2459, %v2407, 0
        %v2545 = vsel %vm2459, %v2408, 0
        %v2548 = vsel %vm2459, %v2409, 0
        %v2551 = vsel %vm2459, %v2410, 0
        %v2554 = vsel %vm2459, %v2411, 0
        %v2557 = vsel %vm2459, %v2412, 0
        %v2560 = vsel %vm2459, %v2413, 0
        %v2563 = vsel %vm2459, %v2414, 0
        %v2566 = vsel %vm2459, %v2415, 0
        %v2569 = vsel %vm2459, %v2416, 0
        %v2572 = vsel %vm2459, %v2417, 0
        %v2575 = vsel %vm2459, %v2418, 0
        %v2578 = vsel %vm2459, %v2419, 0
        %v2581 = vsel %vm2459, %v2420, 0
        %v2584 = vsel %vm2459, %v2421, 0
        %v2587 = vsel %vm2459, %v2422, 0
        %v2590 = vsel %vm2459, %v2423, 0
        %v2593 = vsel %vm2459, %v2424, 0
        %v2596 = vsel %vm2459, %v2425, 0
        %v2599 = vsel %vm2459, %v2426, 0
        %v2602 = vsel %vm2459, %v2427, 0
        %v2605 = vsel %vm2459, %v2428, 0
        %v2608 = vsel %vm2459, %v2429, 0
        %v2611 = vsel %vm2459, %v2430, 0
        %v2614 = vsel %vm2459, %v2431, 0
        %v2617 = vsel %vm2459, %v2432, 0
        %v2620 = vsel %vm2459, %v2433, 0
        %v2623 = vsel %vm2459, %v2434, 0
        %v2626 = vsel %vm2459, %v2435, 0
        %v2629 = vsel %vm2459, %v2436, 0
        %v2632 = vsel %vm2459, %v2437, 0
        %v2635 = vsel %vm2459, %v2438, 0
        %v2638 = vsel %vm2459, %v2439, 0
        %v2641 = vsel %vm2459, %v2440, 0
        %v2644 = vsel %vm2459, %v2441, 0
        %v2647 = vsel %vm2459, %v2442, 0
        %v2650 = vsel %vm2459, %v2443, 0
        %2652 = vmatprep.subr.bf16.mxu0 0
        %2653 = vmatpush1.bf16.msra.mxu0 0
        %2654 = vmatprep.subr.bf16.mxu0 0
        %2655 = vmatpush1.bf16.msra.mxu0 0
        %2656 = vmatprep.subr.bf16.mxu0 0
        %2657 = vmatpush1.bf16.msra.mxu0 0
        %2658 = vmatprep.subr.bf16.mxu0 0
        %2659 = vmatpush1.bf16.msra.mxu0 0
        %2660 = vmatprep.subr.bf16.mxu0 0
        %2661 = vmatpush1.bf16.msra.mxu0 0
        %2662 = vmatprep.subr.bf16.mxu0 0
        %2663 = vmatpush1.bf16.msra.mxu0 0
        %2664 = vmatprep.subr.bf16.mxu0 0
        %2665 = vmatpush1.bf16.msra.mxu0 0
        %2666 = vmatprep.subr.bf16.mxu0 0
        %2667 = vmatpush1.bf16.msra.mxu0 %v2457
        %2668 = vmatprep.subr.bf16.mxu0 0
        %2669 = vmatpush2.bf16.msra.mxu0 0
        %2670 = vmatprep.subr.bf16.mxu0 0
        %2671 = vmatpush2.bf16.msra.mxu0 0
        %2672 = vmatprep.subr.bf16.mxu0 0
        %2673 = vmatpush2.bf16.msra.mxu0 0
        %2674 = vmatprep.subr.bf16.mxu0 0
        %2675 = vmatpush2.bf16.msra.mxu0 0
        %2676 = vmatprep.subr.bf16.mxu0 0
        %2677 = vmatpush2.bf16.msra.mxu0 0
        %2678 = vmatprep.subr.bf16.mxu0 0
        %2679 = vmatpush2.bf16.msra.mxu0 0
        %2680 = vmatprep.subr.bf16.mxu0 0
        %2681 = vmatpush2.bf16.msra.mxu0 0
        %2682 = vmatprep.subr.bf16.mxu0 0
        %2683 = vmatpush2.bf16.msra.mxu0 0
        %2684 = vmatprep.mubr.bf16.mxu0 0
        %2685 = vmatmul.mubr.bf16.gmra.mxu0 %v2461
        %v2686 = vpop.f32.mrf.mxu0
        %v2687 = vadd.f32 %v2451, %v2686
        %v2688 = vpop.f32.mrf.mxu0
        %v2689 = vpop.f32.mrf.mxu0
        %v2690 = vadd.f32 %v2451, %v2689
        %v2691 = vpop.f32.mrf.mxu0
        %2692 = vmatprep.mubr.bf16.mxu0 0
        %2693 = vmatmul.mubr.bf16.gmra.mxu0 %v2464
        %v2694 = vpop.f32.mrf.mxu0
        %v2695 = vadd.f32 %v2451, %v2694
        %v2696 = vpop.f32.mrf.mxu0
        %v2697 = vpop.f32.mrf.mxu0
        %v2698 = vadd.f32 %v2451, %v2697
        %v2699 = vpop.f32.mrf.mxu0
        %2700 = vmatprep.mubr.bf16.mxu0 0
        %2701 = vmatmul.mubr.bf16.gmra.mxu0 %v2467
        %v2702 = vpop.f32.mrf.mxu0
        %v2703 = vadd.f32 %v2451, %v2702
        %v2704 = vpop.f32.mrf.mxu0
        %v2705 = vpop.f32.mrf.mxu0
        %v2706 = vadd.f32 %v2451, %v2705
        %v2707 = vpop.f32.mrf.mxu0
        %2708 = vmatprep.mubr.bf16.mxu0 0
        %2709 = vmatmul.mubr.bf16.gmra.mxu0 %v2470
        %v2710 = vpop.f32.mrf.mxu0
        %v2711 = vadd.f32 %v2451, %v2710
        %v2712 = vpop.f32.mrf.mxu0
        %v2713 = vpop.f32.mrf.mxu0
        %v2714 = vadd.f32 %v2451, %v2713
        %v2715 = vpop.f32.mrf.mxu0
        %2716 = vmatprep.mubr.bf16.mxu0 0
        %2717 = vmatmul.mubr.bf16.gmra.mxu0 %v2473
        %v2718 = vpop.f32.mrf.mxu0
        %v2719 = vadd.f32 %v2451, %v2718
        %v2720 = vpop.f32.mrf.mxu0
        %v2721 = vpop.f32.mrf.mxu0
        %v2722 = vadd.f32 %v2451, %v2721
        %v2723 = vpop.f32.mrf.mxu0
        %2724 = vmatprep.mubr.bf16.mxu0 0
        %2725 = vmatmul.mubr.bf16.gmra.mxu0 %v2476
        %v2726 = vpop.f32.mrf.mxu0
        %v2727 = vadd.f32 %v2451, %v2726
        %v2728 = vpop.f32.mrf.mxu0
        %v2729 = vpop.f32.mrf.mxu0
        %v2730 = vadd.f32 %v2451, %v2729
        %v2731 = vpop.f32.mrf.mxu0
        %2732 = vmatprep.mubr.bf16.mxu0 0
        %2733 = vmatmul.mubr.bf16.gmra.mxu0 %v2479
        %v2734 = vpop.f32.mrf.mxu0
        %v2735 = vadd.f32 %v2451, %v2734
        %v2736 = vpop.f32.mrf.mxu0
        %v2737 = vpop.f32.mrf.mxu0
        %v2738 = vadd.f32 %v2451, %v2737
        %v2739 = vpop.f32.mrf.mxu0
        %2740 = vmatprep.mubr.bf16.mxu0 0
        %2741 = vmatmul.mubr.bf16.gmra.mxu0 %v2482
        %v2742 = vpop.f32.mrf.mxu0
        %v2743 = vadd.f32 %v2451, %v2742
        %v2744 = vpop.f32.mrf.mxu0
        %v2745 = vpop.f32.mrf.mxu0
        %v2746 = vadd.f32 %v2451, %v2745
        %v2747 = vpop.f32.mrf.mxu0
        %2748 = vmatprep.mubr.bf16.mxu0 0
        %2749 = vmatmul.mubr.bf16.gmra.mxu0 %v2485
        %v2750 = vpop.f32.mrf.mxu0
        %v2751 = vadd.f32 %v2451, %v2750
        %v2752 = vpop.f32.mrf.mxu0
        %v2753 = vpop.f32.mrf.mxu0
        %v2754 = vadd.f32 %v2451, %v2753
        %v2755 = vpop.f32.mrf.mxu0
        %2756 = vmatprep.mubr.bf16.mxu0 0
        %2757 = vmatmul.mubr.bf16.gmra.mxu0 %v2488
        %v2758 = vpop.f32.mrf.mxu0
        %v2759 = vadd.f32 %v2451, %v2758
        %v2760 = vpop.f32.mrf.mxu0
        %v2761 = vpop.f32.mrf.mxu0
        %v2762 = vadd.f32 %v2451, %v2761
        %v2763 = vpop.f32.mrf.mxu0
        %2764 = vmatprep.mubr.bf16.mxu0 0
        %2765 = vmatmul.mubr.bf16.gmra.mxu0 %v2491
        %v2766 = vpop.f32.mrf.mxu0
        %v2767 = vadd.f32 %v2451, %v2766
        %v2768 = vpop.f32.mrf.mxu0
        %v2769 = vpop.f32.mrf.mxu0
        %v2770 = vadd.f32 %v2451, %v2769
        %v2771 = vpop.f32.mrf.mxu0
        %2772 = vmatprep.mubr.bf16.mxu0 0
        %2773 = vmatmul.mubr.bf16.gmra.mxu0 %v2494
        %v2774 = vpop.f32.mrf.mxu0
        %v2775 = vadd.f32 %v2451, %v2774
        %v2776 = vpop.f32.mrf.mxu0
        %v2777 = vpop.f32.mrf.mxu0
        %v2778 = vadd.f32 %v2451, %v2777
        %v2779 = vpop.f32.mrf.mxu0
        %2780 = vmatprep.mubr.bf16.mxu0 0
        %2781 = vmatmul.mubr.bf16.gmra.mxu0 %v2497
        %v2782 = vpop.f32.mrf.mxu0
        %v2783 = vadd.f32 %v2451, %v2782
        %v2784 = vpop.f32.mrf.mxu0
        %v2785 = vpop.f32.mrf.mxu0
        %v2786 = vadd.f32 %v2451, %v2785
        %v2787 = vpop.f32.mrf.mxu0
        %2788 = vmatprep.mubr.bf16.mxu0 0
        %2789 = vmatmul.mubr.bf16.gmra.mxu0 %v2500
        %v2790 = vpop.f32.mrf.mxu0
        %v2791 = vadd.f32 %v2451, %v2790
        %v2792 = vpop.f32.mrf.mxu0
        %v2793 = vpop.f32.mrf.mxu0
        %v2794 = vadd.f32 %v2451, %v2793
        %v2795 = vpop.f32.mrf.mxu0
        %2796 = vmatprep.mubr.bf16.mxu0 0
        %2797 = vmatmul.mubr.bf16.gmra.mxu0 %v2503
        %v2798 = vpop.f32.mrf.mxu0
        %v2799 = vadd.f32 %v2451, %v2798
        %v2800 = vpop.f32.mrf.mxu0
        %v2801 = vpop.f32.mrf.mxu0
        %v2802 = vadd.f32 %v2451, %v2801
        %v2803 = vpop.f32.mrf.mxu0
        %2804 = vmatprep.mubr.bf16.mxu0 0
        %2805 = vmatmul.mubr.bf16.gmra.mxu0 %v2506
        %v2806 = vpop.f32.mrf.mxu0
        %v2807 = vadd.f32 %v2451, %v2806
        %v2808 = vpop.f32.mrf.mxu0
        %v2809 = vpop.f32.mrf.mxu0
        %v2810 = vadd.f32 %v2451, %v2809
        %v2811 = vpop.f32.mrf.mxu0
        %2812 = vmatprep.mubr.bf16.mxu0 0
        %2813 = vmatmul.mubr.bf16.gmra.mxu0 %v2509
        %v2814 = vpop.f32.mrf.mxu0
        %v2815 = vadd.f32 %v2451, %v2814
        %v2816 = vpop.f32.mrf.mxu0
        %v2817 = vpop.f32.mrf.mxu0
        %v2818 = vadd.f32 %v2451, %v2817
        %v2819 = vpop.f32.mrf.mxu0
        %2820 = vmatprep.mubr.bf16.mxu0 0
        %2821 = vmatmul.mubr.bf16.gmra.mxu0 %v2512
        %v2822 = vpop.f32.mrf.mxu0
        %v2823 = vadd.f32 %v2451, %v2822
        %v2824 = vpop.f32.mrf.mxu0
        %v2825 = vpop.f32.mrf.mxu0
        %v2826 = vadd.f32 %v2451, %v2825
        %v2827 = vpop.f32.mrf.mxu0
        %2828 = vmatprep.mubr.bf16.mxu0 0
        %2829 = vmatmul.mubr.bf16.gmra.mxu0 %v2515
        %v2830 = vpop.f32.mrf.mxu0
        %v2831 = vadd.f32 %v2451, %v2830
        %v2832 = vpop.f32.mrf.mxu0
        %v2833 = vpop.f32.mrf.mxu0
        %v2834 = vadd.f32 %v2451, %v2833
        %v2835 = vpop.f32.mrf.mxu0
        %2836 = vmatprep.mubr.bf16.mxu0 0
        %2837 = vmatmul.mubr.bf16.gmra.mxu0 %v2518
        %v2838 = vpop.f32.mrf.mxu0
        %v2839 = vadd.f32 %v2451, %v2838
        %v2840 = vpop.f32.mrf.mxu0
        %v2841 = vpop.f32.mrf.mxu0
        %v2842 = vadd.f32 %v2451, %v2841
        %v2843 = vpop.f32.mrf.mxu0
        %2844 = vmatprep.mubr.bf16.mxu0 0
        %2845 = vmatmul.mubr.bf16.gmra.mxu0 %v2521
        %v2846 = vpop.f32.mrf.mxu0
        %v2847 = vadd.f32 %v2451, %v2846
        %v2848 = vpop.f32.mrf.mxu0
        %v2849 = vpop.f32.mrf.mxu0
        %v2850 = vadd.f32 %v2451, %v2849
        %v2851 = vpop.f32.mrf.mxu0
        %2852 = vmatprep.mubr.bf16.mxu0 0
        %2853 = vmatmul.mubr.bf16.gmra.mxu0 %v2524
        %v2854 = vpop.f32.mrf.mxu0
        %v2855 = vadd.f32 %v2451, %v2854
        %v2856 = vpop.f32.mrf.mxu0
        %v2857 = vpop.f32.mrf.mxu0
        %v2858 = vadd.f32 %v2451, %v2857
        %v2859 = vpop.f32.mrf.mxu0
        %2860 = vmatprep.mubr.bf16.mxu0 0
        %2861 = vmatmul.mubr.bf16.gmra.mxu0 %v2527
        %v2862 = vpop.f32.mrf.mxu0
        %v2863 = vadd.f32 %v2451, %v2862
        %v2864 = vpop.f32.mrf.mxu0
        %v2865 = vpop.f32.mrf.mxu0
        %v2866 = vadd.f32 %v2451, %v2865
        %v2867 = vpop.f32.mrf.mxu0
        %2868 = vmatprep.mubr.bf16.mxu0 0
        %2869 = vmatmul.mubr.bf16.gmra.mxu0 %v2530
        %v2870 = vpop.f32.mrf.mxu0
        %v2871 = vadd.f32 %v2451, %v2870
        %v2872 = vpop.f32.mrf.mxu0
        %v2873 = vpop.f32.mrf.mxu0
        %v2874 = vadd.f32 %v2451, %v2873
        %v2875 = vpop.f32.mrf.mxu0
        %2876 = vmatprep.mubr.bf16.mxu0 0
        %2877 = vmatmul.mubr.bf16.gmra.mxu0 %v2533
        %v2878 = vpop.f32.mrf.mxu0
        %v2879 = vadd.f32 %v2451, %v2878
        %v2880 = vpop.f32.mrf.mxu0
        %v2881 = vpop.f32.mrf.mxu0
        %v2882 = vadd.f32 %v2451, %v2881
        %v2883 = vpop.f32.mrf.mxu0
        %2884 = vmatprep.mubr.bf16.mxu0 0
        %2885 = vmatmul.mubr.bf16.gmra.mxu0 %v2536
        %v2886 = vpop.f32.mrf.mxu0
        %v2887 = vadd.f32 %v2451, %v2886
        %v2888 = vpop.f32.mrf.mxu0
        %v2889 = vpop.f32.mrf.mxu0
        %v2890 = vadd.f32 %v2451, %v2889
        %v2891 = vpop.f32.mrf.mxu0
        %2892 = vmatprep.mubr.bf16.mxu0 0
        %2893 = vmatmul.mubr.bf16.gmra.mxu0 %v2539
        %v2894 = vpop.f32.mrf.mxu0
        %v2895 = vadd.f32 %v2451, %v2894
        %v2896 = vpop.f32.mrf.mxu0
        %v2897 = vpop.f32.mrf.mxu0
        %v2898 = vadd.f32 %v2451, %v2897
        %v2899 = vpop.f32.mrf.mxu0
        %2900 = vmatprep.mubr.bf16.mxu0 0
        %2901 = vmatmul.mubr.bf16.gmra.mxu0 %v2542
        %v2902 = vpop.f32.mrf.mxu0
        %v2903 = vadd.f32 %v2451, %v2902
        %v2904 = vpop.f32.mrf.mxu0
        %v2905 = vpop.f32.mrf.mxu0
        %v2906 = vadd.f32 %v2451, %v2905
        %v2907 = vpop.f32.mrf.mxu0
        %2908 = vmatprep.mubr.bf16.mxu0 0
        %2909 = vmatmul.mubr.bf16.gmra.mxu0 %v2545
        %v2910 = vpop.f32.mrf.mxu0
        %v2911 = vadd.f32 %v2451, %v2910
        %v2912 = vpop.f32.mrf.mxu0
        %v2913 = vpop.f32.mrf.mxu0
        %v2914 = vadd.f32 %v2451, %v2913
        %v2915 = vpop.f32.mrf.mxu0
        %2916 = vmatprep.mubr.bf16.mxu0 0
        %2917 = vmatmul.mubr.bf16.gmra.mxu0 %v2548
        %v2918 = vpop.f32.mrf.mxu0
        %v2919 = vadd.f32 %v2451, %v2918
        %v2920 = vpop.f32.mrf.mxu0
        %v2921 = vpop.f32.mrf.mxu0
        %v2922 = vadd.f32 %v2451, %v2921
        %v2923 = vpop.f32.mrf.mxu0
        %2924 = vmatprep.mubr.bf16.mxu0 0
        %2925 = vmatmul.mubr.bf16.gmra.mxu0 %v2551
        %v2926 = vpop.f32.mrf.mxu0
        %v2927 = vadd.f32 %v2451, %v2926
        %v2928 = vpop.f32.mrf.mxu0
        %v2929 = vpop.f32.mrf.mxu0
        %v2930 = vadd.f32 %v2451, %v2929
        %v2931 = vpop.f32.mrf.mxu0
        %2932 = vmatprep.mubr.bf16.mxu0 0
        %2933 = vmatmul.mubr.bf16.gmra.mxu0 %v2554
        %v2934 = vpop.f32.mrf.mxu0
        %v2935 = vadd.f32 %v2451, %v2934
        %v2936 = vpop.f32.mrf.mxu0
        %v2937 = vpop.f32.mrf.mxu0
        %v2938 = vadd.f32 %v2451, %v2937
        %v2939 = vpop.f32.mrf.mxu0
        %2940 = vmatprep.mubr.bf16.mxu0 0
        %2941 = vmatmul.mubr.bf16.gmra.mxu0 %v2557
        %v2942 = vpop.f32.mrf.mxu0
        %v2943 = vadd.f32 %v2451, %v2942
        %v2944 = vpop.f32.mrf.mxu0
        %v2945 = vpop.f32.mrf.mxu0
        %v2946 = vadd.f32 %v2451, %v2945
        %v2947 = vpop.f32.mrf.mxu0
        %2948 = vmatprep.mubr.bf16.mxu0 0
        %2949 = vmatmul.mubr.bf16.gmra.mxu0 %v2560
        %v2950 = vpop.f32.mrf.mxu0
        %v2951 = vadd.f32 %v2451, %v2950
        %v2952 = vpop.f32.mrf.mxu0
        %v2953 = vpop.f32.mrf.mxu0
        %v2954 = vadd.f32 %v2451, %v2953
        %v2955 = vpop.f32.mrf.mxu0
        %2956 = vmatprep.mubr.bf16.mxu0 0
        %2957 = vmatmul.mubr.bf16.gmra.mxu0 %v2563
        %v2958 = vpop.f32.mrf.mxu0
        %v2959 = vadd.f32 %v2451, %v2958
        %v2960 = vpop.f32.mrf.mxu0
        %v2961 = vpop.f32.mrf.mxu0
        %v2962 = vadd.f32 %v2451, %v2961
        %v2963 = vpop.f32.mrf.mxu0
        %2964 = vmatprep.mubr.bf16.mxu0 0
        %2965 = vmatmul.mubr.bf16.gmra.mxu0 %v2566
        %v2966 = vpop.f32.mrf.mxu0
        %v2967 = vadd.f32 %v2451, %v2966
        %v2968 = vpop.f32.mrf.mxu0
        %v2969 = vpop.f32.mrf.mxu0
        %v2970 = vadd.f32 %v2451, %v2969
        %v2971 = vpop.f32.mrf.mxu0
        %2972 = vmatprep.mubr.bf16.mxu0 0
        %2973 = vmatmul.mubr.bf16.gmra.mxu0 %v2569
        %v2974 = vpop.f32.mrf.mxu0
        %v2975 = vadd.f32 %v2451, %v2974
        %v2976 = vpop.f32.mrf.mxu0
        %v2977 = vpop.f32.mrf.mxu0
        %v2978 = vadd.f32 %v2451, %v2977
        %v2979 = vpop.f32.mrf.mxu0
        %2980 = vmatprep.mubr.bf16.mxu0 0
        %2981 = vmatmul.mubr.bf16.gmra.mxu0 %v2572
        %v2982 = vpop.f32.mrf.mxu0
        %v2983 = vadd.f32 %v2451, %v2982
        %v2984 = vpop.f32.mrf.mxu0
        %v2985 = vpop.f32.mrf.mxu0
        %v2986 = vadd.f32 %v2451, %v2985
        %v2987 = vpop.f32.mrf.mxu0
        %2988 = vmatprep.mubr.bf16.mxu0 0
        %2989 = vmatmul.mubr.bf16.gmra.mxu0 %v2575
        %v2990 = vpop.f32.mrf.mxu0
        %v2991 = vadd.f32 %v2451, %v2990
        %v2992 = vpop.f32.mrf.mxu0
        %v2993 = vpop.f32.mrf.mxu0
        %v2994 = vadd.f32 %v2451, %v2993
        %v2995 = vpop.f32.mrf.mxu0
        %2996 = vmatprep.mubr.bf16.mxu0 0
        %2997 = vmatmul.mubr.bf16.gmra.mxu0 %v2578
        %v2998 = vpop.f32.mrf.mxu0
        %v2999 = vadd.f32 %v2451, %v2998
        %v3000 = vpop.f32.mrf.mxu0
        %v3001 = vpop.f32.mrf.mxu0
        %v3002 = vadd.f32 %v2451, %v3001
        %v3003 = vpop.f32.mrf.mxu0
        %3004 = vmatprep.mubr.bf16.mxu0 0
        %3005 = vmatmul.mubr.bf16.gmra.mxu0 %v2581
        %v3006 = vpop.f32.mrf.mxu0
        %v3007 = vadd.f32 %v2451, %v3006
        %v3008 = vpop.f32.mrf.mxu0
        %v3009 = vpop.f32.mrf.mxu0
        %v3010 = vadd.f32 %v2451, %v3009
        %v3011 = vpop.f32.mrf.mxu0
        %3012 = vmatprep.mubr.bf16.mxu0 0
        %3013 = vmatmul.mubr.bf16.gmra.mxu0 %v2584
        %v3014 = vpop.f32.mrf.mxu0
        %v3015 = vadd.f32 %v2451, %v3014
        %v3016 = vpop.f32.mrf.mxu0
        %v3017 = vpop.f32.mrf.mxu0
        %v3018 = vadd.f32 %v2451, %v3017
        %v3019 = vpop.f32.mrf.mxu0
        %3020 = vmatprep.mubr.bf16.mxu0 0
        %3021 = vmatmul.mubr.bf16.gmra.mxu0 %v2587
        %v3022 = vpop.f32.mrf.mxu0
        %v3023 = vadd.f32 %v2451, %v3022
        %v3024 = vpop.f32.mrf.mxu0
        %v3025 = vpop.f32.mrf.mxu0
        %v3026 = vadd.f32 %v2451, %v3025
        %v3027 = vpop.f32.mrf.mxu0
        %3028 = vmatprep.mubr.bf16.mxu0 0
        %3029 = vmatmul.mubr.bf16.gmra.mxu0 %v2590
        %v3030 = vpop.f32.mrf.mxu0
        %v3031 = vadd.f32 %v2451, %v3030
        %v3032 = vpop.f32.mrf.mxu0
        %v3033 = vpop.f32.mrf.mxu0
        %v3034 = vadd.f32 %v2451, %v3033
        %v3035 = vpop.f32.mrf.mxu0
        %3036 = vmatprep.mubr.bf16.mxu0 0
        %3037 = vmatmul.mubr.bf16.gmra.mxu0 %v2593
        %v3038 = vpop.f32.mrf.mxu0
        %v3039 = vadd.f32 %v2451, %v3038
        %v3040 = vpop.f32.mrf.mxu0
        %v3041 = vpop.f32.mrf.mxu0
        %v3042 = vadd.f32 %v2451, %v3041
        %v3043 = vpop.f32.mrf.mxu0
        %3044 = vmatprep.mubr.bf16.mxu0 0
        %3045 = vmatmul.mubr.bf16.gmra.mxu0 %v2596
        %v3046 = vpop.f32.mrf.mxu0
        %v3047 = vadd.f32 %v2451, %v3046
        %v3048 = vpop.f32.mrf.mxu0
        %v3049 = vpop.f32.mrf.mxu0
        %v3050 = vadd.f32 %v2451, %v3049
        %v3051 = vpop.f32.mrf.mxu0
        %3052 = vmatprep.mubr.bf16.mxu0 0
        %3053 = vmatmul.mubr.bf16.gmra.mxu0 %v2599
        %v3054 = vpop.f32.mrf.mxu0
        %v3055 = vadd.f32 %v2451, %v3054
        %v3056 = vpop.f32.mrf.mxu0
        %v3057 = vpop.f32.mrf.mxu0
        %v3058 = vadd.f32 %v2451, %v3057
        %v3059 = vpop.f32.mrf.mxu0
        %3060 = vmatprep.mubr.bf16.mxu0 0
        %3061 = vmatmul.mubr.bf16.gmra.mxu0 %v2602
        %v3062 = vpop.f32.mrf.mxu0
        %v3063 = vadd.f32 %v2451, %v3062
        %v3064 = vpop.f32.mrf.mxu0
        %v3065 = vpop.f32.mrf.mxu0
        %v3066 = vadd.f32 %v2451, %v3065
        %v3067 = vpop.f32.mrf.mxu0
        %3068 = vmatprep.mubr.bf16.mxu0 0
        %3069 = vmatmul.mubr.bf16.gmra.mxu0 %v2605
        %v3070 = vpop.f32.mrf.mxu0
        %v3071 = vadd.f32 %v2451, %v3070
        %v3072 = vpop.f32.mrf.mxu0
        %v3073 = vpop.f32.mrf.mxu0
        %v3074 = vadd.f32 %v2451, %v3073
        %v3075 = vpop.f32.mrf.mxu0
        %3076 = vmatprep.mubr.bf16.mxu0 0
        %3077 = vmatmul.mubr.bf16.gmra.mxu0 %v2608
        %v3078 = vpop.f32.mrf.mxu0
        %v3079 = vadd.f32 %v2451, %v3078
        %v3080 = vpop.f32.mrf.mxu0
        %v3081 = vpop.f32.mrf.mxu0
        %v3082 = vadd.f32 %v2451, %v3081
        %v3083 = vpop.f32.mrf.mxu0
        %3084 = vmatprep.mubr.bf16.mxu0 0
        %3085 = vmatmul.mubr.bf16.gmra.mxu0 %v2611
        %v3086 = vpop.f32.mrf.mxu0
        %v3087 = vadd.f32 %v2451, %v3086
        %v3088 = vpop.f32.mrf.mxu0
        %v3089 = vpop.f32.mrf.mxu0
        %v3090 = vadd.f32 %v2451, %v3089
        %v3091 = vpop.f32.mrf.mxu0
        %3092 = vmatprep.mubr.bf16.mxu0 0
        %3093 = vmatmul.mubr.bf16.gmra.mxu0 %v2614
        %v3094 = vpop.f32.mrf.mxu0
        %v3095 = vadd.f32 %v2451, %v3094
        %v3096 = vpop.f32.mrf.mxu0
        %v3097 = vpop.f32.mrf.mxu0
        %v3098 = vadd.f32 %v2451, %v3097
        %v3099 = vpop.f32.mrf.mxu0
        %3100 = vmatprep.mubr.bf16.mxu0 0
        %3101 = vmatmul.mubr.bf16.gmra.mxu0 %v2617
        %v3102 = vpop.f32.mrf.mxu0
        %v3103 = vadd.f32 %v2451, %v3102
        %v3104 = vpop.f32.mrf.mxu0
        %v3105 = vpop.f32.mrf.mxu0
        %v3106 = vadd.f32 %v2451, %v3105
        %v3107 = vpop.f32.mrf.mxu0
        %3108 = vmatprep.mubr.bf16.mxu0 0
        %3109 = vmatmul.mubr.bf16.gmra.mxu0 %v2620
        %v3110 = vpop.f32.mrf.mxu0
        %v3111 = vadd.f32 %v2451, %v3110
        %v3112 = vpop.f32.mrf.mxu0
        %v3113 = vpop.f32.mrf.mxu0
        %v3114 = vadd.f32 %v2451, %v3113
        %v3115 = vpop.f32.mrf.mxu0
        %3116 = vmatprep.mubr.bf16.mxu0 0
        %3117 = vmatmul.mubr.bf16.gmra.mxu0 %v2623
        %v3118 = vpop.f32.mrf.mxu0
        %v3119 = vadd.f32 %v2451, %v3118
        %v3120 = vpop.f32.mrf.mxu0
        %v3121 = vpop.f32.mrf.mxu0
        %v3122 = vadd.f32 %v2451, %v3121
        %v3123 = vpop.f32.mrf.mxu0
        %3124 = vmatprep.mubr.bf16.mxu0 0
        %3125 = vmatmul.mubr.bf16.gmra.mxu0 %v2626
        %v3126 = vpop.f32.mrf.mxu0
        %v3127 = vadd.f32 %v2451, %v3126
        %v3128 = vpop.f32.mrf.mxu0
        %v3129 = vpop.f32.mrf.mxu0
        %v3130 = vadd.f32 %v2451, %v3129
        %v3131 = vpop.f32.mrf.mxu0
        %3132 = vmatprep.mubr.bf16.mxu0 0
        %3133 = vmatmul.mubr.bf16.gmra.mxu0 %v2629
        %v3134 = vpop.f32.mrf.mxu0
        %v3135 = vadd.f32 %v2451, %v3134
        %v3136 = vpop.f32.mrf.mxu0
        %v3137 = vpop.f32.mrf.mxu0
        %v3138 = vadd.f32 %v2451, %v3137
        %v3139 = vpop.f32.mrf.mxu0
        %3140 = vmatprep.mubr.bf16.mxu0 0
        %3141 = vmatmul.mubr.bf16.gmra.mxu0 %v2632
        %v3142 = vpop.f32.mrf.mxu0
        %v3143 = vadd.f32 %v2451, %v3142
        %v3144 = vpop.f32.mrf.mxu0
        %v3145 = vpop.f32.mrf.mxu0
        %v3146 = vadd.f32 %v2451, %v3145
        %v3147 = vpop.f32.mrf.mxu0
        %3148 = vmatprep.mubr.bf16.mxu0 0
        %3149 = vmatmul.mubr.bf16.gmra.mxu0 %v2635
        %v3150 = vpop.f32.mrf.mxu0
        %v3151 = vadd.f32 %v2451, %v3150
        %v3152 = vpop.f32.mrf.mxu0
        %v3153 = vpop.f32.mrf.mxu0
        %v3154 = vadd.f32 %v2451, %v3153
        %v3155 = vpop.f32.mrf.mxu0
        %3156 = vmatprep.mubr.bf16.mxu0 0
        %3157 = vmatmul.mubr.bf16.gmra.mxu0 %v2638
        %v3158 = vpop.f32.mrf.mxu0
        %v3159 = vadd.f32 %v2451, %v3158
        %v3160 = vpop.f32.mrf.mxu0
        %v3161 = vpop.f32.mrf.mxu0
        %v3162 = vadd.f32 %v2451, %v3161
        %v3163 = vpop.f32.mrf.mxu0
        %3164 = vmatprep.mubr.bf16.mxu0 0
        %3165 = vmatmul.mubr.bf16.gmra.mxu0 %v2641
        %v3166 = vpop.f32.mrf.mxu0
        %v3167 = vadd.f32 %v2451, %v3166
        %v3168 = vpop.f32.mrf.mxu0
        %v3169 = vpop.f32.mrf.mxu0
        %v3170 = vadd.f32 %v2451, %v3169
        %v3171 = vpop.f32.mrf.mxu0
        %3172 = vmatprep.mubr.bf16.mxu0 0
        %3173 = vmatmul.mubr.bf16.gmra.mxu0 %v2644
        %v3174 = vpop.f32.mrf.mxu0
        %v3175 = vadd.f32 %v2451, %v3174
        %v3176 = vpop.f32.mrf.mxu0
        %v3177 = vpop.f32.mrf.mxu0
        %v3178 = vadd.f32 %v2451, %v3177
        %v3179 = vpop.f32.mrf.mxu0
        %3180 = vmatprep.mubr.bf16.mxu0 0
        %3181 = vmatmul.mubr.bf16.gmra.mxu0 %v2647
        %v3182 = vpop.f32.mrf.mxu0
        %v3183 = vadd.f32 %v2451, %v3182
        %v3184 = vpop.f32.mrf.mxu0
        %v3185 = vpop.f32.mrf.mxu0
        %v3186 = vadd.f32 %v2451, %v3185
        %v3187 = vpop.f32.mrf.mxu0
        %3188 = vmatprep.mubr.bf16.mxu0 0
        %3189 = vmatmul.mubr.bf16.gmra.mxu0 %v2650
        %v3190 = vpop.f32.mrf.mxu0
        %v3191 = vadd.f32 %v2451, %v3190
        %v3192 = vpop.f32.mrf.mxu0
        %v3193 = vpop.f32.mrf.mxu0
        %v3194 = vadd.f32 %v2451, %v3193
        %v3195 = vpop.f32.mrf.mxu0
        %3196 = vdwg.mxu0
        %v3197 = vmax.f32 %v2687, 0.0
        %v3198 = vmax.f32 %v2690, 0.0
        %v3199 = vmax.f32 %v2695, 0.0
        %v3200 = vmax.f32 %v2698, 0.0
        %v3201 = vmax.f32 %v2703, 0.0
        %v3202 = vmax.f32 %v2706, 0.0
        %v3203 = vmax.f32 %v2711, 0.0
        %v3204 = vmax.f32 %v2714, 0.0
        %v3205 = vmax.f32 %v2719, 0.0
        %v3206 = vmax.f32 %v2722, 0.0
        %v3207 = vmax.f32 %v2727, 0.0
        %v3208 = vmax.f32 %v2730, 0.0
        %v3209 = vmax.f32 %v2735, 0.0
        %v3210 = vmax.f32 %v2738, 0.0
        %v3211 = vmax.f32 %v2743, 0.0
        %v3212 = vmax.f32 %v2746, 0.0
        %v3213 = vmax.f32 %v2751, 0.0
        %v3214 = vmax.f32 %v2754, 0.0
        %v3215 = vmax.f32 %v2759, 0.0
        %v3216 = vmax.f32 %v2762, 0.0
        %v3217 = vmax.f32 %v2767, 0.0
        %v3218 = vmax.f32 %v2770, 0.0
        %v3219 = vmax.f32 %v2775, 0.0
        %v3220 = vmax.f32 %v2778, 0.0
        %v3221 = vmax.f32 %v2783, 0.0
        %v3222 = vmax.f32 %v2786, 0.0
        %v3223 = vmax.f32 %v2791, 0.0
        %v3224 = vmax.f32 %v2794, 0.0
        %v3225 = vmax.f32 %v2799, 0.0
        %v3226 = vmax.f32 %v2802, 0.0
        %v3227 = vmax.f32 %v2807, 0.0
        %v3228 = vmax.f32 %v2810, 0.0
        %v3229 = vmax.f32 %v2815, 0.0
        %v3230 = vmax.f32 %v2818, 0.0
        %v3231 = vmax.f32 %v2823, 0.0
        %v3232 = vmax.f32 %v2826, 0.0
        %v3233 = vmax.f32 %v2831, 0.0
        %v3234 = vmax.f32 %v2834, 0.0
        %v3235 = vmax.f32 %v2839, 0.0
        %v3236 = vmax.f32 %v2842, 0.0
        %v3237 = vmax.f32 %v2847, 0.0
        %v3238 = vmax.f32 %v2850, 0.0
        %v3239 = vmax.f32 %v2855, 0.0
        %v3240 = vmax.f32 %v2858, 0.0
        %v3241 = vmax.f32 %v2863, 0.0
        %v3242 = vmax.f32 %v2866, 0.0
        %v3243 = vmax.f32 %v2871, 0.0
        %v3244 = vmax.f32 %v2874, 0.0
        %v3245 = vmax.f32 %v2879, 0.0
        %v3246 = vmax.f32 %v2882, 0.0
        %v3247 = vmax.f32 %v2887, 0.0
        %v3248 = vmax.f32 %v2890, 0.0
        %v3249 = vmax.f32 %v2895, 0.0
        %v3250 = vmax.f32 %v2898, 0.0
        %v3251 = vmax.f32 %v2903, 0.0
        %v3252 = vmax.f32 %v2906, 0.0
        %v3253 = vmax.f32 %v2911, 0.0
        %v3254 = vmax.f32 %v2914, 0.0
        %v3255 = vmax.f32 %v2919, 0.0
        %v3256 = vmax.f32 %v2922, 0.0
        %v3257 = vmax.f32 %v2927, 0.0
        %v3258 = vmax.f32 %v2930, 0.0
        %v3259 = vmax.f32 %v2935, 0.0
        %v3260 = vmax.f32 %v2938, 0.0
        %v3261 = vmax.f32 %v2943, 0.0
        %v3262 = vmax.f32 %v2946, 0.0
        %v3263 = vmax.f32 %v2951, 0.0
        %v3264 = vmax.f32 %v2954, 0.0
        %v3265 = vmax.f32 %v2959, 0.0
        %v3266 = vmax.f32 %v2962, 0.0
        %v3267 = vmax.f32 %v2967, 0.0
        %v3268 = vmax.f32 %v2970, 0.0
        %v3269 = vmax.f32 %v2975, 0.0
        %v3270 = vmax.f32 %v2978, 0.0
        %v3271 = vmax.f32 %v2983, 0.0
        %v3272 = vmax.f32 %v2986, 0.0
        %v3273 = vmax.f32 %v2991, 0.0
        %v3274 = vmax.f32 %v2994, 0.0
        %v3275 = vmax.f32 %v2999, 0.0
        %v3276 = vmax.f32 %v3002, 0.0
        %v3277 = vmax.f32 %v3007, 0.0
        %v3278 = vmax.f32 %v3010, 0.0
        %v3279 = vmax.f32 %v3015, 0.0
        %v3280 = vmax.f32 %v3018, 0.0
        %v3281 = vmax.f32 %v3023, 0.0
        %v3282 = vmax.f32 %v3026, 0.0
        %v3283 = vmax.f32 %v3031, 0.0
        %v3284 = vmax.f32 %v3034, 0.0
        %v3285 = vmax.f32 %v3039, 0.0
        %v3286 = vmax.f32 %v3042, 0.0
        %v3287 = vmax.f32 %v3047, 0.0
        %v3288 = vmax.f32 %v3050, 0.0
        %v3289 = vmax.f32 %v3055, 0.0
        %v3290 = vmax.f32 %v3058, 0.0
        %v3291 = vmax.f32 %v3063, 0.0
        %v3292 = vmax.f32 %v3066, 0.0
        %v3293 = vmax.f32 %v3071, 0.0
        %v3294 = vmax.f32 %v3074, 0.0
        %v3295 = vmax.f32 %v3079, 0.0
        %v3296 = vmax.f32 %v3082, 0.0
        %v3297 = vmax.f32 %v3087, 0.0
        %v3298 = vmax.f32 %v3090, 0.0
        %v3299 = vmax.f32 %v3095, 0.0
        %v3300 = vmax.f32 %v3098, 0.0
        %v3301 = vmax.f32 %v3103, 0.0
        %v3302 = vmax.f32 %v3106, 0.0
        %v3303 = vmax.f32 %v3111, 0.0
        %v3304 = vmax.f32 %v3114, 0.0
        %v3305 = vmax.f32 %v3119, 0.0
        %v3306 = vmax.f32 %v3122, 0.0
        %v3307 = vmax.f32 %v3127, 0.0
        %v3308 = vmax.f32 %v3130, 0.0
        %v3309 = vmax.f32 %v3135, 0.0
        %v3310 = vmax.f32 %v3138, 0.0
        %v3311 = vmax.f32 %v3143, 0.0
        %v3312 = vmax.f32 %v3146, 0.0
        %v3313 = vmax.f32 %v3151, 0.0
        %v3314 = vmax.f32 %v3154, 0.0
        %v3315 = vmax.f32 %v3159, 0.0
        %v3316 = vmax.f32 %v3162, 0.0
        %v3317 = vmax.f32 %v3167, 0.0
        %v3318 = vmax.f32 %v3170, 0.0
        %v3319 = vmax.f32 %v3175, 0.0
        %v3320 = vmax.f32 %v3178, 0.0
        %v3321 = vmax.f32 %v3183, 0.0
        %v3322 = vmax.f32 %v3186, 0.0
        %v3323 = vmax.f32 %v3191, 0.0
        %v3324 = vmax.f32 %v3194, 0.0
        %v3325 = vpack.c.bf16 %v3198, %v3197
        %v3326 = vpack.c.bf16 %v3200, %v3199
        %v3327 = vpack.c.bf16 %v3202, %v3201
        %v3328 = vpack.c.bf16 %v3204, %v3203
        %v3329 = vpack.c.bf16 %v3206, %v3205
        %v3330 = vpack.c.bf16 %v3208, %v3207
        %v3331 = vpack.c.bf16 %v3210, %v3209
        %v3332 = vpack.c.bf16 %v3212, %v3211
        %v3333 = vpack.c.bf16 %v3214, %v3213
        %v3334 = vpack.c.bf16 %v3216, %v3215
        %v3335 = vpack.c.bf16 %v3218, %v3217
        %v3336 = vpack.c.bf16 %v3220, %v3219
        %v3337 = vpack.c.bf16 %v3222, %v3221
        %v3338 = vpack.c.bf16 %v3224, %v3223
        %v3339 = vpack.c.bf16 %v3226, %v3225
        %v3340 = vpack.c.bf16 %v3228, %v3227
        %v3341 = vpack.c.bf16 %v3230, %v3229
        %v3342 = vpack.c.bf16 %v3232, %v3231
        %v3343 = vpack.c.bf16 %v3234, %v3233
        %v3344 = vpack.c.bf16 %v3236, %v3235
        %v3345 = vpack.c.bf16 %v3238, %v3237
        %v3346 = vpack.c.bf16 %v3240, %v3239
        %v3347 = vpack.c.bf16 %v3242, %v3241
        %v3348 = vpack.c.bf16 %v3244, %v3243
        %v3349 = vpack.c.bf16 %v3246, %v3245
        %v3350 = vpack.c.bf16 %v3248, %v3247
        %v3351 = vpack.c.bf16 %v3250, %v3249
        %v3352 = vpack.c.bf16 %v3252, %v3251
        %v3353 = vpack.c.bf16 %v3254, %v3253
        %v3354 = vpack.c.bf16 %v3256, %v3255
        %v3355 = vpack.c.bf16 %v3258, %v3257
        %v3356 = vpack.c.bf16 %v3260, %v3259
        %v3357 = vpack.c.bf16 %v3262, %v3261
        %v3358 = vpack.c.bf16 %v3264, %v3263
        %v3359 = vpack.c.bf16 %v3266, %v3265
        %v3360 = vpack.c.bf16 %v3268, %v3267
        %v3361 = vpack.c.bf16 %v3270, %v3269
        %v3362 = vpack.c.bf16 %v3272, %v3271
        %v3363 = vpack.c.bf16 %v3274, %v3273
        %v3364 = vpack.c.bf16 %v3276, %v3275
        %v3365 = vpack.c.bf16 %v3278, %v3277
        %v3366 = vpack.c.bf16 %v3280, %v3279
        %v3367 = vpack.c.bf16 %v3282, %v3281
        %v3368 = vpack.c.bf16 %v3284, %v3283
        %v3369 = vpack.c.bf16 %v3286, %v3285
        %v3370 = vpack.c.bf16 %v3288, %v3287
        %v3371 = vpack.c.bf16 %v3290, %v3289
        %v3372 = vpack.c.bf16 %v3292, %v3291
        %v3373 = vpack.c.bf16 %v3294, %v3293
        %v3374 = vpack.c.bf16 %v3296, %v3295
        %v3375 = vpack.c.bf16 %v3298, %v3297
        %v3376 = vpack.c.bf16 %v3300, %v3299
        %v3377 = vpack.c.bf16 %v3302, %v3301
        %v3378 = vpack.c.bf16 %v3304, %v3303
        %v3379 = vpack.c.bf16 %v3306, %v3305
        %v3380 = vpack.c.bf16 %v3308, %v3307
        %v3381 = vpack.c.bf16 %v3310, %v3309
        %v3382 = vpack.c.bf16 %v3312, %v3311
        %v3383 = vpack.c.bf16 %v3314, %v3313
        %v3384 = vpack.c.bf16 %v3316, %v3315
        %v3385 = vpack.c.bf16 %v3318, %v3317
        %v3386 = vpack.c.bf16 %v3320, %v3319
        %v3387 = vpack.c.bf16 %v3322, %v3321
        %v3388 = vpack.c.bf16 %v3324, %v3323
        %v3389 = vld [vmem:[%s7] sm:$0x3]
        %v3390 = vld [vmem:[%s8] sm:$0x7]
        %3392 = vset.pattern.permute.xlu0 0
        %3393 = vperm.xlu0 %3392, %v3390
        %v3394 = vpop.permute.xlu0 %3393
        %vm3396 = vcmask 64512
        %v3398 = vsel %vm3396, %v3389, 0
        %v3401 = vsel %vm3396, %v3325, 0
        %v3404 = vsel %vm3396, %v3326, 0
        %v3407 = vsel %vm3396, %v3327, 0
        %v3410 = vsel %vm3396, %v3328, 0
        %v3413 = vsel %vm3396, %v3329, 0
        %v3416 = vsel %vm3396, %v3330, 0
        %v3419 = vsel %vm3396, %v3331, 0
        %v3422 = vsel %vm3396, %v3332, 0
        %v3425 = vsel %vm3396, %v3333, 0
        %v3428 = vsel %vm3396, %v3334, 0
        %v3431 = vsel %vm3396, %v3335, 0
        %v3434 = vsel %vm3396, %v3336, 0
        %v3437 = vsel %vm3396, %v3337, 0
        %v3440 = vsel %vm3396, %v3338, 0
        %v3443 = vsel %vm3396, %v3339, 0
        %v3446 = vsel %vm3396, %v3340, 0
        %v3449 = vsel %vm3396, %v3341, 0
        %v3452 = vsel %vm3396, %v3342, 0
        %v3455 = vsel %vm3396, %v3343, 0
        %v3458 = vsel %vm3396, %v3344, 0
        %v3461 = vsel %vm3396, %v3345, 0
        %v3464 = vsel %vm3396, %v3346, 0
        %v3467 = vsel %vm3396, %v3347, 0
        %v3470 = vsel %vm3396, %v3348, 0
        %v3473 = vsel %vm3396, %v3349, 0
        %v3476 = vsel %vm3396, %v3350, 0
        %v3479 = vsel %vm3396, %v3351, 0
        %v3482 = vsel %vm3396, %v3352, 0
        %v3485 = vsel %vm3396, %v3353, 0
        %v3488 = vsel %vm3396, %v3354, 0
        %v3491 = vsel %vm3396, %v3355, 0
        %v3494 = vsel %vm3396, %v3356, 0
        %v3497 = vsel %vm3396, %v3357, 0
        %v3500 = vsel %vm3396, %v3358, 0
        %v3503 = vsel %vm3396, %v3359, 0
        %v3506 = vsel %vm3396, %v3360, 0
        %v3509 = vsel %vm3396, %v3361, 0
        %v3512 = vsel %vm3396, %v3362, 0
        %v3515 = vsel %vm3396, %v3363, 0
        %v3518 = vsel %vm3396, %v3364, 0
        %v3521 = vsel %vm3396, %v3365, 0
        %v3524 = vsel %vm3396, %v3366, 0
        %v3527 = vsel %vm3396, %v3367, 0
        %v3530 = vsel %vm3396, %v3368, 0
        %v3533 = vsel %vm3396, %v3369, 0
        %v3536 = vsel %vm3396, %v3370, 0
        %v3539 = vsel %vm3396, %v3371, 0
        %v3542 = vsel %vm3396, %v3372, 0
        %v3545 = vsel %vm3396, %v3373, 0
        %v3548 = vsel %vm3396, %v3374, 0
        %v3551 = vsel %vm3396, %v3375, 0
        %v3554 = vsel %vm3396, %v3376, 0
        %v3557 = vsel %vm3396, %v3377, 0
        %v3560 = vsel %vm3396, %v3378, 0
        %v3563 = vsel %vm3396, %v3379, 0
        %v3566 = vsel %vm3396, %v3380, 0
        %v3569 = vsel %vm3396, %v3381, 0
        %v3572 = vsel %vm3396, %v3382, 0
        %v3575 = vsel %vm3396, %v3383, 0
        %v3578 = vsel %vm3396, %v3384, 0
        %v3581 = vsel %vm3396, %v3385, 0
        %v3584 = vsel %vm3396, %v3386, 0
        %v3587 = vsel %vm3396, %v3387, 0
        %v3590 = vsel %vm3396, %v3388, 0
        %3592 = vmatprep.subr.bf16.mxu0 0
        %3593 = vmatpush1.bf16.xpose.msra.mxu0 %v3422
        %3594 = vmatprep.subr.bf16.mxu0 0
        %3595 = vmatpush1.bf16.xpose.msra.mxu0 %v3419
        %3596 = vmatprep.subr.bf16.mxu0 0
        %3597 = vmatpush1.bf16.xpose.msra.mxu0 %v3416
        %3598 = vmatprep.subr.bf16.mxu0 0
        %3599 = vmatpush1.bf16.xpose.msra.mxu0 %v3413
        %3600 = vmatprep.subr.bf16.mxu0 0
        %3601 = vmatpush1.bf16.xpose.msra.mxu0 %v3410
        %3602 = vmatprep.subr.bf16.mxu0 0
        %3603 = vmatpush1.bf16.xpose.msra.mxu0 %v3407
        %3604 = vmatprep.subr.bf16.mxu0 0
        %3605 = vmatpush1.bf16.xpose.msra.mxu0 %v3404
        %3606 = vmatprep.subr.bf16.mxu0 0
        %3607 = vmatpush1.bf16.xpose.msra.mxu0 %v3401
        %3608 = vmatprep.subr.bf16.mxu0 0
        %3609 = vmatpush2.bf16.xpose.msra.mxu0 %v3446
        %3610 = vmatprep.subr.bf16.mxu0 0
        %3611 = vmatpush2.bf16.xpose.msra.mxu0 %v3443
        %3612 = vmatprep.subr.bf16.mxu0 0
        %3613 = vmatpush2.bf16.xpose.msra.mxu0 %v3440
        %3614 = vmatprep.subr.bf16.mxu0 0
        %3615 = vmatpush2.bf16.xpose.msra.mxu0 %v3437
        %3616 = vmatprep.subr.bf16.mxu0 0
        %3617 = vmatpush2.bf16.xpose.msra.mxu0 %v3434
        %3618 = vmatprep.subr.bf16.mxu0 0
        %3619 = vmatpush2.bf16.xpose.msra.mxu0 %v3431
        %3620 = vmatprep.subr.bf16.mxu0 0
        %3621 = vmatpush2.bf16.xpose.msra.mxu0 %v3428
        %3622 = vmatprep.subr.bf16.mxu0 0
        %3623 = vmatpush2.bf16.xpose.msra.mxu0 %v3425
        %3624 = vmatprep.mubr.bf16.mxu0 0
        %3625 = vmatmul.mubr.bf16.gmra.mxu0 %v3398
        %v3626 = vpop.f32.mrf.mxu0
        %v3627 = vadd.f32 %v3394, %v3626
        %v3628 = vpop.f32.mrf.mxu0
        %v3629 = vadd.f32 %v3394, %v3628
        %v3630 = vpop.f32.mrf.mxu0
        %v3631 = vpop.f32.mrf.mxu0
        %3632 = vdwg.mxu0
        %3633 = vmatprep.subr.bf16.mxu0 0
        %3634 = vmatpush1.bf16.xpose.msra.mxu0 %v3470
        %3635 = vmatprep.subr.bf16.mxu0 0
        %3636 = vmatpush1.bf16.xpose.msra.mxu0 %v3467
        %3637 = vmatprep.subr.bf16.mxu0 0
        %3638 = vmatpush1.bf16.xpose.msra.mxu0 %v3464
        %3639 = vmatprep.subr.bf16.mxu0 0
        %3640 = vmatpush1.bf16.xpose.msra.mxu0 %v3461
        %3641 = vmatprep.subr.bf16.mxu0 0
        %3642 = vmatpush1.bf16.xpose.msra.mxu0 %v3458
        %3643 = vmatprep.subr.bf16.mxu0 0
        %3644 = vmatpush1.bf16.xpose.msra.mxu0 %v3455
        %3645 = vmatprep.subr.bf16.mxu0 0
        %3646 = vmatpush1.bf16.xpose.msra.mxu0 %v3452
        %3647 = vmatprep.subr.bf16.mxu0 0
        %3648 = vmatpush1.bf16.xpose.msra.mxu0 %v3449
        %3649 = vmatprep.subr.bf16.mxu0 0
        %3650 = vmatpush2.bf16.xpose.msra.mxu0 %v3494
        %3651 = vmatprep.subr.bf16.mxu0 0
        %3652 = vmatpush2.bf16.xpose.msra.mxu0 %v3491
        %3653 = vmatprep.subr.bf16.mxu0 0
        %3654 = vmatpush2.bf16.xpose.msra.mxu0 %v3488
        %3655 = vmatprep.subr.bf16.mxu0 0
        %3656 = vmatpush2.bf16.xpose.msra.mxu0 %v3485
        %3657 = vmatprep.subr.bf16.mxu0 0
        %3658 = vmatpush2.bf16.xpose.msra.mxu0 %v3482
        %3659 = vmatprep.subr.bf16.mxu0 0
        %3660 = vmatpush2.bf16.xpose.msra.mxu0 %v3479
        %3661 = vmatprep.subr.bf16.mxu0 0
        %3662 = vmatpush2.bf16.xpose.msra.mxu0 %v3476
        %3663 = vmatprep.subr.bf16.mxu0 0
        %3664 = vmatpush2.bf16.xpose.msra.mxu0 %v3473
        %3665 = vmatprep.mubr.bf16.mxu0 0
        %3666 = vmatmul.mubr.bf16.gmra.mxu0 %v3398
        %v3667 = vpop.f32.mrf.mxu0
        %v3668 = vadd.f32 %v3394, %v3667
        %v3669 = vpop.f32.mrf.mxu0
        %v3670 = vadd.f32 %v3394, %v3669
        %v3671 = vpop.f32.mrf.mxu0
        %v3672 = vpop.f32.mrf.mxu0
        %3673 = vdwg.mxu0
        %3674 = vmatprep.subr.bf16.mxu0 0
        %3675 = vmatpush1.bf16.xpose.msra.mxu0 %v3518
        %3676 = vmatprep.subr.bf16.mxu0 0
        %3677 = vmatpush1.bf16.xpose.msra.mxu0 %v3515
        %3678 = vmatprep.subr.bf16.mxu0 0
        %3679 = vmatpush1.bf16.xpose.msra.mxu0 %v3512
        %3680 = vmatprep.subr.bf16.mxu0 0
        %3681 = vmatpush1.bf16.xpose.msra.mxu0 %v3509
        %3682 = vmatprep.subr.bf16.mxu0 0
        %3683 = vmatpush1.bf16.xpose.msra.mxu0 %v3506
        %3684 = vmatprep.subr.bf16.mxu0 0
        %3685 = vmatpush1.bf16.xpose.msra.mxu0 %v3503
        %3686 = vmatprep.subr.bf16.mxu0 0
        %3687 = vmatpush1.bf16.xpose.msra.mxu0 %v3500
        %3688 = vmatprep.subr.bf16.mxu0 0
        %3689 = vmatpush1.bf16.xpose.msra.mxu0 %v3497
        %3690 = vmatprep.subr.bf16.mxu0 0
        %3691 = vmatpush2.bf16.xpose.msra.mxu0 %v3542
        %3692 = vmatprep.subr.bf16.mxu0 0
        %3693 = vmatpush2.bf16.xpose.msra.mxu0 %v3539
        %3694 = vmatprep.subr.bf16.mxu0 0
        %3695 = vmatpush2.bf16.xpose.msra.mxu0 %v3536
        %3696 = vmatprep.subr.bf16.mxu0 0
        %3697 = vmatpush2.bf16.xpose.msra.mxu0 %v3533
        %3698 = vmatprep.subr.bf16.mxu0 0
        %3699 = vmatpush2.bf16.xpose.msra.mxu0 %v3530
        %3700 = vmatprep.subr.bf16.mxu0 0
        %3701 = vmatpush2.bf16.xpose.msra.mxu0 %v3527
        %3702 = vmatprep.subr.bf16.mxu0 0
        %3703 = vmatpush2.bf16.xpose.msra.mxu0 %v3524
        %3704 = vmatprep.subr.bf16.mxu0 0
        %3705 = vmatpush2.bf16.xpose.msra.mxu0 %v3521
        %3706 = vmatprep.mubr.bf16.mxu0 0
        %3707 = vmatmul.mubr.bf16.gmra.mxu0 %v3398
        %v3708 = vpop.f32.mrf.mxu0
        %v3709 = vadd.f32 %v3394, %v3708
        %v3710 = vpop.f32.mrf.mxu0
        %v3711 = vadd.f32 %v3394, %v3710
        %v3712 = vpop.f32.mrf.mxu0
        %v3713 = vpop.f32.mrf.mxu0
        %3714 = vdwg.mxu0
        %3715 = vmatprep.subr.bf16.mxu0 0
        %3716 = vmatpush1.bf16.xpose.msra.mxu0 %v3566
        %3717 = vmatprep.subr.bf16.mxu0 0
        %3718 = vmatpush1.bf16.xpose.msra.mxu0 %v3563
        %3719 = vmatprep.subr.bf16.mxu0 0
        %3720 = vmatpush1.bf16.xpose.msra.mxu0 %v3560
        %3721 = vmatprep.subr.bf16.mxu0 0
        %3722 = vmatpush1.bf16.xpose.msra.mxu0 %v3557
        %3723 = vmatprep.subr.bf16.mxu0 0
        %3724 = vmatpush1.bf16.xpose.msra.mxu0 %v3554
        %3725 = vmatprep.subr.bf16.mxu0 0
        %3726 = vmatpush1.bf16.xpose.msra.mxu0 %v3551
        %3727 = vmatprep.subr.bf16.mxu0 0
        %3728 = vmatpush1.bf16.xpose.msra.mxu0 %v3548
        %3729 = vmatprep.subr.bf16.mxu0 0
        %3730 = vmatpush1.bf16.xpose.msra.mxu0 %v3545
        %3731 = vmatprep.subr.bf16.mxu0 0
        %3732 = vmatpush2.bf16.xpose.msra.mxu0 %v3590
        %3733 = vmatprep.subr.bf16.mxu0 0
        %3734 = vmatpush2.bf16.xpose.msra.mxu0 %v3587
        %3735 = vmatprep.subr.bf16.mxu0 0
        %3736 = vmatpush2.bf16.xpose.msra.mxu0 %v3584
        %3737 = vmatprep.subr.bf16.mxu0 0
        %3738 = vmatpush2.bf16.xpose.msra.mxu0 %v3581
        %3739 = vmatprep.subr.bf16.mxu0 0
        %3740 = vmatpush2.bf16.xpose.msra.mxu0 %v3578
        %3741 = vmatprep.subr.bf16.mxu0 0
        %3742 = vmatpush2.bf16.xpose.msra.mxu0 %v3575
        %3743 = vmatprep.subr.bf16.mxu0 0
        %3744 = vmatpush2.bf16.xpose.msra.mxu0 %v3572
        %3745 = vmatprep.subr.bf16.mxu0 0
        %3746 = vmatpush2.bf16.xpose.msra.mxu0 %v3569
        %3747 = vmatprep.mubr.bf16.mxu0 0
        %3748 = vmatmul.mubr.bf16.gmra.mxu0 %v3398
        %v3749 = vpop.f32.mrf.mxu0
        %v3750 = vadd.f32 %v3394, %v3749
        %v3751 = vpop.f32.mrf.mxu0
        %v3752 = vadd.f32 %v3394, %v3751
        %v3753 = vpop.f32.mrf.mxu0
        %v3754 = vpop.f32.mrf.mxu0
        %3755 = vdwg.mxu0
        %v3756 = vtanh.pop %v3627
        %v3757 = vtanh.pop %v3629
        %v3758 = vtanh.pop %v3668
        %v3759 = vtanh.pop %v3670
        %v3760 = vtanh.pop %v3709
        %v3761 = vtanh.pop %v3711
        %v3762 = vtanh.pop %v3750
        %v3763 = vtanh.pop %v3752
        %v3772 = vcombine.low %v3756, %v3757
        %v3773 = vcombine.low %v3758, %v3759
        %v3774 = vcombine.low %v3760, %v3761
        %v3775 = vcombine.low %v3762, %v3763
        %3780 = vst [vmem:[%s326] sm:$0x77] %v3772
        %3781 = vst [vmem:[%s326 + $0x8] sm:$0x77] %v3773
        %3782 = vst [vmem:[%s326 + $0x10] sm:$0x77] %v3774
        %3783 = vst [vmem:[%s326 + $0x18] sm:$0x77] %v3775
        %s3784 = sand.u32 %s225, 1
        %s3785 = scalar_lea.sflag [#allocation3], %s3784
        %s3786 = sand.u32 %s225, 1
        %s3787 = smul.addr %s3786, 32
        %s3788 = scalar_lea.vmem [#allocation2], %s3787
        // Predicated region
        $region57: #{tpu_custom_call.1} parent=55 // pred_check
          %p3789 = pneg %p235
        $region58: #{tpu_custom_call.1} parent=55 // pred_check_branch
          %3791 = sbr.rel (%p3789) target = $region60
        $region59: #{tpu_custom_call.1} parent=55 // pred_region
          %s3792 = smul.u32 8, %s23
          %s3794 = ssub.s32 512, 512
          %3795 = vsyncadd %s3785, %s3794
          %s3796 = smul.addr %s3792, 64
          %s3797 = scalar_lea.hbm %s9, %s3796
          %s3799 = sshll.u32 %s3788, 4
          %s3800 = int_to_ptr.vmem [resolvable:$true] %s3799
          %3802 = dma.vmem_to_hbm [thread:$0]  %s3800, 512, %s3797, %s3785
        $region60: #{tpu_custom_call.1} parent=55 // pred_fallthru
          _
      $region56: #{tpu_custom_call.1} parent=5 // pred_fallthru
        _
      %p3803 = scmp.le.s32.totalorder 2, %s18
      // Predicated region
      $region61: #{tpu_custom_call.1} parent=5 // pred_check
        %p3804 = pneg %p3803
      $region62: #{tpu_custom_call.1} parent=5 // pred_check_branch
        %3806 = sbr.rel (%p3804) target = $region64
      $region63: #{tpu_custom_call.1} parent=5 // pred_region
        %s3807 = ssub.s32 %s18, 2
        // Predicated region
        $region65: #{tpu_custom_call.1} parent=63 // pred_check
          %p3808 = pneg %p241
        $region66: #{tpu_custom_call.1} parent=63 // pred_check_branch
          %3810 = sbr.rel (%p3808) target = $region68
        $region67: #{tpu_custom_call.1} parent=63 // pred_region
          %s3811 = sand.u32 %s226, 1
          %s3812 = scalar_lea.sflag [#allocation3], %s3811
          %s3813 = sand.u32 %s226, 1
          %s3814 = smul.addr %s3813, 32
          %s3815 = scalar_lea.vmem [#allocation2], %s3814
          %3816 = dma.done %s3812, 512
        $region68: #{tpu_custom_call.1} parent=63 // pred_fallthru
          _
      $region64: #{tpu_custom_call.1} parent=5 // pred_fallthru
        _
    $region6: #{tpu_custom_call.1} parent=1 // loop_footer
      %s22 = sadd.s32 1, %s18
    $region7: #{tpu_custom_call.1} parent=1 // loop_footer_branch
      %17 = sbr.rel target = $region3
    $region8: #{tpu_custom_call.1} parent=1 // loop_exit
      _
    %3817 = vsyncpa [#allocation3], 1
    %s3818 = scalar_lea.sflag [#allocation3], 1
    %3819 = vsyncpa %s3818, 1

</llo_original>
